<compile_context>
chip_gen: v7x
topology: tpu7x:2x2x1
jax: 0.10.0
libtpu: 0.0.40
codegen_flags: <defaults>
</compile_context>

<pallas_src>
import functools

import jax
import jax.numpy as jnp
from jax.experimental import pallas as pl
from jax.experimental.pallas import tpu as pltpu


# ----------------------------- hardware helpers -------------------------------
def _vmem_capacity_bytes():
    """Per-core VMEM capacity, generation-aware with a conservative fallback."""
    try:
        info = pltpu.get_tpu_info()
        cap = getattr(info, "vmem_capacity_bytes", None)
        if cap:
            return int(cap)
    except Exception:
        pass
    return 64 * 1024 * 1024  # v7x per-TensorCore (smallest of the targets)


def _conv_step_bytes(th, w, cins, cout, use_pertap, fuse_bn, out_itemsize):
    """Rough per-grid-step VMEM working set for the conv kernel."""
    cin_tot = sum(cins)
    b = 0
    for ci in cins:
        b += 2 * (th + 2) * w * ci * 2                  # double-buffered inputs (bf16)
    b += (th + 2) * (w + 2) * cin_tot * (6 if fuse_bn else 2)   # assembled slab(s)
    if use_pertap:
        b += th * w * max(cins) * 2                     # one tap LHS at a time
    else:
        b += th * w * 9 * cin_tot * 2                   # fused-K im2col slab (small Cin)
    b += th * w * cout * 4                              # f32 accumulator
    b += 2 * th * w * cout * out_itemsize               # double-buffered output
    b += 2 * 9 * cin_tot * cout * 2                     # weights (TODO: Buffered(1))
    return b


def _pick_block_rows(n, hp, w, cins, cout, use_pertap, fuse_bn, out_itemsize,
                     budget, max_rows=2048):
    """Largest row tile (multiple of 8 dividing padded H) fitting the budget."""
    cands = [t for t in range(8, min(hp, max_rows) + 1, 8) if hp % t == 0]
    if not cands:
        return hp
    fit = [t for t in cands
           if _conv_step_bytes(t, w, cins, cout, use_pertap, fuse_bn,
                               out_itemsize) <= budget]
    if not fit:
        return cands[0]
    th = max(fit)
    # v7x megacore: when batch alone cannot feed 2 cores, prefer an even grid.
    if n == 1:
        even = [t for t in fit if (hp // t) % 2 == 0]
        if even:
            th = max(even)
    return th


# ----------------------- conv3x3 (+BN statistics) kernel ----------------------
def _conv3x3_kernel(*refs, n_inputs, cins, th, w, true_h, fuse_bn, use_pertap):
    """One (batch, row-tile) step of conv3x3(pad=1, bias=False).

    refs = (body_0, top_0, bot_0, ..., [scale, shift,] w_ref, y_ref, stats_ref)
      body_i  : (1, th, w, Ci)  bf16   current row tile of input i
      top_i   : (1, 1,  w, Ci)  bf16   row above (halo)
      bot_i   : (1, 1,  w, Ci)  bf16   row below (halo)
      scale/shift : (1, sum(Ci)) f32   fused BN affine of the *input* (optional)
      w_ref   : fused-K: (9*sum(Ci), Cout); per-tap: (9, sum(Ci), Cout)  bf16
      y_ref   : (1, th, w, Cout)       raw conv output (bf16 or f32)
      stats_ref: (1, 1, 2, Cout) f32   per-tile (sum, sum of squares)
    """
    nr = 3 * n_inputs
    x_refs = refs[:nr]
    pos = nr
    if fuse_bn:
        scale_ref, shift_ref = refs[pos], refs[pos + 1]
        pos += 2
    w_ref = refs[pos]
    y_ref = refs[pos + 1]
    stats_ref = refs[pos + 2]

    cout = y_ref.shape[-1]
    cin_tot = sum(cins)
    rt = pl.program_id(1)

    # Global row of slab row j is rt*th - 1 + j.  Rows outside [0, true_h) are
    # the conv's zero padding (this also covers the H -> Hp bottom padding).
    row_ids = rt * th - 1 + jax.lax.broadcasted_iota(jnp.int32, (th + 2, 1, 1), 0)
    row_valid = jnp.logical_and(row_ids >= 0, row_ids < true_h)

    # Assemble one halo'd, width-padded activation slab per input (the inputs
    # are the pieces of torch.cat(.., dim=1); it is never materialized in HBM).
    slabs = []
    c_off = 0
    for i, ci in enumerate(cins):
        body = x_refs[3 * i][0]        # (th, w, ci)
        top = x_refs[3 * i + 1][0]     # (1,  w, ci)
        bot = x_refs[3 * i + 2][0]     # (1,  w, ci)
        x = jnp.concatenate([top, body, bot], axis=0)        # (th+2, w, ci)
        if fuse_bn:
            # Fused BatchNorm affine + ReLU of the previous layer.
            sc = scale_ref[0, c_off:c_off + ci]
            sh = shift_ref[0, c_off:c_off + ci]
            x = jnp.maximum(x.astype(jnp.float32) * sc + sh, 0.0)
        # Zero rows that are outside the real image (conv zero padding), then
        # add the one-column zero padding on each side.
        x = jnp.where(row_valid, x, 0.0).astype(jnp.bfloat16)
        zcol = jnp.zeros((th + 2, 1, ci), jnp.bfloat16)
        x = jnp.concatenate([zcol, x, zcol], axis=1)          # (th+2, w+2, ci)
        slabs.append(x)
        c_off += ci

    if use_pertap:
        # Shift-and-accumulate: one MXU matmul per (tap, input).  No 9x slab.
        acc = jnp.zeros((th * w, cout), jnp.float32)
        for dy in range(3):
            for dx in range(3):
                tap = dy * 3 + dx
                c0 = 0
                for x, ci in zip(slabs, cins):
                    lhs = x[dy:dy + th, dx:dx + w, :].reshape(th * w, ci)
                    acc = acc + jnp.dot(lhs, w_ref[tap, c0:c0 + ci, :],
                                        preferred_element_type=jnp.float32)
                    c0 += ci
    else:
        # Small Cin: a single fused-K contraction (K = 9*sum(Ci)) is more
        # MXU-efficient and the im2col slab is tiny.
        patches = []
        for dy in range(3):
            for dx in range(3):
                for x in slabs:
                    ci = x.shape[-1]
                    patches.append(x[dy:dy + th, dx:dx + w, :].reshape(th * w, ci))
        k_slab = jnp.concatenate(patches, axis=-1)            # (th*w, 9*cin_tot)
        acc = jnp.dot(k_slab, w_ref[...], preferred_element_type=jnp.float32)

    acc3 = acc.reshape(th, w, cout)

    # Per-channel partial (sum, sum-of-squares) for the exact batch statistics,
    # excluding rows that belong to the H -> Hp padding.
    out_valid = (rt * th
                 + jax.lax.broadcasted_iota(jnp.int32, (th, 1, 1), 0)) < true_h
    acc_m = jnp.where(out_valid, acc3, 0.0)
    s = jnp.sum(acc_m, axis=(0, 1), keepdims=True)            # (1, 1, cout)
    ss = jnp.sum(acc_m * acc_m, axis=(0, 1), keepdims=True)   # (1, 1, cout)
    stats_ref[...] = jnp.concatenate([s, ss], axis=1)[None]   # (1, 1, 2, cout)

    y_ref[...] = acc3[None].astype(y_ref.dtype)


# ----------------------- fused BN-affine + ReLU kernel -------------------------
def _bn_relu_kernel(y_ref, scale_ref, shift_ref, o_ref):
    """out = relu(y * scale + shift) on a lane-dense (rows, W*C) layout."""
    y = y_ref[...].astype(jnp.float32)
    o_ref[...] = jnp.maximum(y * scale_ref[...] + shift_ref[...], 0.0
                             ).astype(o_ref.dtype)


# ---------------------------------- wrappers -----------------------------------
def conv3x3_stats(inputs, w_kc, *, true_h, in_scale=None, in_shift=None,
                  block_rows=None, out_dtype=jnp.bfloat16, pertap_min_cin=128):
    """conv3x3(pad=1, no bias) over concat(inputs) with per-tile BN statistics.

    inputs : list of (N, Hp, W, Ci) bf16 arrays (channel-concat order); Hp is a
             multiple of 8 and rows >= true_h are zero padding.
    w_kc   : (9*sum(Ci), Cout) bf16 weights flattened in (kh, kw, cin) order.
    in_scale / in_shift : optional (sum(Ci),) BN affine applied (with ReLU) to
             the loaded input slabs (fused previous-layer BatchNorm).
    Returns (y, stats): y (N, Hp, W, Cout) raw conv output, stats (N, nh, 2, Cout).
    """
    n, hp, w, _ = (int(d) for d in inputs[0].shape)
    cins = [int(x.shape[-1]) for x in inputs]
    cin_tot = sum(cins)
    cout = int(w_kc.shape[-1])
    assert int(w_kc.shape[0]) == 9 * cin_tot
    assert hp % 8 == 0 and true_h <= hp

    fuse_bn = in_scale is not None
    use_pertap = cin_tot >= pertap_min_cin
    out_itemsize = jnp.dtype(out_dtype).itemsize

    cap = _vmem_capacity_bytes()
    budget = min(48 * 1024 * 1024, int(0.4 * cap))

    th = block_rows
    if th is None or th % 8 != 0 or hp % th != 0:
        th = _pick_block_rows(n, hp, w, cins, cout, use_pertap, fuse_bn,
                              out_itemsize, budget)
    nh = hp // th

    kernel = functools.partial(
        _conv3x3_kernel, n_inputs=len(inputs), cins=tuple(cins), th=th, w=w,
        true_h=int(true_h), fuse_bn=fuse_bn, use_pertap=use_pertap)

    in_specs, operands = [], []
    for x, ci in zip(inputs, cins):
        # Current row tile plus two 1-row halo blocks read straight from HBM
        # (no duplicated/windowed copy of the activation).
        in_specs.append(pl.BlockSpec((1, th, w, ci),
                                     lambda nb, rt: (nb, rt, 0, 0)))
        in_specs.append(pl.BlockSpec(
            (1, 1, w, ci),
            lambda nb, rt: (nb, jnp.maximum(rt * th - 1, 0), 0, 0)))
        in_specs.append(pl.BlockSpec(
            (1, 1, w, ci),
            lambda nb, rt: (nb, jnp.minimum(rt * th + th, hp - 1), 0, 0)))
        operands += [x, x, x]

    if fuse_bn:
        in_specs += [pl.BlockSpec((1, cin_tot), lambda nb, rt: (0, 0)),
                     pl.BlockSpec((1, cin_tot), lambda nb, rt: (0, 0))]
        operands += [jnp.asarray(in_scale, jnp.float32).reshape(1, cin_tot),
                     jnp.asarray(in_shift, jnp.float32).reshape(1, cin_tot)]

    if use_pertap:
        operands.append(w_kc.reshape(9, cin_tot, cout))
        in_specs.append(pl.BlockSpec((9, cin_tot, cout),
                                     lambda nb, rt: (0, 0, 0)))
    else:
        operands.append(w_kc)
        in_specs.append(pl.BlockSpec((9 * cin_tot, cout),
                                     lambda nb, rt: (0, 0)))

    sb = _conv_step_bytes(th, w, cins, cout, use_pertap, fuse_bn, out_itemsize)
    vmem_limit = int(min(0.9 * cap, max(32 * 1024 * 1024, 2 * sb)))

    in_bytes = sum(n * hp * w * ci * 2 for ci in cins)
    cost = pl.CostEstimate(
        flops=2 * n * hp * w * 9 * cin_tot * cout,
        transcendentals=0,
        bytes_accessed=int(in_bytes + 9 * cin_tot * cout * 2
                           + n * hp * w * cout * out_itemsize
                           + n * nh * 2 * cout * 4))

    y, stats = pl.pallas_call(
        kernel,
        grid=(n, nh),
        in_specs=in_specs,
        out_specs=(pl.BlockSpec((1, th, w, cout), lambda nb, rt: (nb, rt, 0, 0)),
                   pl.BlockSpec((1, 1, 2, cout), lambda nb, rt: (nb, rt, 0, 0))),
        out_shape=(jax.ShapeDtypeStruct((n, hp, w, cout), out_dtype),
                   jax.ShapeDtypeStruct((n, nh, 2, cout), jnp.float32)),
        compiler_params=pltpu.CompilerParams(
            dimension_semantics=("parallel", "parallel"),
            vmem_limit_bytes=vmem_limit),
        cost_estimate=cost,
    )(*operands)
    return y, stats


def _bn_scale_shift(stats, gamma, beta, count, eps=1e-5):
    """Fold exact batch statistics into one per-channel (scale, shift)."""
    s = jnp.sum(stats.astype(jnp.float32), axis=(0, 1))   # (2, Cout)
    mean = s[0] / count
    var = jnp.maximum(s[1] / count - mean * mean, 0.0)
    inv = jax.lax.rsqrt(var + eps)
    scale = gamma * inv
    shift = beta - mean * scale
    return scale, shift


def bn_relu_apply(y2d, scale_l, shift_l, out_dtype=jnp.float32):
    """relu(y*scale + shift) on a lane-dense (rows, W*C) layout, large row tiles."""
    r, l = (int(d) for d in y2d.shape)
    cap = _vmem_capacity_bytes()
    budget = min(48 * 1024 * 1024, int(0.4 * cap))
    per_row = l * (2 * y2d.dtype.itemsize + 2 * jnp.dtype(out_dtype).itemsize)
    cands = [t for t in range(8, r + 1, 8) if r % t == 0]
    fit = [t for t in cands if t * per_row <= budget]
    tr = max(fit) if fit else (cands[0] if cands else r)

    return pl.pallas_call(
        _bn_relu_kernel,
        grid=(r // tr,),
        in_specs=[pl.BlockSpec((tr, l), lambda i: (i, 0)),
                  pl.BlockSpec((1, l), lambda i: (0, 0)),
                  pl.BlockSpec((1, l), lambda i: (0, 0))],
        out_specs=pl.BlockSpec((tr, l), lambda i: (i, 0)),
        out_shape=jax.ShapeDtypeStruct((r, l), out_dtype),
        compiler_params=pltpu.CompilerParams(
            dimension_semantics=("parallel",),
            vmem_limit_bytes=int(min(0.9 * cap,
                                     max(32 * 1024 * 1024, 3 * tr * per_row)))),
        cost_estimate=pl.CostEstimate(
            flops=3 * r * l, transcendentals=0,
            bytes_accessed=r * l * (y2d.dtype.itemsize
                                    + jnp.dtype(out_dtype).itemsize)),
    )(y2d, scale_l.reshape(1, l).astype(jnp.float32),
      shift_l.reshape(1, l).astype(jnp.float32))


# --------------------------------- JAX glue ------------------------------------
def _bilinear_up2x_align_corners(x):
    """nn.Upsample(scale_factor=2, mode='bilinear', align_corners=True), NHWC."""
    n, h, w, c = x.shape
    ho, wo = 2 * h, 2 * w

    def idx(n_in, n_out):
        if n_in == 1:
            zi = jnp.zeros((n_out,), jnp.int32)
            return zi, zi, jnp.zeros((n_out,), jnp.float32)
        src = jnp.arange(n_out, dtype=jnp.float32) * (n_in - 1) / (n_out - 1)
        i0 = jnp.floor(src).astype(jnp.int32)
        i1 = jnp.minimum(i0 + 1, n_in - 1)
        return i0, i1, src - i0.astype(jnp.float32)

    y0, y1, fy = idx(h, ho)
    x0, x1, fx = idx(w, wo)
    g = (x[:, :, x0, :] * (1.0 - fx)[None, None, :, None]
         + x[:, :, x1, :] * fx[None, None, :, None])
    return (g[:, y0] * (1.0 - fy)[None, :, None, None]
            + g[:, y1] * fy[None, :, None, None])


class UpPallas:
    """Pallas TPU version of `Up(in_channels, out_channels, bilinear=True)`."""

    def __init__(self, in_channels, out_channels, key, block_rows=None,
                 pertap_min_cin=128):
        mid = in_channels // 2
        k1, k2 = jax.random.split(key)
        # Conv weights (PyTorch OIHW, bias=False) — deterministic synthetic
        # init, pre-flattened to (9*Cin, Cout) and rounded to bf16 once (MXU
        # operand).  Keep f32 copies of the *rounded* weights for the
        # pure-JAX reference check.
        w1 = 0.1 * jax.random.normal(k1, (mid, in_channels, 3, 3), jnp.float32)
        w2 = 0.1 * jax.random.normal(k2, (out_channels, mid, 3, 3), jnp.float32)
        w1_hwio = jnp.transpose(w1, (2, 3, 1, 0)).astype(jnp.bfloat16)
        w2_hwio = jnp.transpose(w2, (2, 3, 1, 0)).astype(jnp.bfloat16)
        self.w1 = w1_hwio.reshape(9 * in_channels, mid)
        self.w2 = w2_hwio.reshape(9 * mid, out_channels)
        self.w1_ref = w1_hwio.astype(jnp.float32)
        self.w2_ref = w2_hwio.astype(jnp.float32)
        # BatchNorm affine params (PyTorch init: gamma=1, beta=0).
        self.g1 = jnp.ones((mid,), jnp.float32)
        self.b1 = jnp.zeros((mid,), jnp.float32)
        self.g2 = jnp.ones((out_channels,), jnp.float32)
        self.b2 = jnp.zeros((out_channels,), jnp.float32)
        self.block_rows = block_rows
        self.pertap_min_cin = pertap_min_cin

    def __call__(self, x1_nchw, x2_nchw):
        # NCHW -> NHWC (channels on lanes)
        x1 = jnp.transpose(x1_nchw, (0, 2, 3, 1)).astype(jnp.float32)
        x2 = jnp.transpose(x2_nchw, (0, 2, 3, 1)).astype(jnp.float32)

        # 2x bilinear upsample (align_corners=True), stored back as bf16.
        # TODO(synk): fuse this 2-tap stencil into the first conv kernel's
        # input slabs to drop one full-tensor HBM round trip.
        x1 = _bilinear_up2x_align_corners(x1).astype(jnp.bfloat16)

        n, h, w, _ = x2.shape
        hp = (h + 7) // 8 * 8   # pad H to a multiple of 8 (masked from stats)

        # F.pad(x1, [dx//2, dx-dx//2, dy//2, dy-dy//2]) plus H -> Hp padding.
        dy = h - x1.shape[1]
        dx = w - x1.shape[2]
        x1 = jnp.pad(x1, ((0, 0), (dy // 2, dy - dy // 2 + hp - h),
                          (dx // 2, dx - dx // 2), (0, 0)))
        x2 = jnp.pad(x2.astype(jnp.bfloat16),
                     ((0, 0), (0, hp - h), (0, 0), (0, 0)))

        # Layer 1: conv over torch.cat([x2, x1], dim=1) via a split-K
        # contraction (the concatenated tensor is never materialized).
        y1, st1 = conv3x3_stats([x2, x1], self.w1, true_h=h,
                                block_rows=self.block_rows,
                                out_dtype=jnp.bfloat16,
                                pertap_min_cin=self.pertap_min_cin)
        sc1, sh1 = _bn_scale_shift(st1, self.g1, self.b1, float(n * h * w))

        # Layer 2: BN1 + ReLU fused into the conv's input load.
        y2, st2 = conv3x3_stats([y1], self.w2, true_h=h,
                                in_scale=sc1, in_shift=sh1,
                                block_rows=self.block_rows,
                                out_dtype=jnp.bfloat16,
                                pertap_min_cin=self.pertap_min_cin)
        sc2, sh2 = _bn_scale_shift(st2, self.g2, self.b2, float(n * h * w))

        # Final BN2 + ReLU on a lane-dense (rows, W*Cout) layout.
        cout = y2.shape[-1]
        out = bn_relu_apply(y2.reshape(n * hp, w * cout),
                            jnp.tile(sc2, w), jnp.tile(sh2, w),
                            out_dtype=jnp.float32)
        out = out.reshape(n, hp, w, cout)[:, :h]
        return jnp.transpose(out, (0, 3, 1, 2))        # NHWC -> NCHW


# ------------------------------ pure-JAX reference ------------------------------
def up_reference(x1_nchw, x2_nchw, w1_hwio, w2_hwio, g1, b1, g2, b2, eps=1e-5):
    x1 = jnp.transpose(x1_nchw, (0, 2, 3, 1)).astype(jnp.float32)
    x2 = jnp.transpose(x2_nchw, (0, 2, 3, 1)).astype(jnp.float32)
    x1 = _bilinear_up2x_align_corners(x1)
    dy = x2.shape[1] - x1.shape[1]
    dx = x2.shape[2] - x1.shape[2]
    x1 = jnp.pad(x1, ((0, 0), (dy // 2, dy - dy // 2),
                      (dx // 2, dx - dx // 2), (0, 0)))
    x = jnp.concatenate([x2, x1], axis=-1)

    def block(x, w_hwio, g, b):
        y = jax.lax.conv_general_dilated(
            x, w_hwio, window_strides=(1, 1), padding="SAME",
            dimension_numbers=("NHWC", "HWIO", "NHWC"))
        m = jnp.mean(y, axis=(0, 1, 2))
        v = jnp.mean(jnp.square(y - m), axis=(0, 1, 2))
        return jnp.maximum((y - m) * jax.lax.rsqrt(v + eps) * g + b, 0.0)

    out = block(x, w1_hwio, g1, b1)
    out = block(out, w2_hwio, g2, b2)
    return jnp.transpose(out, (0, 3, 1, 2))


if __name__ == "__main__":
    key = jax.random.PRNGKey(0)
    k_a, k_b, k_p, k_q = jax.random.split(key, 4)

    # Case 1: small channels (fused-K path), odd H -> exercises multi-tile
    # halo reads, H padding and masked BN statistics.
    in_c, out_c = 8, 4
    x1 = jax.random.normal(k_a, (2, in_c // 2, 7, 8), jnp.float32)
    x2 = jax.random.normal(k_b, (2, in_c // 2, 14, 16), jnp.float32)
    up = UpPallas(in_c, out_c, k_p, block_rows=8)
    out = jax.block_until_ready(jax.jit(lambda a, b: up(a, b))(x1, x2))
    assert out.shape == (2, out_c, 14, 16), out.shape
    ref = up_reference(x1, x2, up.w1_ref, up.w2_ref, up.g1, up.b1, up.g2, up.b2)
    err = float(jnp.max(jnp.abs(out - ref)))
    assert bool(jnp.all(jnp.isfinite(out))) and err < 0.25, err

    # Case 2: realistic channel widths -> per-tap (shift-and-accumulate) path
    # with the auto-picked, generation-aware row tile.
    in_c2, out_c2 = 256, 128
    x1b = jax.random.normal(k_a, (2, in_c2 // 2, 8, 8), jnp.float32)
    x2b = jax.random.normal(k_b, (2, in_c2 // 2, 16, 16), jnp.float32)
    up2 = UpPallas(in_c2, out_c2, k_q)
    out2 = jax.block_until_ready(jax.jit(lambda a, b: up2(a, b))(x1b, x2b))
    assert out2.shape == (2, out_c2, 16, 16), out2.shape
    ref2 = up_reference(x1b, x2b, up2.w1_ref, up2.w2_ref,
                        up2.g1, up2.b1, up2.g2, up2.b2)
    err2 = float(jnp.max(jnp.abs(out2 - ref2)))
    assert bool(jnp.all(jnp.isfinite(out2))) and err2 < 0.25, err2

    print("KERNEL_OK")
</pallas_src>

<mosaic_0001>
module attributes {stable_mosaic.version = 11 : i64} {
  func.func @_conv3x3_kernel(%arg0: i32, %arg1: i32, %arg2: memref<1x8x16x4xbf16, #tpu.memory_space<vmem>>, %arg3: memref<1x1x16x4xbf16, #tpu.memory_space<vmem>>, %arg4: memref<1x1x16x4xbf16, #tpu.memory_space<vmem>>, %arg5: memref<1x8x16x4xbf16, #tpu.memory_space<vmem>>, %arg6: memref<1x1x16x4xbf16, #tpu.memory_space<vmem>>, %arg7: memref<1x1x16x4xbf16, #tpu.memory_space<vmem>>, %arg8: memref<72x4xbf16, #tpu.memory_space<vmem>>, %arg9: memref<1x8x16x4xbf16, #tpu.memory_space<vmem>>, %arg10: memref<1x1x2x4xf32, #tpu.memory_space<vmem>>) attributes {dimension_semantics = [#tpu.dimension_semantics<parallel>, #tpu.dimension_semantics<parallel>], iteration_bounds = array<i64: 2, 2>, scalar_prefetch = 0 : i64, scratch_operands = 0 : i64, tpu.core_type = #tpu.core_type<tc>, window_params = [{transform_indices = @transform_0, window_bounds = array<i64: 1, 8, 16, 4>}, {transform_indices = @transform_1, window_bounds = array<i64: 1, 1, 16, 4>}, {transform_indices = @transform_2, window_bounds = array<i64: 1, 1, 16, 4>}, {transform_indices = @transform_3, window_bounds = array<i64: 1, 8, 16, 4>}, {transform_indices = @transform_4, window_bounds = array<i64: 1, 1, 16, 4>}, {transform_indices = @transform_5, window_bounds = array<i64: 1, 1, 16, 4>}, {pipeline_mode = #tpu.pipeline_mode<synchronous>, transform_indices = @transform_6, window_bounds = array<i64: 72, 4>}, {transform_indices = @transform_7, window_bounds = array<i64: 1, 8, 16, 4>}, {transform_indices = @transform_8, window_bounds = array<i64: 1, 1, 2, 4>}]} {
    %c8_i32 = arith.constant 8 : i32
    %0 = arith.muli %arg1, %c8_i32 : i32
    %c1_i32 = arith.constant 1 : i32
    %1 = arith.subi %0, %c1_i32 : i32
    %2 = tpu.iota {dimensions = array<i32: 0>} : vector<10x1x1xi32>
    %3 = vector.broadcast %1 : i32 to vector<10x1x1xi32>
    %4 = arith.addi %3, %2 : vector<10x1x1xi32>
    %c0_i32 = arith.constant 0 : i32
    %5 = vector.broadcast %c0_i32 : i32 to vector<10x1x1xi32>
    %6 = arith.cmpi sge, %4, %5 : vector<10x1x1xi32>
    %c14_i32 = arith.constant 14 : i32
    %7 = vector.broadcast %c14_i32 : i32 to vector<10x1x1xi32>
    %8 = arith.cmpi slt, %4, %7 : vector<10x1x1xi32>
    %9 = arith.andi %6, %8 : vector<10x1x1xi1>
    %c0 = arith.constant 0 : index
    %c0_0 = arith.constant 0 : index
    %c0_1 = arith.constant 0 : index
    %c0_2 = arith.constant 0 : index
    %10 = vector.load %arg2[%c0, %c0_0, %c0_1, %c0_2] : memref<1x8x16x4xbf16, #tpu.memory_space<vmem>>, vector<1x8x16x4xbf16>
    %11 = vector.shape_cast %10 : vector<1x8x16x4xbf16> to vector<8x16x4xbf16>
    %c0_3 = arith.constant 0 : index
    %c0_4 = arith.constant 0 : index
    %c0_5 = arith.constant 0 : index
    %c0_6 = arith.constant 0 : index
    %12 = vector.load %arg3[%c0_3, %c0_4, %c0_5, %c0_6] : memref<1x1x16x4xbf16, #tpu.memory_space<vmem>>, vector<1x1x16x4xbf16>
    %13 = vector.shape_cast %12 : vector<1x1x16x4xbf16> to vector<1x16x4xbf16>
    %c0_7 = arith.constant 0 : index
    %c0_8 = arith.constant 0 : index
    %c0_9 = arith.constant 0 : index
    %c0_10 = arith.constant 0 : index
    %14 = vector.load %arg4[%c0_7, %c0_8, %c0_9, %c0_10] : memref<1x1x16x4xbf16, #tpu.memory_space<vmem>>, vector<1x1x16x4xbf16>
    %15 = vector.shape_cast %14 : vector<1x1x16x4xbf16> to vector<1x16x4xbf16>
    %16 = tpu.concatenate %13, %11, %15 in 0 : vector<1x16x4xbf16>, vector<8x16x4xbf16>, vector<1x16x4xbf16> -> vector<10x16x4xbf16>
    %cst = arith.constant 0.000000e+00 : f32
    %17 = arith.truncf %cst : f32 to bf16
    %18 = vector.shape_cast %9 : vector<10x1x1xi1> to vector<10x1x1xi1>
    %19 = vector.broadcast %18 : vector<10x1x1xi1> to vector<10x16x4xi1>
    %20 = vector.broadcast %17 : bf16 to vector<10x16x4xbf16>
    %21 = arith.select %19, %16, %20 : vector<10x16x4xi1>, vector<10x16x4xbf16>
    %cst_11 = arith.constant 0.000000e+00 : bf16
    %22 = vector.broadcast %cst_11 : bf16 to vector<10x1x4xbf16>
    %23 = tpu.concatenate %22, %21, %22 in 1 : vector<10x1x4xbf16>, vector<10x16x4xbf16>, vector<10x1x4xbf16> -> vector<10x18x4xbf16>
    %c0_12 = arith.constant 0 : index
    %c0_13 = arith.constant 0 : index
    %c0_14 = arith.constant 0 : index
    %c0_15 = arith.constant 0 : index
    %24 = vector.load %arg5[%c0_12, %c0_13, %c0_14, %c0_15] : memref<1x8x16x4xbf16, #tpu.memory_space<vmem>>, vector<1x8x16x4xbf16>
    %25 = vector.shape_cast %24 : vector<1x8x16x4xbf16> to vector<8x16x4xbf16>
    %c0_16 = arith.constant 0 : index
    %c0_17 = arith.constant 0 : index
    %c0_18 = arith.constant 0 : index
    %c0_19 = arith.constant 0 : index
    %26 = vector.load %arg6[%c0_16, %c0_17, %c0_18, %c0_19] : memref<1x1x16x4xbf16, #tpu.memory_space<vmem>>, vector<1x1x16x4xbf16>
    %27 = vector.shape_cast %26 : vector<1x1x16x4xbf16> to vector<1x16x4xbf16>
    %c0_20 = arith.constant 0 : index
    %c0_21 = arith.constant 0 : index
    %c0_22 = arith.constant 0 : index
    %c0_23 = arith.constant 0 : index
    %28 = vector.load %arg7[%c0_20, %c0_21, %c0_22, %c0_23] : memref<1x1x16x4xbf16, #tpu.memory_space<vmem>>, vector<1x1x16x4xbf16>
    %29 = vector.shape_cast %28 : vector<1x1x16x4xbf16> to vector<1x16x4xbf16>
    %30 = tpu.concatenate %27, %25, %29 in 0 : vector<1x16x4xbf16>, vector<8x16x4xbf16>, vector<1x16x4xbf16> -> vector<10x16x4xbf16>
    %cst_24 = arith.constant 0.000000e+00 : f32
    %31 = arith.truncf %cst_24 : f32 to bf16
    %32 = vector.shape_cast %9 : vector<10x1x1xi1> to vector<10x1x1xi1>
    %33 = vector.broadcast %32 : vector<10x1x1xi1> to vector<10x16x4xi1>
    %34 = vector.broadcast %31 : bf16 to vector<10x16x4xbf16>
    %35 = arith.select %33, %30, %34 : vector<10x16x4xi1>, vector<10x16x4xbf16>
    %cst_25 = arith.constant 0.000000e+00 : bf16
    %36 = vector.broadcast %cst_25 : bf16 to vector<10x1x4xbf16>
    %37 = tpu.concatenate %36, %35, %36 in 1 : vector<10x1x4xbf16>, vector<10x16x4xbf16>, vector<10x1x4xbf16> -> vector<10x18x4xbf16>
    %38 = vector.extract_strided_slice %23 {offsets = [0, 0, 0], sizes = [8, 16, 4], strides = [1, 1, 1]} : vector<10x18x4xbf16> to vector<8x16x4xbf16>
    %39 = vector.shape_cast %38 : vector<8x16x4xbf16> to vector<128x4xbf16>
    %40 = vector.extract_strided_slice %37 {offsets = [0, 0, 0], sizes = [8, 16, 4], strides = [1, 1, 1]} : vector<10x18x4xbf16> to vector<8x16x4xbf16>
    %41 = vector.shape_cast %40 : vector<8x16x4xbf16> to vector<128x4xbf16>
    %42 = vector.extract_strided_slice %23 {offsets = [0, 1, 0], sizes = [8, 16, 4], strides = [1, 1, 1]} : vector<10x18x4xbf16> to vector<8x16x4xbf16>
    %43 = vector.shape_cast %42 : vector<8x16x4xbf16> to vector<128x4xbf16>
    %44 = vector.extract_strided_slice %37 {offsets = [0, 1, 0], sizes = [8, 16, 4], strides = [1, 1, 1]} : vector<10x18x4xbf16> to vector<8x16x4xbf16>
    %45 = vector.shape_cast %44 : vector<8x16x4xbf16> to vector<128x4xbf16>
    %46 = vector.extract_strided_slice %23 {offsets = [0, 2, 0], sizes = [8, 16, 4], strides = [1, 1, 1]} : vector<10x18x4xbf16> to vector<8x16x4xbf16>
    %47 = vector.shape_cast %46 : vector<8x16x4xbf16> to vector<128x4xbf16>
    %48 = vector.extract_strided_slice %37 {offsets = [0, 2, 0], sizes = [8, 16, 4], strides = [1, 1, 1]} : vector<10x18x4xbf16> to vector<8x16x4xbf16>
    %49 = vector.shape_cast %48 : vector<8x16x4xbf16> to vector<128x4xbf16>
    %50 = vector.extract_strided_slice %23 {offsets = [1, 0, 0], sizes = [8, 16, 4], strides = [1, 1, 1]} : vector<10x18x4xbf16> to vector<8x16x4xbf16>
    %51 = vector.shape_cast %50 : vector<8x16x4xbf16> to vector<128x4xbf16>
    %52 = vector.extract_strided_slice %37 {offsets = [1, 0, 0], sizes = [8, 16, 4], strides = [1, 1, 1]} : vector<10x18x4xbf16> to vector<8x16x4xbf16>
    %53 = vector.shape_cast %52 : vector<8x16x4xbf16> to vector<128x4xbf16>
    %54 = vector.extract_strided_slice %23 {offsets = [1, 1, 0], sizes = [8, 16, 4], strides = [1, 1, 1]} : vector<10x18x4xbf16> to vector<8x16x4xbf16>
    %55 = vector.shape_cast %54 : vector<8x16x4xbf16> to vector<128x4xbf16>
    %56 = vector.extract_strided_slice %37 {offsets = [1, 1, 0], sizes = [8, 16, 4], strides = [1, 1, 1]} : vector<10x18x4xbf16> to vector<8x16x4xbf16>
    %57 = vector.shape_cast %56 : vector<8x16x4xbf16> to vector<128x4xbf16>
    %58 = vector.extract_strided_slice %23 {offsets = [1, 2, 0], sizes = [8, 16, 4], strides = [1, 1, 1]} : vector<10x18x4xbf16> to vector<8x16x4xbf16>
    %59 = vector.shape_cast %58 : vector<8x16x4xbf16> to vector<128x4xbf16>
    %60 = vector.extract_strided_slice %37 {offsets = [1, 2, 0], sizes = [8, 16, 4], strides = [1, 1, 1]} : vector<10x18x4xbf16> to vector<8x16x4xbf16>
    %61 = vector.shape_cast %60 : vector<8x16x4xbf16> to vector<128x4xbf16>
    %62 = vector.extract_strided_slice %23 {offsets = [2, 0, 0], sizes = [8, 16, 4], strides = [1, 1, 1]} : vector<10x18x4xbf16> to vector<8x16x4xbf16>
    %63 = vector.shape_cast %62 : vector<8x16x4xbf16> to vector<128x4xbf16>
    %64 = vector.extract_strided_slice %37 {offsets = [2, 0, 0], sizes = [8, 16, 4], strides = [1, 1, 1]} : vector<10x18x4xbf16> to vector<8x16x4xbf16>
    %65 = vector.shape_cast %64 : vector<8x16x4xbf16> to vector<128x4xbf16>
    %66 = vector.extract_strided_slice %23 {offsets = [2, 1, 0], sizes = [8, 16, 4], strides = [1, 1, 1]} : vector<10x18x4xbf16> to vector<8x16x4xbf16>
    %67 = vector.shape_cast %66 : vector<8x16x4xbf16> to vector<128x4xbf16>
    %68 = vector.extract_strided_slice %37 {offsets = [2, 1, 0], sizes = [8, 16, 4], strides = [1, 1, 1]} : vector<10x18x4xbf16> to vector<8x16x4xbf16>
    %69 = vector.shape_cast %68 : vector<8x16x4xbf16> to vector<128x4xbf16>
    %70 = vector.extract_strided_slice %23 {offsets = [2, 2, 0], sizes = [8, 16, 4], strides = [1, 1, 1]} : vector<10x18x4xbf16> to vector<8x16x4xbf16>
    %71 = vector.shape_cast %70 : vector<8x16x4xbf16> to vector<128x4xbf16>
    %72 = vector.extract_strided_slice %37 {offsets = [2, 2, 0], sizes = [8, 16, 4], strides = [1, 1, 1]} : vector<10x18x4xbf16> to vector<8x16x4xbf16>
    %73 = vector.shape_cast %72 : vector<8x16x4xbf16> to vector<128x4xbf16>
    %74 = tpu.concatenate %39, %41, %43, %45, %47, %49, %51, %53, %55, %57, %59, %61, %63, %65, %67, %69 in 1 : vector<128x4xbf16>, vector<128x4xbf16>, vector<128x4xbf16>, vector<128x4xbf16>, vector<128x4xbf16>, vector<128x4xbf16>, vector<128x4xbf16>, vector<128x4xbf16>, vector<128x4xbf16>, vector<128x4xbf16>, vector<128x4xbf16>, vector<128x4xbf16>, vector<128x4xbf16>, vector<128x4xbf16>, vector<128x4xbf16>, vector<128x4xbf16> -> vector<128x64xbf16>
    %75 = tpu.concatenate %71, %73 in 1 : vector<128x4xbf16>, vector<128x4xbf16> -> vector<128x8xbf16>
    %76 = tpu.concatenate %74, %75 in 1 : vector<128x64xbf16>, vector<128x8xbf16> -> vector<128x72xbf16>
    %c0_26 = arith.constant 0 : index
    %c0_27 = arith.constant 0 : index
    %77 = vector.load %arg8[%c0_26, %c0_27] : memref<72x4xbf16, #tpu.memory_space<vmem>>, vector<72x4xbf16>
    %cst_28 = arith.constant dense<0.000000e+00> : vector<128x4xf32>
    %78 = tpu.matmul %76, %77, %cst_28 {dimension_numbers = #tpu.dot_dimension_numbers<[1], [0], [0], [1], [0, 0, 1, 1], [], []>} : vector<128x72xbf16>, vector<72x4xbf16>, vector<128x4xf32> -> vector<128x4xf32>
    %79 = vector.shape_cast %78 : vector<128x4xf32> to vector<8x16x4xf32>
    %c8_i32_29 = arith.constant 8 : i32
    %80 = arith.muli %arg1, %c8_i32_29 : i32
    %81 = tpu.iota {dimensions = array<i32: 0>} : vector<8x1x1xi32>
    %82 = vector.broadcast %80 : i32 to vector<8x1x1xi32>
    %83 = arith.addi %82, %81 : vector<8x1x1xi32>
    %c14_i32_30 = arith.constant 14 : i32
    %84 = vector.broadcast %c14_i32_30 : i32 to vector<8x1x1xi32>
    %85 = arith.cmpi slt, %83, %84 : vector<8x1x1xi32>
    %cst_31 = arith.constant 0.000000e+00 : f32
    %86 = vector.shape_cast %85 : vector<8x1x1xi1> to vector<8x1x1xi1>
    %87 = vector.broadcast %86 : vector<8x1x1xi1> to vector<8x16x4xi1>
    %88 = vector.broadcast %cst_31 : f32 to vector<8x16x4xf32>
    %89 = arith.select %87, %79, %88 : vector<8x16x4xi1>, vector<8x16x4xf32>
    %cst_32 = arith.constant dense<0.000000e+00> : vector<4xf32>
    %90 = vector.multi_reduction <add>, %89, %cst_32 [0, 1] : vector<8x16x4xf32> to vector<4xf32>
    %91 = vector.shape_cast %90 : vector<4xf32> to vector<1x1x4xf32>
    %92 = arith.mulf %89, %89 : vector<8x16x4xf32>
    %cst_33 = arith.constant dense<0.000000e+00> : vector<4xf32>
    %93 = vector.multi_reduction <add>, %92, %cst_33 [0, 1] : vector<8x16x4xf32> to vector<4xf32>
    %94 = vector.shape_cast %93 : vector<4xf32> to vector<1x1x4xf32>
    %95 = tpu.concatenate %91, %94 in 1 : vector<1x1x4xf32>, vector<1x1x4xf32> -> vector<1x2x4xf32>
    %96 = vector.shape_cast %95 : vector<1x2x4xf32> to vector<1x1x2x4xf32>
    %c0_34 = arith.constant 0 : index
    %c0_35 = arith.constant 0 : index
    %c0_36 = arith.constant 0 : index
    %c0_37 = arith.constant 0 : index
    %97 = vector.load %arg10[%c0_34, %c0_35, %c0_36, %c0_37] : memref<1x1x2x4xf32, #tpu.memory_space<vmem>>, vector<1x1x2x4xf32>
    tpu.vector_store %arg10[%c0_34, %c0_35, %c0_36, %c0_37], %96 {strides = array<i32>} : memref<1x1x2x4xf32, #tpu.memory_space<vmem>>, vector<1x1x2x4xf32>,
    %98 = vector.shape_cast %79 : vector<8x16x4xf32> to vector<1x8x16x4xf32>
    %99 = arith.truncf %98 : vector<1x8x16x4xf32> to vector<1x8x16x4xbf16>
    %c0_38 = arith.constant 0 : index
    %c0_39 = arith.constant 0 : index
    %c0_40 = arith.constant 0 : index
    %c0_41 = arith.constant 0 : index
    %100 = vector.load %arg9[%c0_38, %c0_39, %c0_40, %c0_41] : memref<1x8x16x4xbf16, #tpu.memory_space<vmem>>, vector<1x8x16x4xbf16>
    tpu.vector_store %arg9[%c0_38, %c0_39, %c0_40, %c0_41], %99 {strides = array<i32>} : memref<1x8x16x4xbf16, #tpu.memory_space<vmem>>, vector<1x8x16x4xbf16>,
    return
  }
  func.func @transform_0(%arg0: i32, %arg1: i32) -> (i32, i32, i32, i32) {
    %c0_i32 = arith.constant 0 : i32
    %c0_i32_0 = arith.constant 0 : i32
    %c0_i32_1 = arith.constant 0 : i32
    return %arg0, %arg1, %c0_i32, %c0_i32_0 : i32, i32, i32, i32
  }
  func.func @transform_1(%arg0: i32, %arg1: i32) -> (i32, i32, i32, i32) {
    %c8_i32 = arith.constant 8 : i32
    %0 = arith.muli %arg1, %c8_i32 : i32
    %c1_i32 = arith.constant 1 : i32
    %1 = arith.subi %0, %c1_i32 : i32
    %c0_i32 = arith.constant 0 : i32
    %2 = arith.maxsi %1, %c0_i32 : i32
    %c0_i32_0 = arith.constant 0 : i32
    %c0_i32_1 = arith.constant 0 : i32
    %c0_i32_2 = arith.constant 0 : i32
    return %arg0, %2, %c0_i32_0, %c0_i32_1 : i32, i32, i32, i32
  }
  func.func @transform_2(%arg0: i32, %arg1: i32) -> (i32, i32, i32, i32) {
    %c8_i32 = arith.constant 8 : i32
    %0 = arith.muli %arg1, %c8_i32 : i32
    %c8_i32_0 = arith.constant 8 : i32
    %1 = arith.addi %0, %c8_i32_0 : i32
    %c15_i32 = arith.constant 15 : i32
    %2 = arith.minsi %1, %c15_i32 : i32
    %c0_i32 = arith.constant 0 : i32
    %c0_i32_1 = arith.constant 0 : i32
    %c0_i32_2 = arith.constant 0 : i32
    return %arg0, %2, %c0_i32, %c0_i32_1 : i32, i32, i32, i32
  }
  func.func @transform_3(%arg0: i32, %arg1: i32) -> (i32, i32, i32, i32) {
    %c0_i32 = arith.constant 0 : i32
    %c0_i32_0 = arith.constant 0 : i32
    %c0_i32_1 = arith.constant 0 : i32
    return %arg0, %arg1, %c0_i32, %c0_i32_0 : i32, i32, i32, i32
  }
  func.func @transform_4(%arg0: i32, %arg1: i32) -> (i32, i32, i32, i32) {
    %c8_i32 = arith.constant 8 : i32
    %0 = arith.muli %arg1, %c8_i32 : i32
    %c1_i32 = arith.constant 1 : i32
    %1 = arith.subi %0, %c1_i32 : i32
    %c0_i32 = arith.constant 0 : i32
    %2 = arith.maxsi %1, %c0_i32 : i32
    %c0_i32_0 = arith.constant 0 : i32
    %c0_i32_1 = arith.constant 0 : i32
    %c0_i32_2 = arith.constant 0 : i32
    return %arg0, %2, %c0_i32_0, %c0_i32_1 : i32, i32, i32, i32
  }
  func.func @transform_5(%arg0: i32, %arg1: i32) -> (i32, i32, i32, i32) {
    %c8_i32 = arith.constant 8 : i32
    %0 = arith.muli %arg1, %c8_i32 : i32
    %c8_i32_0 = arith.constant 8 : i32
    %1 = arith.addi %0, %c8_i32_0 : i32
    %c15_i32 = arith.constant 15 : i32
    %2 = arith.minsi %1, %c15_i32 : i32
    %c0_i32 = arith.constant 0 : i32
    %c0_i32_1 = arith.constant 0 : i32
    %c0_i32_2 = arith.constant 0 : i32
    return %arg0, %2, %c0_i32, %c0_i32_1 : i32, i32, i32, i32
  }
  func.func @transform_6(%arg0: i32, %arg1: i32) -> (i32, i32) {
    %c0_i32 = arith.constant 0 : i32
    %c0_i32_0 = arith.constant 0 : i32
    %c0_i32_1 = arith.constant 0 : i32
    return %c0_i32, %c0_i32_0 : i32, i32
  }
  func.func @transform_7(%arg0: i32, %arg1: i32) -> (i32, i32, i32, i32) {
    %c0_i32 = arith.constant 0 : i32
    %c0_i32_0 = arith.constant 0 : i32
    %c0_i32_1 = arith.constant 0 : i32
    return %arg0, %arg1, %c0_i32, %c0_i32_0 : i32, i32, i32, i32
  }
  func.func @transform_8(%arg0: i32, %arg1: i32) -> (i32, i32, i32, i32) {
    %c0_i32 = arith.constant 0 : i32
    %c0_i32_0 = arith.constant 0 : i32
    %c0_i32_1 = arith.constant 0 : i32
    return %arg0, %arg1, %c0_i32, %c0_i32_0 : i32, i32, i32, i32
  }
}

module attributes {stable_mosaic.version = 11 : i64} {
  func.func @_conv3x3_kernel(%arg0: i32, %arg1: i32, %arg2: memref<1x8x16x4xbf16, #tpu.memory_space<vmem>>, %arg3: memref<1x1x16x4xbf16, #tpu.memory_space<vmem>>, %arg4: memref<1x1x16x4xbf16, #tpu.memory_space<vmem>>, %arg5: memref<1x4xf32, #tpu.memory_space<vmem>>, %arg6: memref<1x4xf32, #tpu.memory_space<vmem>>, %arg7: memref<36x4xbf16, #tpu.memory_space<vmem>>, %arg8: memref<1x8x16x4xbf16, #tpu.memory_space<vmem>>, %arg9: memref<1x1x2x4xf32, #tpu.memory_space<vmem>>) attributes {dimension_semantics = [#tpu.dimension_semantics<parallel>, #tpu.dimension_semantics<parallel>], iteration_bounds = array<i64: 2, 2>, scalar_prefetch = 0 : i64, scratch_operands = 0 : i64, tpu.core_type = #tpu.core_type<tc>, window_params = [{transform_indices = @transform_0, window_bounds = array<i64: 1, 8, 16, 4>}, {transform_indices = @transform_1, window_bounds = array<i64: 1, 1, 16, 4>}, {transform_indices = @transform_2, window_bounds = array<i64: 1, 1, 16, 4>}, {pipeline_mode = #tpu.pipeline_mode<synchronous>, transform_indices = @transform_3, window_bounds = array<i64: 1, 4>}, {pipeline_mode = #tpu.pipeline_mode<synchronous>, transform_indices = @transform_4, window_bounds = array<i64: 1, 4>}, {pipeline_mode = #tpu.pipeline_mode<synchronous>, transform_indices = @transform_5, window_bounds = array<i64: 36, 4>}, {transform_indices = @transform_6, window_bounds = array<i64: 1, 8, 16, 4>}, {transform_indices = @transform_7, window_bounds = array<i64: 1, 1, 2, 4>}]} {
    %c8_i32 = arith.constant 8 : i32
    %0 = arith.muli %arg1, %c8_i32 : i32
    %c1_i32 = arith.constant 1 : i32
    %1 = arith.subi %0, %c1_i32 : i32
    %2 = tpu.iota {dimensions = array<i32: 0>} : vector<10x1x1xi32>
    %3 = vector.broadcast %1 : i32 to vector<10x1x1xi32>
    %4 = arith.addi %3, %2 : vector<10x1x1xi32>
    %c0_i32 = arith.constant 0 : i32
    %5 = vector.broadcast %c0_i32 : i32 to vector<10x1x1xi32>
    %6 = arith.cmpi sge, %4, %5 : vector<10x1x1xi32>
    %c14_i32 = arith.constant 14 : i32
    %7 = vector.broadcast %c14_i32 : i32 to vector<10x1x1xi32>
    %8 = arith.cmpi slt, %4, %7 : vector<10x1x1xi32>
    %9 = arith.andi %6, %8 : vector<10x1x1xi1>
    %c0 = arith.constant 0 : index
    %c0_0 = arith.constant 0 : index
    %c0_1 = arith.constant 0 : index
    %c0_2 = arith.constant 0 : index
    %10 = vector.load %arg2[%c0, %c0_0, %c0_1, %c0_2] : memref<1x8x16x4xbf16, #tpu.memory_space<vmem>>, vector<1x8x16x4xbf16>
    %11 = vector.shape_cast %10 : vector<1x8x16x4xbf16> to vector<8x16x4xbf16>
    %c0_3 = arith.constant 0 : index
    %c0_4 = arith.constant 0 : index
    %c0_5 = arith.constant 0 : index
    %c0_6 = arith.constant 0 : index
    %12 = vector.load %arg3[%c0_3, %c0_4, %c0_5, %c0_6] : memref<1x1x16x4xbf16, #tpu.memory_space<vmem>>, vector<1x1x16x4xbf16>
    %13 = vector.shape_cast %12 : vector<1x1x16x4xbf16> to vector<1x16x4xbf16>
    %c0_7 = arith.constant 0 : index
    %c0_8 = arith.constant 0 : index
    %c0_9 = arith.constant 0 : index
    %c0_10 = arith.constant 0 : index
    %14 = vector.load %arg4[%c0_7, %c0_8, %c0_9, %c0_10] : memref<1x1x16x4xbf16, #tpu.memory_space<vmem>>, vector<1x1x16x4xbf16>
    %15 = vector.shape_cast %14 : vector<1x1x16x4xbf16> to vector<1x16x4xbf16>
    %16 = tpu.concatenate %13, %11, %15 in 0 : vector<1x16x4xbf16>, vector<8x16x4xbf16>, vector<1x16x4xbf16> -> vector<10x16x4xbf16>
    %c0_11 = arith.constant 0 : index
    %c0_12 = arith.constant 0 : index
    %17 = vector.load %arg5[%c0_11, %c0_12] : memref<1x4xf32, #tpu.memory_space<vmem>>, vector<1x4xf32>
    %18 = vector.shape_cast %17 : vector<1x4xf32> to vector<4xf32>
    %c0_13 = arith.constant 0 : index
    %c0_14 = arith.constant 0 : index
    %19 = vector.load %arg6[%c0_13, %c0_14] : memref<1x4xf32, #tpu.memory_space<vmem>>, vector<1x4xf32>
    %20 = vector.shape_cast %19 : vector<1x4xf32> to vector<4xf32>
    %21 = arith.extf %16 : vector<10x16x4xbf16> to vector<10x16x4xf32>
    %22 = vector.shape_cast %18 : vector<4xf32> to vector<1x1x4xf32>
    %23 = vector.broadcast %22 : vector<1x1x4xf32> to vector<10x16x4xf32>
    %24 = arith.mulf %21, %23 : vector<10x16x4xf32>
    %25 = vector.shape_cast %20 : vector<4xf32> to vector<1x1x4xf32>
    %26 = vector.broadcast %25 : vector<1x1x4xf32> to vector<10x16x4xf32>
    %27 = arith.addf %24, %26 : vector<10x16x4xf32>
    %cst = arith.constant 0.000000e+00 : f32
    %28 = vector.broadcast %cst : f32 to vector<10x16x4xf32>
    %29 = arith.maximumf %27, %28 : vector<10x16x4xf32>
    %cst_15 = arith.constant 0.000000e+00 : f32
    %30 = vector.shape_cast %9 : vector<10x1x1xi1> to vector<10x1x1xi1>
    %31 = vector.broadcast %30 : vector<10x1x1xi1> to vector<10x16x4xi1>
    %32 = vector.broadcast %cst_15 : f32 to vector<10x16x4xf32>
    %33 = arith.select %31, %29, %32 : vector<10x16x4xi1>, vector<10x16x4xf32>
    %34 = arith.truncf %33 : vector<10x16x4xf32> to vector<10x16x4xbf16>
    %cst_16 = arith.constant 0.000000e+00 : bf16
    %35 = vector.broadcast %cst_16 : bf16 to vector<10x1x4xbf16>
    %36 = tpu.concatenate %35, %34, %35 in 1 : vector<10x1x4xbf16>, vector<10x16x4xbf16>, vector<10x1x4xbf16> -> vector<10x18x4xbf16>
    %37 = vector.extract_strided_slice %36 {offsets = [0, 0, 0], sizes = [8, 16, 4], strides = [1, 1, 1]} : vector<10x18x4xbf16> to vector<8x16x4xbf16>
    %38 = vector.shape_cast %37 : vector<8x16x4xbf16> to vector<128x4xbf16>
    %39 = vector.extract_strided_slice %36 {offsets = [0, 1, 0], sizes = [8, 16, 4], strides = [1, 1, 1]} : vector<10x18x4xbf16> to vector<8x16x4xbf16>
    %40 = vector.shape_cast %39 : vector<8x16x4xbf16> to vector<128x4xbf16>
    %41 = vector.extract_strided_slice %36 {offsets = [0, 2, 0], sizes = [8, 16, 4], strides = [1, 1, 1]} : vector<10x18x4xbf16> to vector<8x16x4xbf16>
    %42 = vector.shape_cast %41 : vector<8x16x4xbf16> to vector<128x4xbf16>
    %43 = vector.extract_strided_slice %36 {offsets = [1, 0, 0], sizes = [8, 16, 4], strides = [1, 1, 1]} : vector<10x18x4xbf16> to vector<8x16x4xbf16>
    %44 = vector.shape_cast %43 : vector<8x16x4xbf16> to vector<128x4xbf16>
    %45 = vector.extract_strided_slice %36 {offsets = [1, 1, 0], sizes = [8, 16, 4], strides = [1, 1, 1]} : vector<10x18x4xbf16> to vector<8x16x4xbf16>
    %46 = vector.shape_cast %45 : vector<8x16x4xbf16> to vector<128x4xbf16>
    %47 = vector.extract_strided_slice %36 {offsets = [1, 2, 0], sizes = [8, 16, 4], strides = [1, 1, 1]} : vector<10x18x4xbf16> to vector<8x16x4xbf16>
    %48 = vector.shape_cast %47 : vector<8x16x4xbf16> to vector<128x4xbf16>
    %49 = vector.extract_strided_slice %36 {offsets = [2, 0, 0], sizes = [8, 16, 4], strides = [1, 1, 1]} : vector<10x18x4xbf16> to vector<8x16x4xbf16>
    %50 = vector.shape_cast %49 : vector<8x16x4xbf16> to vector<128x4xbf16>
    %51 = vector.extract_strided_slice %36 {offsets = [2, 1, 0], sizes = [8, 16, 4], strides = [1, 1, 1]} : vector<10x18x4xbf16> to vector<8x16x4xbf16>
    %52 = vector.shape_cast %51 : vector<8x16x4xbf16> to vector<128x4xbf16>
    %53 = vector.extract_strided_slice %36 {offsets = [2, 2, 0], sizes = [8, 16, 4], strides = [1, 1, 1]} : vector<10x18x4xbf16> to vector<8x16x4xbf16>
    %54 = vector.shape_cast %53 : vector<8x16x4xbf16> to vector<128x4xbf16>
    %55 = tpu.concatenate %38, %40, %42, %44, %46, %48, %50, %52, %54 in 1 : vector<128x4xbf16>, vector<128x4xbf16>, vector<128x4xbf16>, vector<128x4xbf16>, vector<128x4xbf16>, vector<128x4xbf16>, vector<128x4xbf16>, vector<128x4xbf16>, vector<128x4xbf16> -> vector<128x36xbf16>
    %c0_17 = arith.constant 0 : index
    %c0_18 = arith.constant 0 : index
    %56 = vector.load %arg7[%c0_17, %c0_18] : memref<36x4xbf16, #tpu.memory_space<vmem>>, vector<36x4xbf16>
    %cst_19 = arith.constant dense<0.000000e+00> : vector<128x4xf32>
    %57 = tpu.matmul %55, %56, %cst_19 {dimension_numbers = #tpu.dot_dimension_numbers<[1], [0], [0], [1], [0, 0, 1, 1], [], []>} : vector<128x36xbf16>, vector<36x4xbf16>, vector<128x4xf32> -> vector<128x4xf32>
    %58 = vector.shape_cast %57 : vector<128x4xf32> to vector<8x16x4xf32>
    %c8_i32_20 = arith.constant 8 : i32
    %59 = arith.muli %arg1, %c8_i32_20 : i32
    %60 = tpu.iota {dimensions = array<i32: 0>} : vector<8x1x1xi32>
    %61 = vector.broadcast %59 : i32 to vector<8x1x1xi32>
    %62 = arith.addi %61, %60 : vector<8x1x1xi32>
    %c14_i32_21 = arith.constant 14 : i32
    %63 = vector.broadcast %c14_i32_21 : i32 to vector<8x1x1xi32>
    %64 = arith.cmpi slt, %62, %63 : vector<8x1x1xi32>
    %cst_22 = arith.constant 0.000000e+00 : f32
    %65 = vector.shape_cast %64 : vector<8x1x1xi1> to vector<8x1x1xi1>
    %66 = vector.broadcast %65 : vector<8x1x1xi1> to vector<8x16x4xi1>
    %67 = vector.broadcast %cst_22 : f32 to vector<8x16x4xf32>
    %68 = arith.select %66, %58, %67 : vector<8x16x4xi1>, vector<8x16x4xf32>
    %cst_23 = arith.constant dense<0.000000e+00> : vector<4xf32>
    %69 = vector.multi_reduction <add>, %68, %cst_23 [0, 1] : vector<8x16x4xf32> to vector<4xf32>
    %70 = vector.shape_cast %69 : vector<4xf32> to vector<1x1x4xf32>
    %71 = arith.mulf %68, %68 : vector<8x16x4xf32>
    %cst_24 = arith.constant dense<0.000000e+00> : vector<4xf32>
    %72 = vector.multi_reduction <add>, %71, %cst_24 [0, 1] : vector<8x16x4xf32> to vector<4xf32>
    %73 = vector.shape_cast %72 : vector<4xf32> to vector<1x1x4xf32>
    %74 = tpu.concatenate %70, %73 in 1 : vector<1x1x4xf32>, vector<1x1x4xf32> -> vector<1x2x4xf32>
    %75 = vector.shape_cast %74 : vector<1x2x4xf32> to vector<1x1x2x4xf32>
    %c0_25 = arith.constant 0 : index
    %c0_26 = arith.constant 0 : index
    %c0_27 = arith.constant 0 : index
    %c0_28 = arith.constant 0 : index
    %76 = vector.load %arg9[%c0_25, %c0_26, %c0_27, %c0_28] : memref<1x1x2x4xf32, #tpu.memory_space<vmem>>, vector<1x1x2x4xf32>
    tpu.vector_store %arg9[%c0_25, %c0_26, %c0_27, %c0_28], %75 {strides = array<i32>} : memref<1x1x2x4xf32, #tpu.memory_space<vmem>>, vector<1x1x2x4xf32>,
    %77 = vector.shape_cast %58 : vector<8x16x4xf32> to vector<1x8x16x4xf32>
    %78 = arith.truncf %77 : vector<1x8x16x4xf32> to vector<1x8x16x4xbf16>
    %c0_29 = arith.constant 0 : index
    %c0_30 = arith.constant 0 : index
    %c0_31 = arith.constant 0 : index
    %c0_32 = arith.constant 0 : index
    %79 = vector.load %arg8[%c0_29, %c0_30, %c0_31, %c0_32] : memref<1x8x16x4xbf16, #tpu.memory_space<vmem>>, vector<1x8x16x4xbf16>
    tpu.vector_store %arg8[%c0_29, %c0_30, %c0_31, %c0_32], %78 {strides = array<i32>} : memref<1x8x16x4xbf16, #tpu.memory_space<vmem>>, vector<1x8x16x4xbf16>,
    return
  }
  func.func @transform_0(%arg0: i32, %arg1: i32) -> (i32, i32, i32, i32) {
    %c0_i32 = arith.constant 0 : i32
    %c0_i32_0 = arith.constant 0 : i32
    %c0_i32_1 = arith.constant 0 : i32
    return %arg0, %arg1, %c0_i32, %c0_i32_0 : i32, i32, i32, i32
  }
  func.func @transform_1(%arg0: i32, %arg1: i32) -> (i32, i32, i32, i32) {
    %c8_i32 = arith.constant 8 : i32
    %0 = arith.muli %arg1, %c8_i32 : i32
    %c1_i32 = arith.constant 1 : i32
    %1 = arith.subi %0, %c1_i32 : i32
    %c0_i32 = arith.constant 0 : i32
    %2 = arith.maxsi %1, %c0_i32 : i32
    %c0_i32_0 = arith.constant 0 : i32
    %c0_i32_1 = arith.constant 0 : i32
    %c0_i32_2 = arith.constant 0 : i32
    return %arg0, %2, %c0_i32_0, %c0_i32_1 : i32, i32, i32, i32
  }
  func.func @transform_2(%arg0: i32, %arg1: i32) -> (i32, i32, i32, i32) {
    %c8_i32 = arith.constant 8 : i32
    %0 = arith.muli %arg1, %c8_i32 : i32
    %c8_i32_0 = arith.constant 8 : i32
    %1 = arith.addi %0, %c8_i32_0 : i32
    %c15_i32 = arith.constant 15 : i32
    %2 = arith.minsi %1, %c15_i32 : i32
    %c0_i32 = arith.constant 0 : i32
    %c0_i32_1 = arith.constant 0 : i32
    %c0_i32_2 = arith.constant 0 : i32
    return %arg0, %2, %c0_i32, %c0_i32_1 : i32, i32, i32, i32
  }
  func.func @transform_3(%arg0: i32, %arg1: i32) -> (i32, i32) {
    %c0_i32 = arith.constant 0 : i32
    %c0_i32_0 = arith.constant 0 : i32
    %c0_i32_1 = arith.constant 0 : i32
    return %c0_i32, %c0_i32_0 : i32, i32
  }
  func.func @transform_4(%arg0: i32, %arg1: i32) -> (i32, i32) {
    %c0_i32 = arith.constant 0 : i32
    %c0_i32_0 = arith.constant 0 : i32
    %c0_i32_1 = arith.constant 0 : i32
    return %c0_i32, %c0_i32_0 : i32, i32
  }
  func.func @transform_5(%arg0: i32, %arg1: i32) -> (i32, i32) {
    %c0_i32 = arith.constant 0 : i32
    %c0_i32_0 = arith.constant 0 : i32
    %c0_i32_1 = arith.constant 0 : i32
    return %c0_i32, %c0_i32_0 : i32, i32
  }
  func.func @transform_6(%arg0: i32, %arg1: i32) -> (i32, i32, i32, i32) {
    %c0_i32 = arith.constant 0 : i32
    %c0_i32_0 = arith.constant 0 : i32
    %c0_i32_1 = arith.constant 0 : i32
    return %arg0, %arg1, %c0_i32, %c0_i32_0 : i32, i32, i32, i32
  }
  func.func @transform_7(%arg0: i32, %arg1: i32) -> (i32, i32, i32, i32) {
    %c0_i32 = arith.constant 0 : i32
    %c0_i32_0 = arith.constant 0 : i32
    %c0_i32_1 = arith.constant 0 : i32
    return %arg0, %arg1, %c0_i32, %c0_i32_0 : i32, i32, i32, i32
  }
}

module attributes {stable_mosaic.version = 11 : i64} {
  func.func @_bn_relu_kernel(%arg0: i32, %arg1: memref<32x64xbf16, #tpu.memory_space<vmem>>, %arg2: memref<1x64xf32, #tpu.memory_space<vmem>>, %arg3: memref<1x64xf32, #tpu.memory_space<vmem>>, %arg4: memref<32x64xf32, #tpu.memory_space<vmem>>) attributes {dimension_semantics = [#tpu.dimension_semantics<parallel>], iteration_bounds = array<i64: 1>, scalar_prefetch = 0 : i64, scratch_operands = 0 : i64, tpu.core_type = #tpu.core_type<tc>, window_params = [{transform_indices = @transform_0, window_bounds = array<i64: 32, 64>}, {pipeline_mode = #tpu.pipeline_mode<synchronous>, transform_indices = @transform_1, window_bounds = array<i64: 1, 64>}, {pipeline_mode = #tpu.pipeline_mode<synchronous>, transform_indices = @transform_2, window_bounds = array<i64: 1, 64>}, {transform_indices = @transform_3, window_bounds = array<i64: 32, 64>}]} {
    %c0 = arith.constant 0 : index
    %c0_0 = arith.constant 0 : index
    %0 = vector.load %arg1[%c0, %c0_0] : memref<32x64xbf16, #tpu.memory_space<vmem>>, vector<32x64xbf16>
    %1 = arith.extf %0 : vector<32x64xbf16> to vector<32x64xf32>
    %c0_1 = arith.constant 0 : index
    %c0_2 = arith.constant 0 : index
    %2 = vector.load %arg2[%c0_1, %c0_2] : memref<1x64xf32, #tpu.memory_space<vmem>>, vector<1x64xf32>
    %3 = vector.broadcast %2 : vector<1x64xf32> to vector<32x64xf32>
    %4 = arith.mulf %1, %3 : vector<32x64xf32>
    %c0_3 = arith.constant 0 : index
    %c0_4 = arith.constant 0 : index
    %5 = vector.load %arg3[%c0_3, %c0_4] : memref<1x64xf32, #tpu.memory_space<vmem>>, vector<1x64xf32>
    %6 = vector.broadcast %5 : vector<1x64xf32> to vector<32x64xf32>
    %7 = arith.addf %4, %6 : vector<32x64xf32>
    %cst = arith.constant 0.000000e+00 : f32
    %8 = vector.broadcast %cst : f32 to vector<32x64xf32>
    %9 = arith.maximumf %7, %8 : vector<32x64xf32>
    %c0_5 = arith.constant 0 : index
    %c0_6 = arith.constant 0 : index
    %10 = vector.load %arg4[%c0_5, %c0_6] : memref<32x64xf32, #tpu.memory_space<vmem>>, vector<32x64xf32>
    tpu.vector_store %arg4[%c0_5, %c0_6], %9 {strides = array<i32>} : memref<32x64xf32, #tpu.memory_space<vmem>>, vector<32x64xf32>,
    return
  }
  func.func @transform_0(%arg0: i32) -> (i32, i32) {
    %c0_i32 = arith.constant 0 : i32
    %c0_i32_0 = arith.constant 0 : i32
    return %arg0, %c0_i32 : i32, i32
  }
  func.func @transform_1(%arg0: i32) -> (i32, i32) {
    %c0_i32 = arith.constant 0 : i32
    %c0_i32_0 = arith.constant 0 : i32
    %c0_i32_1 = arith.constant 0 : i32
    return %c0_i32, %c0_i32_0 : i32, i32
  }
  func.func @transform_2(%arg0: i32) -> (i32, i32) {
    %c0_i32 = arith.constant 0 : i32
    %c0_i32_0 = arith.constant 0 : i32
    %c0_i32_1 = arith.constant 0 : i32
    return %c0_i32, %c0_i32_0 : i32, i32
  }
  func.func @transform_3(%arg0: i32) -> (i32, i32) {
    %c0_i32 = arith.constant 0 : i32
    %c0_i32_0 = arith.constant 0 : i32
    return %arg0, %c0_i32 : i32, i32
  }
}

</mosaic_0001>

<llo_original>
// kernel: tile.13
$region0: #{tile.13}
  #allocation0 [shape = 's32[1]{0}', space=sflag, size = 0x4, scoped, tag = 'scoped memory for tile.13']
  %s0 = inlined_call_operand.vmem [shape: f32[4], index: 0, kind: input, shape index: {}]
  %s1 = inlined_call_operand.vmem [shape: f32[16,4], index: 1, kind: output, shape index: {}]
  // Predicated region
  $region2: #{tile.13} parent=0 // pred_check
    _
  $region3: #{tile.13} parent=0 // pred_check_branch
    %3 = sbr.rel (0) target = $region5
  $region4: #{tile.13} parent=0 // pred_region
    _
  $region5: #{tile.13} parent=0 // pred_fallthru
    _
  %v4 = vld [vmem:[%s0] ss:$0 sm:$0xff]
  %5 = vst [vmem:[%s1] sm:$0xff] %v4
  %s6 = scalar_lea.vmem %s1, 8
  %7 = vst [vmem:[%s6] sm:$0xff] %v4

// kernel: tile.18
$region0: #{tile.18}
  %s0 = inlined_call_operand.vmem [shape: f32[16,4], index: 0, kind: input, shape index: {}]
  %s1 = inlined_call_operand.vmem [shape: f32[1,64], index: 1, kind: output, shape index: {}]
  $region1: #{tile.18} parent=0
    #allocation0 [shape = 'u8[4096]{0}', space=vmem, size = 0x1000, scoped, tag = 'scoped mem for output reshape']
    %v2 = vld [vmem:[%s0] sm:$0x1]
    %vm3 = vcmask 31744
    %4 = vst.msk [vmem:[#allocation0] sm:$0x1] %vm3, %v2
    %s5 = scalar_lea.vmem %s0, 15
    %v6 = vld [vmem:[%s5] sm:$0x1]
    %7 = vrot.lane.b32.xlu0 %v6, 60
    %v8 = vpop.permute.xlu0 %7
    %vm9 = vcmask 523744
    %10 = vst.msk [vmem:[#allocation0] sm:$0x1] %vm9, %v8
    %s11 = scalar_lea.vmem %s0, 14
    %v12 = vld [vmem:[%s11] sm:$0x1]
    %13 = vrot.lane.b32.xlu0 %v12, 56
    %v14 = vpop.permute.xlu0 %13
    %vm15 = vcmask 490944
    %16 = vst.msk [vmem:[#allocation0] sm:$0x1] %vm15, %v14
    %s17 = scalar_lea.vmem %s0, 13
    %v18 = vld [vmem:[%s17] sm:$0x1]
    %19 = vrot.lane.b32.xlu0 %v18, 52
    %v20 = vpop.permute.xlu0 %19
    %vm21 = vcmask 458144
    %22 = vst.msk [vmem:[#allocation0] sm:$0x1] %vm21, %v20
    %s23 = scalar_lea.vmem %s0, 12
    %v24 = vld [vmem:[%s23] sm:$0x1]
    %25 = vrot.lane.b32.xlu0 %v24, 48
    %v26 = vpop.permute.xlu0 %25
    %vm27 = vcmask 425344
    %28 = vst.msk [vmem:[#allocation0] sm:$0x1] %vm27, %v26
    %s29 = scalar_lea.vmem %s0, 11
    %v30 = vld [vmem:[%s29] sm:$0x1]
    %31 = vrot.lane.b32.xlu0 %v30, 44
    %v32 = vpop.permute.xlu0 %31
    %vm33 = vcmask 392544
    %34 = vst.msk [vmem:[#allocation0] sm:$0x1] %vm33, %v32
    %s35 = scalar_lea.vmem %s0, 10
    %v36 = vld [vmem:[%s35] sm:$0x1]
    %37 = vrot.lane.b32.xlu0 %v36, 40
    %v38 = vpop.permute.xlu0 %37
    %vm39 = vcmask 359744
    %40 = vst.msk [vmem:[#allocation0] sm:$0x1] %vm39, %v38
    %s41 = scalar_lea.vmem %s0, 9
    %v42 = vld [vmem:[%s41] sm:$0x1]
    %43 = vrot.lane.b32.xlu0 %v42, 36
    %v44 = vpop.permute.xlu0 %43
    %vm45 = vcmask 326944
    %46 = vst.msk [vmem:[#allocation0] sm:$0x1] %vm45, %v44
    %s47 = scalar_lea.vmem %s0, 8
    %v48 = vld [vmem:[%s47] sm:$0x1]
    %49 = vrot.lane.b32.xlu0 %v48, 32
    %v50 = vpop.permute.xlu0 %49
    %vm51 = vcmask 294144
    %52 = vst.msk [vmem:[#allocation0] sm:$0x1] %vm51, %v50
    %s53 = scalar_lea.vmem %s0, 7
    %v54 = vld [vmem:[%s53] sm:$0x1]
    %55 = vrot.lane.b32.xlu0 %v54, 28
    %v56 = vpop.permute.xlu0 %55
    %vm57 = vcmask 261344
    %58 = vst.msk [vmem:[#allocation0] sm:$0x1] %vm57, %v56
    %s59 = scalar_lea.vmem %s0, 6
    %v60 = vld [vmem:[%s59] sm:$0x1]
    %61 = vrot.lane.b32.xlu0 %v60, 24
    %v62 = vpop.permute.xlu0 %61
    %vm63 = vcmask 228544
    %64 = vst.msk [vmem:[#allocation0] sm:$0x1] %vm63, %v62
    %s65 = scalar_lea.vmem %s0, 5
    %v66 = vld [vmem:[%s65] sm:$0x1]
    %67 = vrot.lane.b32.xlu0 %v66, 20
    %v68 = vpop.permute.xlu0 %67
    %vm69 = vcmask 195744
    %70 = vst.msk [vmem:[#allocation0] sm:$0x1] %vm69, %v68
    %s71 = scalar_lea.vmem %s0, 4
    %v72 = vld [vmem:[%s71] sm:$0x1]
    %73 = vrot.lane.b32.xlu0 %v72, 16
    %v74 = vpop.permute.xlu0 %73
    %vm75 = vcmask 162944
    %76 = vst.msk [vmem:[#allocation0] sm:$0x1] %vm75, %v74
    %s77 = scalar_lea.vmem %s0, 3
    %v78 = vld [vmem:[%s77] sm:$0x1]
    %79 = vrot.lane.b32.xlu0 %v78, 12
    %v80 = vpop.permute.xlu0 %79
    %vm81 = vcmask 130144
    %82 = vst.msk [vmem:[#allocation0] sm:$0x1] %vm81, %v80
    %s83 = scalar_lea.vmem %s0, 2
    %v84 = vld [vmem:[%s83] sm:$0x1]
    %85 = vrot.lane.b32.xlu0 %v84, 8
    %v86 = vpop.permute.xlu0 %85
    %vm87 = vcmask 97344
    %88 = vst.msk [vmem:[#allocation0] sm:$0x1] %vm87, %v86
    %s89 = scalar_lea.vmem %s0, 1
    %v90 = vld [vmem:[%s89] sm:$0x1]
    %91 = vrot.lane.b32.xlu0 %v90, 4
    %v92 = vpop.permute.xlu0 %91
    %vm93 = vcmask 64544
    %94 = vst.msk [vmem:[#allocation0] sm:$0x1] %vm93, %v92
    %s96 = sshllo.u32 0, 1
    %v98 = vld [vmem:[#allocation0] sm:%s96]
    %s99 = sshllo.u32 0, 1
    %100 = vst [vmem:[%s1] sm:%s99] %v98

// kernel: _lambda_.5
$region0: #{_lambda_.5}
  #allocation0 [shape = 'u32[]', space=smem, size = 0x4, offset = 0x4, fixed_abs, tag = 'smem constant byte address 0x4 - core index']
  #allocation1 [shape = 'u32[144,128]{1,0:T(1,128)}', space=vmem, size = 0x12000, scoped, tag = 'internal scratch']
  %s0 = inlined_call_operand.vmem [shape: bf16[32,64], index: 0, kind: input, shape index: {}]
  %s1 = inlined_call_operand.vmem [shape: f32[1,64], index: 1, kind: input, shape index: {}]
  %s2 = inlined_call_operand.vmem [shape: f32[1,64], index: 2, kind: input, shape index: {}]
  %s3 = inlined_call_operand.vmem [shape: f32[32,64], index: 3, kind: output, shape index: {}]
  %s4 = sld [smem:[#allocation0]]
  $region22: #{_lambda_.5} parent=0
    _
  %s6 = ssub.s32 1, %s4
  %s7 = scalar_select 0, %s6, %s4
  // Predicated region
  $region2: #{_lambda_.5} parent=0 // pred_check
    _
  $region3: #{_lambda_.5} parent=0 // pred_check_branch
    %9 = sbr.rel (0) target = $region5
  $region4: #{_lambda_.5} parent=0 // pred_region
    _
  $region5: #{_lambda_.5} parent=0 // pred_fallthru
    _
  // Predicated region
  $region6: #{_lambda_.5} parent=0 // pred_check
    _
  $region7: #{_lambda_.5} parent=0 // pred_check_branch
    %11 = sbr.rel (0) target = $region9
  $region8: #{_lambda_.5} parent=0 // pred_region
    _
  $region9: #{_lambda_.5} parent=0 // pred_fallthru
    _
  // Predicated region
  $region10: #{_lambda_.5} parent=0 // pred_check
    _
  $region11: #{_lambda_.5} parent=0 // pred_check_branch
    %13 = sbr.rel (0) target = $region13
  $region12: #{_lambda_.5} parent=0 // pred_region
    _
  $region13: #{_lambda_.5} parent=0 // pred_fallthru
    _
  %v14 = vld [vmem:[%s0] sm:$0xf]
  %v15 = vld [vmem:[%s0 + $0x4] sm:$0xf]
  %v16 = vld [vmem:[%s0 + $0x8] sm:$0xf]
  %v17 = vld [vmem:[%s0 + $0xc] sm:$0xf]
  %v18 = vunpack.c.l.bf16 %v14
  %v19 = vunpack.c.l.bf16 %v15
  %v20 = vunpack.c.l.bf16 %v16
  %v21 = vunpack.c.l.bf16 %v17
  %v22 = vld [vmem:[%s1] sm:$0x1]
  %v24 = vlaneseq
  %v25 = vshrl.u32 %v24, 7
  %v26 = vsub.s32 0, %v25
  %v27 = vrot.slane %v22, %v26
  %v29 = vmul.f32 %v18, %v27
  %v30 = vmul.f32 %v19, %v27
  %v31 = vmul.f32 %v20, %v27
  %v32 = vmul.f32 %v21, %v27
  %v33 = vld [vmem:[%s2] sm:$0x1]
  %v35 = vlaneseq
  %v36 = vshrl.u32 %v35, 7
  %v37 = vsub.s32 0, %v36
  %v38 = vrot.slane %v33, %v37
  %v40 = vadd.f32 %v29, %v38
  %v41 = vadd.f32 %v30, %v38
  %v42 = vadd.f32 %v31, %v38
  %v43 = vadd.f32 %v32, %v38
  %v44 = vmax.f32 %v40, 0.0
  %v45 = vmax.f32 %v41, 0.0
  %v46 = vmax.f32 %v42, 0.0
  %v47 = vmax.f32 %v43, 0.0
  %vm48 = vcmask 523264
  %49 = vst.msk [vmem:[%s3] sm:$0xff] %vm48, %v44
  %50 = vst.msk [vmem:[%s3 + $0x8] sm:$0xff] %vm48, %v45
  %51 = vst.msk [vmem:[%s3 + $0x10] sm:$0xff] %vm48, %v46
  %52 = vst.msk [vmem:[%s3 + $0x18] sm:$0xff] %vm48, %v47
  // Predicated region
  $region14: #{_lambda_.5} parent=0 // pred_check
    _
  $region15: #{_lambda_.5} parent=0 // pred_check_branch
    %54 = sbr.rel (0) target = $region17
  $region16: #{_lambda_.5} parent=0 // pred_region
    _
  $region17: #{_lambda_.5} parent=0 // pred_fallthru
    _
  // Predicated region
  $region18: #{_lambda_.5} parent=0 // pred_check
    _
  $region19: #{_lambda_.5} parent=0 // pred_check_branch
    %56 = sbr.rel (0) target = $region21
  $region20: #{_lambda_.5} parent=0 // pred_region
    _
  $region21: #{_lambda_.5} parent=0 // pred_fallthru
    _

// kernel: _lambda_.4
$region0: #{_lambda_.4}
  #allocation0 [shape = 'u32[]', space=smem, size = 0x4, offset = 0x4, fixed_abs, tag = 'smem constant byte address 0x4 - core index']
  #allocation1 [shape = 'u32[144,128]{1,0:T(1,128)}', space=vmem, size = 0x12000, scoped, tag = 'internal scratch']
  %s0 = inlined_call_operand.vmem [shape: bf16[2,16,16,4], index: 0, kind: input, shape index: {}, may-alias: {0,1,2}]
  %s1 = inlined_call_operand.vmem [shape: bf16[2,16,16,4], index: 1, kind: input, shape index: {}, may-alias: {0,1,2}]
  %s2 = inlined_call_operand.vmem [shape: bf16[2,16,16,4], index: 2, kind: input, shape index: {}, may-alias: {0,1,2}]
  %s3 = inlined_call_operand.vmem [shape: f32[1,4], index: 3, kind: input, shape index: {}]
  %s4 = inlined_call_operand.vmem [shape: f32[1,4], index: 4, kind: input, shape index: {}]
  %s5 = inlined_call_operand.vmem [shape: bf16[36,4], index: 5, kind: input, shape index: {}]
  %s6 = inlined_call_operand.vmem [shape: bf16[2,16,16,4], index: 6, kind: output, shape index: {0}]
  %s7 = inlined_call_operand.vmem [shape: f32[2,2,2,4], index: 7, kind: output, shape index: {1}]
  %8 = xla_tuple %s6, %s7
  %s9 = sld [smem:[#allocation0]]
  $region65: #{_lambda_.4} parent=0
    _
  %s11 = ssub.s32 1, %s9
  %s12 = scalar_select 0, %s11, %s9
  loop: start=0, step=1, limit=6
  $region2: #{_lambda_.4} parent=0 // loop_pre_header
    _
  $region3: #{_lambda_.4} parent=0 // loop_header
    %s14 = sphi 0, %s18
    %p15 = scmp.ge.s32.totalorder %s14, 6
    %s21 = sphi 0, %s33
    %s22 = sphi 0, %s29
    %s23 = sphi 0, %s21
    %s24 = sphi 0, %s22
    %s25 = sphi 0, %s23
    %s26 = sphi 0, %s24
    %s38 = sphi 0, %s40
    %s41 = sphi 0, %s38
    %s42 = sphi 0, %s41
    %s58 = sphi 0, %s42
    %s74 = sphi 0, %s76
    %s77 = sphi 0, %s74
    %s78 = sphi 0, %s77
    %s94 = sphi 0, %s78
    %s110 = sphi 0, %s112
    %s113 = sphi 0, %s110
    %s114 = sphi 0, %s113
    %s130 = sphi 0, %s114
    %s134 = sphi 0, %s134
    %s136 = sphi 0, %s134
    %s137 = sphi 0, %s136
    %s151 = sphi 0, %s137
    %s155 = sphi 0, %s155
    %s157 = sphi 0, %s155
    %s158 = sphi 0, %s157
    %s172 = sphi 0, %s158
    %s176 = sphi 0, %s176
    %s178 = sphi 0, %s176
    %s179 = sphi 0, %s178
    %s193 = sphi 0, %s179
    %s201 = sphi 0, %s203
    %s204 = sphi 0, %s201
    %s205 = sphi 0, %s204
    %s221 = sphi 0, %s205
    %s229 = sphi 0, %s231
    %s232 = sphi 0, %s229
    %s233 = sphi 0, %s232
    %s249 = sphi 0, %s233
  $region4: #{_lambda_.4} parent=0 // loop_header_branch
    %17 = sbr.rel (%p15) target = $region8
  $region5: #{_lambda_.4} parent=0 // loop_body
    %s19 = ssub.s32 %s14, 1
    %s20 = ssub.s32 %s14, 2
    %s27 = sadd.s32 1, %s22
    %p28 = scmp.ge.s32.totalorder %s27, 2
    %s29 = scalar_select %p28, 0, %s27
    %s30 = sadd.s32 1, %s21
    %s31 = scalar_select %p28, %s30, %s21
    %p32 = scmp.ge.s32.totalorder %s31, 2
    %s33 = scalar_select %p32, 0, %s31
    %s34 = ssub.s32 %s21, %s33
    %s35 = ssub.s32 %s22, %s29
    %s36 = sor.u32 %s34, %s35
    %p37 = scmp.eq.s32.totalorder %s36, 0
    %s39 = sadd.s32 %s38, 1
    %s40 = scalar_select %p37, %s38, %s39
    %p43 = pneg %p37
    %p44 = scmp.eq.s32.totalorder %s14, 3
    %p45 = por %p43, %p44
    %p46 = scmp.ne.s32.totalorder %s38, %s41
    %p47 = scmp.eq.s32.totalorder %s14, 0
    %p48 = por %p46, %p47
    %p49 = scmp.ne.s32.totalorder %s38, %s41
    %p50 = scmp.eq.s32.totalorder %s19, 3
    %p51 = por %p49, %p50
    %p52 = scmp.ne.s32.totalorder %s41, %s42
    %p53 = scmp.eq.s32.totalorder %s19, 0
    %p54 = por %p52, %p53
    %p55 = scmp.ne.s32.totalorder %s41, %s42
    %p56 = scmp.eq.s32.totalorder %s20, 3
    %p57 = por %p55, %p56
    %p59 = scmp.ne.s32.totalorder %s42, %s58
    %p60 = scmp.eq.s32.totalorder %s20, 0
    %p61 = por %p59, %p60
    %s62 = smul.u32 %s22, 8
    %s63 = ssub.s32 %s62, 1
    %p64 = scmp.gt.s32.totalorder %s63, 0
    %s65 = scalar_select %p64, %s63, 0
    %s66 = smul.u32 %s29, 8
    %s67 = ssub.s32 %s66, 1
    %p68 = scmp.gt.s32.totalorder %s67, 0
    %s69 = scalar_select %p68, %s67, 0
    %s70 = ssub.s32 %s21, %s33
    %s71 = ssub.s32 %s65, %s69
    %s72 = sor.u32 %s70, %s71
    %p73 = scmp.eq.s32.totalorder %s72, 0
    %s75 = sadd.s32 %s74, 1
    %s76 = scalar_select %p73, %s74, %s75
    %p79 = pneg %p73
    %p80 = scmp.eq.s32.totalorder %s14, 3
    %p81 = por %p79, %p80
    %p82 = scmp.ne.s32.totalorder %s74, %s77
    %p83 = scmp.eq.s32.totalorder %s14, 0
    %p84 = por %p82, %p83
    %p85 = scmp.ne.s32.totalorder %s74, %s77
    %p86 = scmp.eq.s32.totalorder %s19, 3
    %p87 = por %p85, %p86
    %p88 = scmp.ne.s32.totalorder %s77, %s78
    %p89 = scmp.eq.s32.totalorder %s19, 0
    %p90 = por %p88, %p89
    %p91 = scmp.ne.s32.totalorder %s77, %s78
    %p92 = scmp.eq.s32.totalorder %s20, 3
    %p93 = por %p91, %p92
    %p95 = scmp.ne.s32.totalorder %s78, %s94
    %p96 = scmp.eq.s32.totalorder %s20, 0
    %p97 = por %p95, %p96
    %s98 = smul.u32 %s22, 8
    %s99 = sadd.s32 %s98, 8
    %p100 = scmp.lt.s32.totalorder %s99, 15
    %s101 = scalar_select %p100, %s99, 15
    %s102 = smul.u32 %s29, 8
    %s103 = sadd.s32 %s102, 8
    %p104 = scmp.lt.s32.totalorder %s103, 15
    %s105 = scalar_select %p104, %s103, 15
    %s106 = ssub.s32 %s21, %s33
    %s107 = ssub.s32 %s101, %s105
    %s108 = sor.u32 %s106, %s107
    %p109 = scmp.eq.s32.totalorder %s108, 0
    %s111 = sadd.s32 %s110, 1
    %s112 = scalar_select %p109, %s110, %s111
    %p115 = pneg %p109
    %p116 = scmp.eq.s32.totalorder %s14, 3
    %p117 = por %p115, %p116
    %p118 = scmp.ne.s32.totalorder %s110, %s113
    %p119 = scmp.eq.s32.totalorder %s14, 0
    %p120 = por %p118, %p119
    %p121 = scmp.ne.s32.totalorder %s110, %s113
    %p122 = scmp.eq.s32.totalorder %s19, 3
    %p123 = por %p121, %p122
    %p124 = scmp.ne.s32.totalorder %s113, %s114
    %p125 = scmp.eq.s32.totalorder %s19, 0
    %p126 = por %p124, %p125
    %p127 = scmp.ne.s32.totalorder %s113, %s114
    %p128 = scmp.eq.s32.totalorder %s20, 3
    %p129 = por %p127, %p128
    %p131 = scmp.ne.s32.totalorder %s114, %s130
    %p132 = scmp.eq.s32.totalorder %s20, 0
    %p133 = por %p131, %p132
    %s135 = sadd.s32 %s134, 1
    %p138 = scmp.eq.s32.totalorder %s14, 3
    %p139 = scmp.ne.s32.totalorder %s134, %s136
    %p140 = scmp.eq.s32.totalorder %s14, 0
    %p141 = por %p139, %p140
    %p142 = scmp.ne.s32.totalorder %s134, %s136
    %p143 = scmp.eq.s32.totalorder %s19, 3
    %p144 = por %p142, %p143
    %p145 = scmp.ne.s32.totalorder %s136, %s137
    %p146 = scmp.eq.s32.totalorder %s19, 0
    %p147 = por %p145, %p146
    %p148 = scmp.ne.s32.totalorder %s136, %s137
    %p149 = scmp.eq.s32.totalorder %s20, 3
    %p150 = por %p148, %p149
    %p152 = scmp.ne.s32.totalorder %s137, %s151
    %p153 = scmp.eq.s32.totalorder %s20, 0
    %p154 = por %p152, %p153
    %s156 = sadd.s32 %s155, 1
    %p159 = scmp.eq.s32.totalorder %s14, 3
    %p160 = scmp.ne.s32.totalorder %s155, %s157
    %p161 = scmp.eq.s32.totalorder %s14, 0
    %p162 = por %p160, %p161
    %p163 = scmp.ne.s32.totalorder %s155, %s157
    %p164 = scmp.eq.s32.totalorder %s19, 3
    %p165 = por %p163, %p164
    %p166 = scmp.ne.s32.totalorder %s157, %s158
    %p167 = scmp.eq.s32.totalorder %s19, 0
    %p168 = por %p166, %p167
    %p169 = scmp.ne.s32.totalorder %s157, %s158
    %p170 = scmp.eq.s32.totalorder %s20, 3
    %p171 = por %p169, %p170
    %p173 = scmp.ne.s32.totalorder %s158, %s172
    %p174 = scmp.eq.s32.totalorder %s20, 0
    %p175 = por %p173, %p174
    %s177 = sadd.s32 %s176, 1
    %p180 = scmp.eq.s32.totalorder %s14, 3
    %p181 = scmp.ne.s32.totalorder %s176, %s178
    %p182 = scmp.eq.s32.totalorder %s14, 0
    %p183 = por %p181, %p182
    %p184 = scmp.ne.s32.totalorder %s176, %s178
    %p185 = scmp.eq.s32.totalorder %s19, 3
    %p186 = por %p184, %p185
    %p187 = scmp.ne.s32.totalorder %s178, %s179
    %p188 = scmp.eq.s32.totalorder %s19, 0
    %p189 = por %p187, %p188
    %p190 = scmp.ne.s32.totalorder %s178, %s179
    %p191 = scmp.eq.s32.totalorder %s20, 3
    %p192 = por %p190, %p191
    %p194 = scmp.ne.s32.totalorder %s179, %s193
    %p195 = scmp.eq.s32.totalorder %s20, 0
    %p196 = por %p194, %p195
    %s197 = ssub.s32 %s21, %s33
    %s198 = ssub.s32 %s22, %s29
    %s199 = sor.u32 %s197, %s198
    %p200 = scmp.eq.s32.totalorder %s199, 0
    %s202 = sadd.s32 %s201, 1
    %s203 = scalar_select %p200, %s201, %s202
    %p206 = pneg %p200
    %p207 = scmp.eq.s32.totalorder %s14, 3
    %p208 = por %p206, %p207
    %p209 = scmp.ne.s32.totalorder %s201, %s204
    %p210 = scmp.eq.s32.totalorder %s14, 0
    %p211 = por %p209, %p210
    %p212 = scmp.ne.s32.totalorder %s201, %s204
    %p213 = scmp.eq.s32.totalorder %s19, 3
    %p214 = por %p212, %p213
    %p215 = scmp.ne.s32.totalorder %s204, %s205
    %p216 = scmp.eq.s32.totalorder %s19, 0
    %p217 = por %p215, %p216
    %p218 = scmp.ne.s32.totalorder %s204, %s205
    %p219 = scmp.eq.s32.totalorder %s20, 3
    %p220 = por %p218, %p219
    %p222 = scmp.ne.s32.totalorder %s205, %s221
    %p223 = scmp.eq.s32.totalorder %s20, 0
    %p224 = por %p222, %p223
    %s225 = ssub.s32 %s21, %s33
    %s226 = ssub.s32 %s22, %s29
    %s227 = sor.u32 %s225, %s226
    %p228 = scmp.eq.s32.totalorder %s227, 0
    %s230 = sadd.s32 %s229, 1
    %s231 = scalar_select %p228, %s229, %s230
    %p234 = pneg %p228
    %p235 = scmp.eq.s32.totalorder %s14, 3
    %p236 = por %p234, %p235
    %p237 = scmp.ne.s32.totalorder %s229, %s232
    %p238 = scmp.eq.s32.totalorder %s14, 0
    %p239 = por %p237, %p238
    %p240 = scmp.ne.s32.totalorder %s229, %s232
    %p241 = scmp.eq.s32.totalorder %s19, 3
    %p242 = por %p240, %p241
    %p243 = scmp.ne.s32.totalorder %s232, %s233
    %p244 = scmp.eq.s32.totalorder %s19, 0
    %p245 = por %p243, %p244
    %p246 = scmp.ne.s32.totalorder %s232, %s233
    %p247 = scmp.eq.s32.totalorder %s20, 3
    %p248 = por %p246, %p247
    %p250 = scmp.ne.s32.totalorder %s233, %s249
    %p251 = scmp.eq.s32.totalorder %s20, 0
    %p252 = por %p250, %p251
    %p253 = scmp.le.s32.totalorder 1, %s14
    %p254 = scmp.lt.s32.totalorder %s14, 5
    %p255 = pnand %p253, %p254
    %p256 = pneg %p255
    // Predicated region
    $region9: #{_lambda_.4} parent=5 // pred_check
      _
    $region10: #{_lambda_.4} parent=5 // pred_check_branch
      %258 = sbr.rel (%p255) target = $region12
    $region11: #{_lambda_.4} parent=5 // pred_region
      %s259 = ssub.s32 %s14, 1
      // Predicated region
      $region13: #{_lambda_.4} parent=11 // pred_check
        %p260 = pneg %p147
      $region14: #{_lambda_.4} parent=11 // pred_check_branch
        %262 = sbr.rel (%p260) target = $region16
      $region15: #{_lambda_.4} parent=11 // pred_region
        _
      $region16: #{_lambda_.4} parent=11 // pred_fallthru
        _
      // Predicated region
      $region17: #{_lambda_.4} parent=11 // pred_check
        %p263 = pneg %p168
      $region18: #{_lambda_.4} parent=11 // pred_check_branch
        %265 = sbr.rel (%p263) target = $region20
      $region19: #{_lambda_.4} parent=11 // pred_region
        _
      $region20: #{_lambda_.4} parent=11 // pred_fallthru
        _
      // Predicated region
      $region21: #{_lambda_.4} parent=11 // pred_check
        %p266 = pneg %p189
      $region22: #{_lambda_.4} parent=11 // pred_check_branch
        %268 = sbr.rel (%p266) target = $region24
      $region23: #{_lambda_.4} parent=11 // pred_region
        _
      $region24: #{_lambda_.4} parent=11 // pred_fallthru
        _
    $region12: #{_lambda_.4} parent=5 // pred_fallthru
      _
    %p269 = scmp.lt.s32.totalorder %s14, 4
    // Predicated region
    $region25: #{_lambda_.4} parent=5 // pred_check
      %p270 = pneg %p269
    $region26: #{_lambda_.4} parent=5 // pred_check_branch
      %272 = sbr.rel (%p270) target = $region28
    $region27: #{_lambda_.4} parent=5 // pred_region
      // Predicated region
      $region29: #{_lambda_.4} parent=27 // pred_check
        %p273 = pneg %p48
      $region30: #{_lambda_.4} parent=27 // pred_check_branch
        %275 = sbr.rel (%p273) target = $region32
      $region31: #{_lambda_.4} parent=27 // pred_region
        %s276 = smul.u32 8, %s22
        %p277 = scmp.lt.s32.totalorder %s21, 1
        %s278 = scalar_select %p277, %s21, 1
        %p279 = scmp.lt.s32.totalorder %s276, 15
        %s280 = scalar_select %p279, %s276, 15
        %s281 = smul.addr %s280, 2
        %s282 = smul.addr %s278, 32
        %s283 = sadd.s32 %s281, %s282
        %s284 = smul.addr %s283, 4
        %s285 = scalar_lea.vmem %s0, %s284
        %s286 = smul.u32 8, %s22
      $region32: #{_lambda_.4} parent=27 // pred_fallthru
        _
      // Predicated region
      $region33: #{_lambda_.4} parent=27 // pred_check
        %p287 = pneg %p84
      $region34: #{_lambda_.4} parent=27 // pred_check_branch
        %289 = sbr.rel (%p287) target = $region36
      $region35: #{_lambda_.4} parent=27 // pred_region
        %s290 = smul.u32 %s22, 8
        %s291 = ssub.s32 %s290, 1
        %p292 = scmp.gt.s32.totalorder %s291, 0
        %s293 = scalar_select %p292, %s291, 0
        %p294 = scmp.lt.s32.totalorder %s21, 1
        %s295 = scalar_select %p294, %s21, 1
        %p296 = scmp.lt.s32.totalorder %s293, 15
        %s297 = scalar_select %p296, %s293, 15
        %s298 = smul.addr %s297, 2
        %s299 = smul.addr %s295, 32
        %s300 = sadd.s32 %s298, %s299
        %s301 = smul.addr %s300, 4
        %s302 = scalar_lea.vmem %s1, %s301
        %s303 = smul.u32 %s22, 8
        %s304 = ssub.s32 %s303, 1
        %p305 = scmp.gt.s32.totalorder %s304, 0
        %s306 = scalar_select %p305, %s304, 0
      $region36: #{_lambda_.4} parent=27 // pred_fallthru
        _
      // Predicated region
      $region37: #{_lambda_.4} parent=27 // pred_check
        %p307 = pneg %p120
      $region38: #{_lambda_.4} parent=27 // pred_check_branch
        %309 = sbr.rel (%p307) target = $region40
      $region39: #{_lambda_.4} parent=27 // pred_region
        %s310 = smul.u32 %s22, 8
        %s311 = sadd.s32 %s310, 8
        %p312 = scmp.lt.s32.totalorder %s311, 15
        %s313 = scalar_select %p312, %s311, 15
        %p314 = scmp.lt.s32.totalorder %s21, 1
        %s315 = scalar_select %p314, %s21, 1
        %p316 = scmp.lt.s32.totalorder %s313, 15
        %s317 = scalar_select %p316, %s313, 15
        %s318 = smul.addr %s317, 2
        %s319 = smul.addr %s315, 32
        %s320 = sadd.s32 %s318, %s319
        %s321 = smul.addr %s320, 4
        %s322 = scalar_lea.vmem %s2, %s321
        %s323 = smul.u32 %s22, 8
        %s324 = sadd.s32 %s323, 8
        %p325 = scmp.lt.s32.totalorder %s324, 15
        %s326 = scalar_select %p325, %s324, 15
      $region40: #{_lambda_.4} parent=27 // pred_fallthru
        _
    $region28: #{_lambda_.4} parent=5 // pred_fallthru
      _
    %p327 = scmp.le.s32.totalorder 1, %s14
    %p328 = scmp.lt.s32.totalorder %s14, 5
    %p329 = pnand %p327, %p328
    %p330 = pneg %p329
    // Predicated region
    $region41: #{_lambda_.4} parent=5 // pred_check
      _
    $region42: #{_lambda_.4} parent=5 // pred_check_branch
      %332 = sbr.rel (%p329) target = $region44
    $region43: #{_lambda_.4} parent=5 // pred_region
      %s333 = ssub.s32 %s14, 1
      %s334 = smul.u32 8, %s24
      %p335 = scmp.lt.s32.totalorder %s23, 1
      %s336 = scalar_select %p335, %s23, 1
      %p337 = scmp.lt.s32.totalorder %s334, 15
      %s338 = scalar_select %p337, %s334, 15
      %s339 = smul.addr %s338, 2
      %s340 = smul.addr %s336, 32
      %s341 = sadd.s32 %s339, %s340
      %s342 = smul.addr %s341, 4
      %s343 = scalar_lea.vmem %s0, %s342
      %p344 = pneg %p54
      %p345 = pneg %p51
      %s346 = smul.u32 %s24, 8
      %s347 = ssub.s32 %s346, 1
      %p348 = scmp.gt.s32.totalorder %s347, 0
      %s349 = scalar_select %p348, %s347, 0
      %p350 = scmp.lt.s32.totalorder %s23, 1
      %s351 = scalar_select %p350, %s23, 1
      %p352 = scmp.lt.s32.totalorder %s349, 15
      %s353 = scalar_select %p352, %s349, 15
      %s354 = smul.addr %s353, 2
      %s355 = smul.addr %s351, 32
      %s356 = sadd.s32 %s354, %s355
      %s357 = smul.addr %s356, 4
      %s358 = scalar_lea.vmem %s1, %s357
      %p359 = pneg %p90
      %p360 = pneg %p87
      %s361 = smul.u32 %s24, 8
      %s362 = sadd.s32 %s361, 8
      %p363 = scmp.lt.s32.totalorder %s362, 15
      %s364 = scalar_select %p363, %s362, 15
      %p365 = scmp.lt.s32.totalorder %s23, 1
      %s366 = scalar_select %p365, %s23, 1
      %p367 = scmp.lt.s32.totalorder %s364, 15
      %s368 = scalar_select %p367, %s364, 15
      %s369 = smul.addr %s368, 2
      %s370 = smul.addr %s366, 32
      %s371 = sadd.s32 %s369, %s370
      %s372 = smul.addr %s371, 4
      %s373 = scalar_lea.vmem %s2, %s372
      %p374 = pneg %p126
      %p375 = pneg %p123
      %p376 = pneg %p147
      %p377 = pneg %p144
      %p378 = pneg %p168
      %p379 = pneg %p165
      %p380 = pneg %p189
      %p381 = pneg %p186
      %p382 = pneg %p217
      %p383 = pneg %p214
      %s384 = smul.u32 8, %s24
      %p385 = scmp.lt.s32.totalorder %s23, 1
      %s386 = scalar_select %p385, %s23, 1
      %p387 = scmp.lt.s32.totalorder %s384, 15
      %s388 = scalar_select %p387, %s384, 15
      %s389 = smul.addr %s388, 2
      %s390 = smul.addr %s386, 32
      %s391 = sadd.s32 %s389, %s390
      %s392 = smul.addr %s391, 4
      %s393 = scalar_lea.vmem %s6, %s392
      %p394 = pneg %p245
      %p395 = pneg %p242
      %p396 = scmp.lt.s32.totalorder %s23, 1
      %s397 = scalar_select %p396, %s23, 1
      %p398 = scmp.lt.s32.totalorder %s24, 1
      %s399 = scalar_select %p398, %s24, 1
      %s400 = smul.addr %s397, 2
      %s401 = sadd.s32 %s399, %s400
      %s402 = smul.addr %s401, 2
      %s403 = scalar_lea.vmem %s7, %s402
      %s404 = smul.u32 8, %s24
      %p405 = scmp.lt.s32.totalorder %s23, 1
      %s406 = scalar_select %p405, %s23, 1
      %p407 = scmp.lt.s32.totalorder %s404, 15
      %s408 = scalar_select %p407, %s404, 15
      %s409 = smul.addr %s408, 2
      %s410 = smul.addr %s406, 32
      %s411 = sadd.s32 %s409, %s410
      %s412 = smul.addr %s411, 4
      %s413 = scalar_lea.vmem %s0, %s412
      %s414 = smul.u32 8, %s24
      %s415 = smul.u32 %s24, 8
      %s416 = ssub.s32 %s415, 1
      %p417 = scmp.gt.s32.totalorder %s416, 0
      %s418 = scalar_select %p417, %s416, 0
      %p419 = scmp.lt.s32.totalorder %s23, 1
      %s420 = scalar_select %p419, %s23, 1
      %p421 = scmp.lt.s32.totalorder %s418, 15
      %s422 = scalar_select %p421, %s418, 15
      %s423 = smul.addr %s422, 2
      %s424 = smul.addr %s420, 32
      %s425 = sadd.s32 %s423, %s424
      %s426 = smul.addr %s425, 4
      %s427 = scalar_lea.vmem %s1, %s426
      %s428 = smul.u32 %s24, 8
      %s429 = ssub.s32 %s428, 1
      %p430 = scmp.gt.s32.totalorder %s429, 0
      %s431 = scalar_select %p430, %s429, 0
      %s432 = smul.u32 %s24, 8
      %s433 = sadd.s32 %s432, 8
      %p434 = scmp.lt.s32.totalorder %s433, 15
      %s435 = scalar_select %p434, %s433, 15
      %p436 = scmp.lt.s32.totalorder %s23, 1
      %s437 = scalar_select %p436, %s23, 1
      %p438 = scmp.lt.s32.totalorder %s435, 15
      %s439 = scalar_select %p438, %s435, 15
      %s440 = smul.addr %s439, 2
      %s441 = smul.addr %s437, 32
      %s442 = sadd.s32 %s440, %s441
      %s443 = smul.addr %s442, 4
      %s444 = scalar_lea.vmem %s2, %s443
      %s445 = smul.u32 %s24, 8
      %s446 = sadd.s32 %s445, 8
      %p447 = scmp.lt.s32.totalorder %s446, 15
      %s448 = scalar_select %p447, %s446, 15
      %s449 = smul.u32 8, %s24
      %p450 = scmp.lt.s32.totalorder %s23, 1
      %s451 = scalar_select %p450, %s23, 1
      %p452 = scmp.lt.s32.totalorder %s449, 15
      %s453 = scalar_select %p452, %s449, 15
      %s454 = smul.addr %s453, 2
      %s455 = smul.addr %s451, 32
      %s456 = sadd.s32 %s454, %s455
      %s457 = smul.addr %s456, 4
      %s458 = scalar_lea.vmem %s6, %s457
      %s459 = smul.u32 8, %s24
      %p460 = scmp.lt.s32.totalorder %s23, 1
      %s461 = scalar_select %p460, %s23, 1
      %p462 = scmp.lt.s32.totalorder %s24, 1
      %s463 = scalar_select %p462, %s24, 1
      %s464 = smul.addr %s461, 2
      %s465 = sadd.s32 %s463, %s464
      %s466 = smul.addr %s465, 2
      %s467 = scalar_lea.vmem %s7, %s466
      %s469 = smul.u32 %s24, 8
      %s470 = ssub.s32 %s469, 1
      %v471 = vstv %s470
      %v472 = vadd.s32 %v471, 1
      %v473 = vadd.s32 %v471, 2
      %v474 = vadd.s32 %v471, 3
      %v475 = vadd.s32 %v471, 4
      %v476 = vadd.s32 %v471, 5
      %v477 = vadd.s32 %v471, 6
      %v478 = vadd.s32 %v471, 7
      %v479 = vadd.s32 %v471, 8
      %v480 = vadd.s32 %v471, 9
      %vm481 = vcmp.ge.s32.totalorder %v471, 0
      %vm482 = vcmp.ge.s32.totalorder %v472, 0
      %vm483 = vcmp.ge.s32.totalorder %v473, 0
      %vm484 = vcmp.ge.s32.totalorder %v474, 0
      %vm485 = vcmp.ge.s32.totalorder %v475, 0
      %vm486 = vcmp.ge.s32.totalorder %v476, 0
      %vm487 = vcmp.ge.s32.totalorder %v477, 0
      %vm488 = vcmp.ge.s32.totalorder %v478, 0
      %vm489 = vcmp.ge.s32.totalorder %v479, 0
      %vm490 = vcmp.ge.s32.totalorder %v480, 0
      %vm491 = vcmp.lt.s32.totalorder %v471, 14
      %vm492 = vcmp.lt.s32.totalorder %v472, 14
      %vm493 = vcmp.lt.s32.totalorder %v473, 14
      %vm494 = vcmp.lt.s32.totalorder %v474, 14
      %vm495 = vcmp.lt.s32.totalorder %v475, 14
      %vm496 = vcmp.lt.s32.totalorder %v476, 14
      %vm497 = vcmp.lt.s32.totalorder %v477, 14
      %vm498 = vcmp.lt.s32.totalorder %v478, 14
      %vm499 = vcmp.lt.s32.totalorder %v479, 14
      %vm500 = vcmp.lt.s32.totalorder %v480, 14
      %vm501 = vmand %vm481, %vm491
      %vm502 = vmand %vm482, %vm492
      %vm503 = vmand %vm483, %vm493
      %vm504 = vmand %vm484, %vm494
      %vm505 = vmand %vm485, %vm495
      %vm506 = vmand %vm486, %vm496
      %vm507 = vmand %vm487, %vm497
      %vm508 = vmand %vm488, %vm498
      %vm509 = vmand %vm489, %vm499
      %vm510 = vmand %vm490, %vm500
      %v511 = vld [vmem:[%s413] sm:$0xf]
      %v512 = vld [vmem:[%s413 + $0x4] sm:$0xf]
      %v513 = vld [vmem:[%s413 + $0x8] sm:$0xf]
      %v514 = vld [vmem:[%s413 + $0xc] sm:$0xf]
      %v515 = vld [vmem:[%s413 + $0x10] sm:$0xf]
      %v516 = vld [vmem:[%s413 + $0x14] sm:$0xf]
      %v517 = vld [vmem:[%s413 + $0x18] sm:$0xf]
      %v518 = vld [vmem:[%s413 + $0x1c] sm:$0xf]
      %v519 = vld [vmem:[%s413 + $0x20] sm:$0xf]
      %v520 = vld [vmem:[%s413 + $0x24] sm:$0xf]
      %v521 = vld [vmem:[%s413 + $0x28] sm:$0xf]
      %v522 = vld [vmem:[%s413 + $0x2c] sm:$0xf]
      %v523 = vld [vmem:[%s413 + $0x30] sm:$0xf]
      %v524 = vld [vmem:[%s413 + $0x34] sm:$0xf]
      %v525 = vld [vmem:[%s413 + $0x38] sm:$0xf]
      %v526 = vld [vmem:[%s413 + $0x3c] sm:$0xf]
      %v527 = vld [vmem:[%s427] sm:$0xf]
      %v528 = vld [vmem:[%s427 + $0x4] sm:$0xf]
      %v529 = vld [vmem:[%s444] sm:$0xf]
      %v530 = vld [vmem:[%s444 + $0x4] sm:$0xf]
      %v531 = vld [vmem:[%s3] sm:$0x1]
      %v532 = vld [vmem:[%s4] sm:$0x1]
      %v533 = vunpack.c.l.bf16 %v527
      %v534 = vunpack.c.l.bf16 %v528
      %v535 = vunpack.c.l.bf16 %v511
      %v536 = vunpack.c.l.bf16 %v512
      %v537 = vunpack.c.l.bf16 %v513
      %v538 = vunpack.c.l.bf16 %v514
      %v539 = vunpack.c.l.bf16 %v515
      %v540 = vunpack.c.l.bf16 %v516
      %v541 = vunpack.c.l.bf16 %v517
      %v542 = vunpack.c.l.bf16 %v518
      %v543 = vunpack.c.l.bf16 %v519
      %v544 = vunpack.c.l.bf16 %v520
      %v545 = vunpack.c.l.bf16 %v521
      %v546 = vunpack.c.l.bf16 %v522
      %v547 = vunpack.c.l.bf16 %v523
      %v548 = vunpack.c.l.bf16 %v524
      %v549 = vunpack.c.l.bf16 %v525
      %v550 = vunpack.c.l.bf16 %v526
      %v551 = vunpack.c.l.bf16 %v529
      %v552 = vunpack.c.l.bf16 %v530
      %v554 = vlaneseq
      %v555 = vshrl.u32 %v554, 7
      %v556 = vsub.s32 0, %v555
      %v557 = vrot.slane %v531, %v556
      %v559 = vmul.f32 %v533, %v557
      %v560 = vmul.f32 %v534, %v557
      %v561 = vmul.f32 %v535, %v557
      %v562 = vmul.f32 %v536, %v557
      %v563 = vmul.f32 %v537, %v557
      %v564 = vmul.f32 %v538, %v557
      %v565 = vmul.f32 %v539, %v557
      %v566 = vmul.f32 %v540, %v557
      %v567 = vmul.f32 %v541, %v557
      %v568 = vmul.f32 %v542, %v557
      %v569 = vmul.f32 %v543, %v557
      %v570 = vmul.f32 %v544, %v557
      %v571 = vmul.f32 %v545, %v557
      %v572 = vmul.f32 %v546, %v557
      %v573 = vmul.f32 %v547, %v557
      %v574 = vmul.f32 %v548, %v557
      %v575 = vmul.f32 %v549, %v557
      %v576 = vmul.f32 %v550, %v557
      %v577 = vmul.f32 %v551, %v557
      %v578 = vmul.f32 %v552, %v557
      %v580 = vlaneseq
      %v581 = vshrl.u32 %v580, 7
      %v582 = vsub.s32 0, %v581
      %v583 = vrot.slane %v532, %v582
      %v585 = vadd.f32 %v559, %v583
      %v586 = vadd.f32 %v560, %v583
      %v587 = vadd.f32 %v561, %v583
      %v588 = vadd.f32 %v562, %v583
      %v589 = vadd.f32 %v563, %v583
      %v590 = vadd.f32 %v564, %v583
      %v591 = vadd.f32 %v565, %v583
      %v592 = vadd.f32 %v566, %v583
      %v593 = vadd.f32 %v567, %v583
      %v594 = vadd.f32 %v568, %v583
      %v595 = vadd.f32 %v569, %v583
      %v596 = vadd.f32 %v570, %v583
      %v597 = vadd.f32 %v571, %v583
      %v598 = vadd.f32 %v572, %v583
      %v599 = vadd.f32 %v573, %v583
      %v600 = vadd.f32 %v574, %v583
      %v601 = vadd.f32 %v575, %v583
      %v602 = vadd.f32 %v576, %v583
      %v603 = vadd.f32 %v577, %v583
      %v604 = vadd.f32 %v578, %v583
      %v605 = vmax.f32 %v585, 0.0
      %v606 = vmax.f32 %v586, 0.0
      %v607 = vmax.f32 %v587, 0.0
      %v608 = vmax.f32 %v588, 0.0
      %v609 = vmax.f32 %v589, 0.0
      %v610 = vmax.f32 %v590, 0.0
      %v611 = vmax.f32 %v591, 0.0
      %v612 = vmax.f32 %v592, 0.0
      %v613 = vmax.f32 %v593, 0.0
      %v614 = vmax.f32 %v594, 0.0
      %v615 = vmax.f32 %v595, 0.0
      %v616 = vmax.f32 %v596, 0.0
      %v617 = vmax.f32 %v597, 0.0
      %v618 = vmax.f32 %v598, 0.0
      %v619 = vmax.f32 %v599, 0.0
      %v620 = vmax.f32 %v600, 0.0
      %v621 = vmax.f32 %v601, 0.0
      %v622 = vmax.f32 %v602, 0.0
      %v623 = vmax.f32 %v603, 0.0
      %v624 = vmax.f32 %v604, 0.0
      %v625 = vsel %vm501, 1, 0
      %v626 = vsel %vm502, 1, 0
      %v627 = vsel %vm503, 1, 0
      %v628 = vsel %vm504, 1, 0
      %v629 = vsel %vm505, 1, 0
      %v630 = vsel %vm506, 1, 0
      %v631 = vsel %vm507, 1, 0
      %v632 = vsel %vm508, 1, 0
      %v633 = vsel %vm509, 1, 0
      %v634 = vsel %vm510, 1, 0
      %vm635 = vcmp.eq.s32.totalorder %v625, 1
      %vm636 = vcmp.eq.s32.totalorder %v626, 1
      %vm637 = vcmp.eq.s32.totalorder %v627, 1
      %vm638 = vcmp.eq.s32.totalorder %v628, 1
      %vm639 = vcmp.eq.s32.totalorder %v629, 1
      %vm640 = vcmp.eq.s32.totalorder %v630, 1
      %vm641 = vcmp.eq.s32.totalorder %v631, 1
      %vm642 = vcmp.eq.s32.totalorder %v632, 1
      %vm643 = vcmp.eq.s32.totalorder %v633, 1
      %vm644 = vcmp.eq.s32.totalorder %v634, 1
      %v645 = vsel %vm635, %v605, 0.0
      %v646 = vsel %vm635, %v606, 0.0
      %v647 = vsel %vm636, %v607, 0.0
      %v648 = vsel %vm636, %v608, 0.0
      %v649 = vsel %vm637, %v609, 0.0
      %v650 = vsel %vm637, %v610, 0.0
      %v651 = vsel %vm638, %v611, 0.0
      %v652 = vsel %vm638, %v612, 0.0
      %v653 = vsel %vm639, %v613, 0.0
      %v654 = vsel %vm639, %v614, 0.0
      %v655 = vsel %vm640, %v615, 0.0
      %v656 = vsel %vm640, %v616, 0.0
      %v657 = vsel %vm641, %v617, 0.0
      %v658 = vsel %vm641, %v618, 0.0
      %v659 = vsel %vm642, %v619, 0.0
      %v660 = vsel %vm642, %v620, 0.0
      %v661 = vsel %vm643, %v621, 0.0
      %v662 = vsel %vm643, %v622, 0.0
      %v663 = vsel %vm644, %v623, 0.0
      %v664 = vsel %vm644, %v624, 0.0
      %v665 = vpack.c.bf16 %v646, %v645
      %v666 = vpack.c.bf16 %v648, %v647
      %v667 = vpack.c.bf16 %v650, %v649
      %v668 = vpack.c.bf16 %v652, %v651
      %v669 = vpack.c.bf16 %v654, %v653
      %v670 = vpack.c.bf16 %v656, %v655
      %v671 = vpack.c.bf16 %v658, %v657
      %v672 = vpack.c.bf16 %v660, %v659
      %v673 = vpack.c.bf16 %v662, %v661
      %v674 = vpack.c.bf16 %v664, %v663
      %v676 = vshrl.u32 %v665, 16
      %v678 = vrot.slane %v676, 7
      %v679 = vshll.u32 %v665, 16
      %v681 = vor.u32 %v678, %v679
      %v683 = vshrl.u32 %v666, 16
      %v685 = vrot.slane %v683, 7
      %v686 = vshll.u32 %v666, 16
      %v688 = vor.u32 %v685, %v686
      %v690 = vshrl.u32 %v667, 16
      %v692 = vrot.slane %v690, 7
      %v693 = vshll.u32 %v667, 16
      %v695 = vor.u32 %v692, %v693
      %v697 = vshrl.u32 %v668, 16
      %v699 = vrot.slane %v697, 7
      %v700 = vshll.u32 %v668, 16
      %v702 = vor.u32 %v699, %v700
      %v704 = vshrl.u32 %v669, 16
      %v706 = vrot.slane %v704, 7
      %v707 = vshll.u32 %v669, 16
      %v709 = vor.u32 %v706, %v707
      %v711 = vshrl.u32 %v670, 16
      %v713 = vrot.slane %v711, 7
      %v714 = vshll.u32 %v670, 16
      %v716 = vor.u32 %v713, %v714
      %v718 = vshrl.u32 %v671, 16
      %v720 = vrot.slane %v718, 7
      %v721 = vshll.u32 %v671, 16
      %v723 = vor.u32 %v720, %v721
      %v725 = vshrl.u32 %v672, 16
      %v727 = vrot.slane %v725, 7
      %v728 = vshll.u32 %v672, 16
      %v730 = vor.u32 %v727, %v728
      %v732 = vshrl.u32 %v673, 16
      %v734 = vrot.slane %v732, 7
      %v735 = vshll.u32 %v673, 16
      %v737 = vor.u32 %v734, %v735
      %v739 = vshrl.u32 %v674, 16
      %v741 = vrot.slane %v739, 7
      %v742 = vshll.u32 %v674, 16
      %v744 = vor.u32 %v741, %v742
      %vm765 = vcmask 1040384
      %vm766 = vsmask.f32 256
      %vm767 = vmand %vm765, %vm766
      %v768 = vsel %vm767, 0, %v681
      %v769 = vsel %vm767, 0, %v688
      %v770 = vsel %vm767, 0, %v695
      %v771 = vsel %vm767, 0, %v702
      %v772 = vsel %vm767, 0, %v709
      %v773 = vsel %vm767, 0, %v716
      %v774 = vsel %vm767, 0, %v723
      %v775 = vsel %vm767, 0, %v730
      %v776 = vsel %vm767, 0, %v737
      %v777 = vsel %vm767, 0, %v744
      %v778 = vsel %vm767, %v678, 0
      %v779 = vsel %vm767, %v685, 0
      %v780 = vsel %vm767, %v692, 0
      %v781 = vsel %vm767, %v699, 0
      %v782 = vsel %vm767, %v706, 0
      %v783 = vsel %vm767, %v713, 0
      %v784 = vsel %vm767, %v720, 0
      %v785 = vsel %vm767, %v727, 0
      %v786 = vsel %vm767, %v734, 0
      %v787 = vsel %vm767, %v741, 0
      %vm788 = vsmask.f32 7424
      %v790 = vshrl.u32 %v768, 16
      %v792 = vshll.u32 %v768, 16
      %v794 = vrot.slane %v792, 1
      %v795 = vor.u32 %v790, %v794
      %v797 = vshll.u32 %v778, 16
      %v799 = vrot.slane %v797, 1
      %v800 = vsel %vm788, %v795, %v799
      %v802 = vshrl.u32 %v769, 16
      %v804 = vshll.u32 %v769, 16
      %v806 = vrot.slane %v804, 1
      %v807 = vor.u32 %v802, %v806
      %v809 = vshll.u32 %v779, 16
      %v811 = vrot.slane %v809, 1
      %v812 = vsel %vm788, %v807, %v811
      %v814 = vshrl.u32 %v770, 16
      %v816 = vshll.u32 %v770, 16
      %v818 = vrot.slane %v816, 1
      %v819 = vor.u32 %v814, %v818
      %v821 = vshll.u32 %v780, 16
      %v823 = vrot.slane %v821, 1
      %v824 = vsel %vm788, %v819, %v823
      %v826 = vshrl.u32 %v771, 16
      %v828 = vshll.u32 %v771, 16
      %v830 = vrot.slane %v828, 1
      %v831 = vor.u32 %v826, %v830
      %v833 = vshll.u32 %v781, 16
      %v835 = vrot.slane %v833, 1
      %v836 = vsel %vm788, %v831, %v835
      %v838 = vshrl.u32 %v772, 16
      %v840 = vshll.u32 %v772, 16
      %v842 = vrot.slane %v840, 1
      %v843 = vor.u32 %v838, %v842
      %v845 = vshll.u32 %v782, 16
      %v847 = vrot.slane %v845, 1
      %v848 = vsel %vm788, %v843, %v847
      %v850 = vshrl.u32 %v773, 16
      %v852 = vshll.u32 %v773, 16
      %v854 = vrot.slane %v852, 1
      %v855 = vor.u32 %v850, %v854
      %v857 = vshll.u32 %v783, 16
      %v859 = vrot.slane %v857, 1
      %v860 = vsel %vm788, %v855, %v859
      %v862 = vshrl.u32 %v774, 16
      %v864 = vshll.u32 %v774, 16
      %v866 = vrot.slane %v864, 1
      %v867 = vor.u32 %v862, %v866
      %v869 = vshll.u32 %v784, 16
      %v871 = vrot.slane %v869, 1
      %v872 = vsel %vm788, %v867, %v871
      %v874 = vshrl.u32 %v775, 16
      %v876 = vshll.u32 %v775, 16
      %v878 = vrot.slane %v876, 1
      %v879 = vor.u32 %v874, %v878
      %v881 = vshll.u32 %v785, 16
      %v883 = vrot.slane %v881, 1
      %v884 = vsel %vm788, %v879, %v883
      %vm901 = vcmask 1046528
      %v902 = vrot.slane %v768, 1
      %v903 = vrot.slane %v778, 1
      %v904 = vsel %vm901, %v902, %v903
      %v905 = vrot.slane %v769, 1
      %v906 = vrot.slane %v779, 1
      %v907 = vsel %vm901, %v905, %v906
      %v908 = vrot.slane %v770, 1
      %v909 = vrot.slane %v780, 1
      %v910 = vsel %vm901, %v908, %v909
      %v911 = vrot.slane %v771, 1
      %v912 = vrot.slane %v781, 1
      %v913 = vsel %vm901, %v911, %v912
      %v914 = vrot.slane %v772, 1
      %v915 = vrot.slane %v782, 1
      %v916 = vsel %vm901, %v914, %v915
      %v917 = vrot.slane %v773, 1
      %v918 = vrot.slane %v783, 1
      %v919 = vsel %vm901, %v917, %v918
      %v920 = vrot.slane %v774, 1
      %v921 = vrot.slane %v784, 1
      %v922 = vsel %vm901, %v920, %v921
      %v923 = vrot.slane %v775, 1
      %v924 = vrot.slane %v785, 1
      %v925 = vsel %vm901, %v923, %v924
      %v927 = vshrl.u32 %v776, 16
      %v929 = vshll.u32 %v776, 16
      %v931 = vrot.slane %v929, 1
      %v932 = vor.u32 %v927, %v931
      %v934 = vshll.u32 %v786, 16
      %v936 = vrot.slane %v934, 1
      %v937 = vsel %vm788, %v932, %v936
      %v940 = vrot.slane %v776, 1
      %v941 = vrot.slane %v786, 1
      %v942 = vsel %vm901, %v940, %v941
      %v944 = vshrl.u32 %v777, 16
      %v946 = vshll.u32 %v777, 16
      %v948 = vrot.slane %v946, 1
      %v949 = vor.u32 %v944, %v948
      %v951 = vshll.u32 %v787, 16
      %v953 = vrot.slane %v951, 1
      %v954 = vsel %vm788, %v949, %v953
      %v957 = vrot.slane %v777, 1
      %v958 = vrot.slane %v787, 1
      %v959 = vsel %vm901, %v957, %v958
      %960 = vrot.lane.b32.xlu0 %v800, 4
      %v961 = vpop.permute.xlu0 %960
      %962 = vrot.lane.b32.xlu0 %v812, 4
      %v963 = vpop.permute.xlu0 %962
      %964 = vrot.lane.b32.xlu0 %v824, 4
      %v965 = vpop.permute.xlu0 %964
      %966 = vrot.lane.b32.xlu0 %v836, 4
      %v967 = vpop.permute.xlu0 %966
      %968 = vrot.lane.b32.xlu0 %v848, 4
      %v969 = vpop.permute.xlu0 %968
      %970 = vrot.lane.b32.xlu0 %v860, 4
      %v971 = vpop.permute.xlu0 %970
      %972 = vrot.lane.b32.xlu0 %v872, 4
      %v973 = vpop.permute.xlu0 %972
      %974 = vrot.lane.b32.xlu0 %v884, 4
      %v975 = vpop.permute.xlu0 %974
      %976 = vrot.lane.b32.xlu0 %v904, 8
      %v977 = vpop.permute.xlu0 %976
      %978 = vrot.lane.b32.xlu0 %v907, 8
      %v979 = vpop.permute.xlu0 %978
      %980 = vrot.lane.b32.xlu0 %v910, 8
      %v981 = vpop.permute.xlu0 %980
      %982 = vrot.lane.b32.xlu0 %v913, 8
      %v983 = vpop.permute.xlu0 %982
      %984 = vrot.lane.b32.xlu0 %v916, 8
      %v985 = vpop.permute.xlu0 %984
      %986 = vrot.lane.b32.xlu0 %v919, 8
      %v987 = vpop.permute.xlu0 %986
      %988 = vrot.lane.b32.xlu0 %v922, 8
      %v989 = vpop.permute.xlu0 %988
      %990 = vrot.lane.b32.xlu0 %v925, 8
      %v991 = vpop.permute.xlu0 %990
      %992 = vrot.lane.b32.xlu0 %v769, 12
      %v993 = vpop.permute.xlu0 %992
      %994 = vrot.lane.b32.xlu0 %v770, 12
      %v995 = vpop.permute.xlu0 %994
      %996 = vrot.lane.b32.xlu0 %v771, 12
      %v997 = vpop.permute.xlu0 %996
      %998 = vrot.lane.b32.xlu0 %v772, 12
      %v999 = vpop.permute.xlu0 %998
      %1000 = vrot.lane.b32.xlu0 %v773, 12
      %v1001 = vpop.permute.xlu0 %1000
      %1002 = vrot.lane.b32.xlu0 %v774, 12
      %v1003 = vpop.permute.xlu0 %1002
      %1004 = vrot.lane.b32.xlu0 %v775, 12
      %v1005 = vpop.permute.xlu0 %1004
      %1006 = vrot.lane.b32.xlu0 %v776, 12
      %v1007 = vpop.permute.xlu0 %1006
      %1008 = vrot.lane.b32.xlu0 %v812, 16
      %v1009 = vpop.permute.xlu0 %1008
      %1010 = vrot.lane.b32.xlu0 %v824, 16
      %v1011 = vpop.permute.xlu0 %1010
      %1012 = vrot.lane.b32.xlu0 %v836, 16
      %v1013 = vpop.permute.xlu0 %1012
      %1014 = vrot.lane.b32.xlu0 %v848, 16
      %v1015 = vpop.permute.xlu0 %1014
      %1016 = vrot.lane.b32.xlu0 %v860, 16
      %v1017 = vpop.permute.xlu0 %1016
      %1018 = vrot.lane.b32.xlu0 %v872, 16
      %v1019 = vpop.permute.xlu0 %1018
      %1020 = vrot.lane.b32.xlu0 %v884, 16
      %v1021 = vpop.permute.xlu0 %1020
      %1022 = vrot.lane.b32.xlu0 %v937, 16
      %v1023 = vpop.permute.xlu0 %1022
      %1024 = vrot.lane.b32.xlu0 %v907, 20
      %v1025 = vpop.permute.xlu0 %1024
      %1026 = vrot.lane.b32.xlu0 %v910, 20
      %v1027 = vpop.permute.xlu0 %1026
      %1028 = vrot.lane.b32.xlu0 %v913, 20
      %v1029 = vpop.permute.xlu0 %1028
      %1030 = vrot.lane.b32.xlu0 %v916, 20
      %v1031 = vpop.permute.xlu0 %1030
      %1032 = vrot.lane.b32.xlu0 %v919, 20
      %v1033 = vpop.permute.xlu0 %1032
      %1034 = vrot.lane.b32.xlu0 %v922, 20
      %v1035 = vpop.permute.xlu0 %1034
      %1036 = vrot.lane.b32.xlu0 %v925, 20
      %v1037 = vpop.permute.xlu0 %1036
      %1038 = vrot.lane.b32.xlu0 %v942, 20
      %v1039 = vpop.permute.xlu0 %1038
      %1040 = vrot.lane.b32.xlu0 %v770, 24
      %v1041 = vpop.permute.xlu0 %1040
      %1042 = vrot.lane.b32.xlu0 %v771, 24
      %v1043 = vpop.permute.xlu0 %1042
      %1044 = vrot.lane.b32.xlu0 %v772, 24
      %v1045 = vpop.permute.xlu0 %1044
      %1046 = vrot.lane.b32.xlu0 %v773, 24
      %v1047 = vpop.permute.xlu0 %1046
      %1048 = vrot.lane.b32.xlu0 %v774, 24
      %v1049 = vpop.permute.xlu0 %1048
      %1050 = vrot.lane.b32.xlu0 %v775, 24
      %v1051 = vpop.permute.xlu0 %1050
      %1052 = vrot.lane.b32.xlu0 %v776, 24
      %v1053 = vpop.permute.xlu0 %1052
      %1054 = vrot.lane.b32.xlu0 %v777, 24
      %v1055 = vpop.permute.xlu0 %1054
      %1056 = vrot.lane.b32.xlu0 %v824, 28
      %v1057 = vpop.permute.xlu0 %1056
      %1058 = vrot.lane.b32.xlu0 %v836, 28
      %v1059 = vpop.permute.xlu0 %1058
      %1060 = vrot.lane.b32.xlu0 %v848, 28
      %v1061 = vpop.permute.xlu0 %1060
      %1062 = vrot.lane.b32.xlu0 %v860, 28
      %v1063 = vpop.permute.xlu0 %1062
      %1064 = vrot.lane.b32.xlu0 %v872, 28
      %v1065 = vpop.permute.xlu0 %1064
      %1066 = vrot.lane.b32.xlu0 %v884, 28
      %v1067 = vpop.permute.xlu0 %1066
      %1068 = vrot.lane.b32.xlu0 %v937, 28
      %v1069 = vpop.permute.xlu0 %1068
      %1070 = vrot.lane.b32.xlu0 %v954, 28
      %v1071 = vpop.permute.xlu0 %1070
      %1072 = vrot.lane.b32.xlu0 %v910, 32
      %v1073 = vpop.permute.xlu0 %1072
      %1074 = vrot.lane.b32.xlu0 %v913, 32
      %v1075 = vpop.permute.xlu0 %1074
      %1076 = vrot.lane.b32.xlu0 %v916, 32
      %v1077 = vpop.permute.xlu0 %1076
      %1078 = vrot.lane.b32.xlu0 %v919, 32
      %v1079 = vpop.permute.xlu0 %1078
      %1080 = vrot.lane.b32.xlu0 %v922, 32
      %v1081 = vpop.permute.xlu0 %1080
      %1082 = vrot.lane.b32.xlu0 %v925, 32
      %v1083 = vpop.permute.xlu0 %1082
      %1084 = vrot.lane.b32.xlu0 %v942, 32
      %v1085 = vpop.permute.xlu0 %1084
      %1086 = vrot.lane.b32.xlu0 %v959, 32
      %v1087 = vpop.permute.xlu0 %1086
      %vm1088 = vcmask 31744
      %v1090 = vsel %vm1088, %v768, %v961
      %v1092 = vsel %vm1088, %v769, %v963
      %v1094 = vsel %vm1088, %v770, %v965
      %v1096 = vsel %vm1088, %v771, %v967
      %v1098 = vsel %vm1088, %v772, %v969
      %v1100 = vsel %vm1088, %v773, %v971
      %v1102 = vsel %vm1088, %v774, %v973
      %v1104 = vsel %vm1088, %v775, %v975
      %vm1105 = vcmask 64512
      %v1107 = vsel %vm1105, %v1090, %v977
      %v1109 = vsel %vm1105, %v1092, %v979
      %v1111 = vsel %vm1105, %v1094, %v981
      %v1113 = vsel %vm1105, %v1096, %v983
      %v1115 = vsel %vm1105, %v1098, %v985
      %v1117 = vsel %vm1105, %v1100, %v987
      %v1119 = vsel %vm1105, %v1102, %v989
      %v1121 = vsel %vm1105, %v1104, %v991
      %vm1122 = vcmask 97280
      %v1124 = vsel %vm1122, %v1107, %v993
      %v1126 = vsel %vm1122, %v1109, %v995
      %v1128 = vsel %vm1122, %v1111, %v997
      %v1130 = vsel %vm1122, %v1113, %v999
      %v1132 = vsel %vm1122, %v1115, %v1001
      %v1134 = vsel %vm1122, %v1117, %v1003
      %v1136 = vsel %vm1122, %v1119, %v1005
      %v1138 = vsel %vm1122, %v1121, %v1007
      %vm1139 = vcmask 130048
      %v1141 = vsel %vm1139, %v1124, %v1009
      %v1143 = vsel %vm1139, %v1126, %v1011
      %v1145 = vsel %vm1139, %v1128, %v1013
      %v1147 = vsel %vm1139, %v1130, %v1015
      %v1149 = vsel %vm1139, %v1132, %v1017
      %v1151 = vsel %vm1139, %v1134, %v1019
      %v1153 = vsel %vm1139, %v1136, %v1021
      %v1155 = vsel %vm1139, %v1138, %v1023
      %vm1156 = vcmask 162816
      %v1158 = vsel %vm1156, %v1141, %v1025
      %v1160 = vsel %vm1156, %v1143, %v1027
      %v1162 = vsel %vm1156, %v1145, %v1029
      %v1164 = vsel %vm1156, %v1147, %v1031
      %v1166 = vsel %vm1156, %v1149, %v1033
      %v1168 = vsel %vm1156, %v1151, %v1035
      %v1170 = vsel %vm1156, %v1153, %v1037
      %v1172 = vsel %vm1156, %v1155, %v1039
      %vm1173 = vcmask 195584
      %v1175 = vsel %vm1173, %v1158, %v1041
      %v1177 = vsel %vm1173, %v1160, %v1043
      %v1179 = vsel %vm1173, %v1162, %v1045
      %v1181 = vsel %vm1173, %v1164, %v1047
      %v1183 = vsel %vm1173, %v1166, %v1049
      %v1185 = vsel %vm1173, %v1168, %v1051
      %v1187 = vsel %vm1173, %v1170, %v1053
      %v1189 = vsel %vm1173, %v1172, %v1055
      %vm1190 = vcmask 228352
      %v1192 = vsel %vm1190, %v1175, %v1057
      %v1194 = vsel %vm1190, %v1177, %v1059
      %v1196 = vsel %vm1190, %v1179, %v1061
      %v1198 = vsel %vm1190, %v1181, %v1063
      %v1200 = vsel %vm1190, %v1183, %v1065
      %v1202 = vsel %vm1190, %v1185, %v1067
      %v1204 = vsel %vm1190, %v1187, %v1069
      %v1206 = vsel %vm1190, %v1189, %v1071
      %vm1207 = vcmask 261120
      %v1209 = vsel %vm1207, %v1192, %v1073
      %v1211 = vsel %vm1207, %v1194, %v1075
      %v1213 = vsel %vm1207, %v1196, %v1077
      %v1215 = vsel %vm1207, %v1198, %v1079
      %v1217 = vsel %vm1207, %v1200, %v1081
      %v1219 = vsel %vm1207, %v1202, %v1083
      %v1221 = vsel %vm1207, %v1204, %v1085
      %v1223 = vsel %vm1207, %v1206, %v1087
      %v1224 = vld [vmem:[%s5] sm:$0xf]
      %v1225 = vld [vmem:[%s5 + $0x4] sm:$0xf]
      %v1226 = vld [vmem:[%s5 + $0x8] sm:$0xf]
      %v1227 = vld [vmem:[%s5 + $0xc] sm:$0xf]
      %v1228 = vld [vmem:[%s5 + $0x10] sm:$0x3]
      %v1234 = vunpack.c.l.b16 %v1224
      %v1235 = vunpack.c.l.b16 %v1225
      %v1236 = vunpack.c.l.b16 %v1226
      %v1237 = vunpack.c.l.b16 %v1227
      %v1238 = vunpack.c.l.b16 %v1228
      %v1239 = vpack.c.b16 %v1235, %v1234
      %v1240 = vpack.c.b16 %v1237, %v1236
      %v1241 = vpack.c.b16 %v1238, %v1238
      %vm1244 = vcmask 293888
      %v1245 = vsel %vm1244, %v1209, 0
      %v1247 = vsel %vm1244, %v1211, 0
      %v1249 = vsel %vm1244, %v1213, 0
      %v1251 = vsel %vm1244, %v1215, 0
      %v1253 = vsel %vm1244, %v1217, 0
      %v1255 = vsel %vm1244, %v1219, 0
      %v1257 = vsel %vm1244, %v1221, 0
      %v1259 = vsel %vm1244, %v1223, 0
      %vm1261 = vcmask 1041408
      %v1263 = vsel %vm1261, %v1241, 0
      %1265 = vmatprep.subr.bf16.mxu0 0
      %1266 = vmatpush1.bf16.msra.mxu0 %v1239
      %1267 = vmatprep.subr.bf16.mxu0 0
      %1268 = vmatpush1.bf16.msra.mxu0 %v1240
      %1269 = vmatprep.subr.bf16.mxu0 0
      %1270 = vmatpush1.bf16.msra.mxu0 %v1263
      %1271 = vmatprep.subr.bf16.mxu0 0
      %1272 = vmatpush1.bf16.msra.mxu0 0
      %1273 = vmatprep.subr.bf16.mxu0 0
      %1274 = vmatpush1.bf16.msra.mxu0 0
      %1275 = vmatprep.subr.bf16.mxu0 0
      %1276 = vmatpush1.bf16.msra.mxu0 0
      %1277 = vmatprep.subr.bf16.mxu0 0
      %1278 = vmatpush1.bf16.msra.mxu0 0
      %1279 = vmatprep.subr.bf16.mxu0 0
      %1280 = vmatpush1.bf16.msra.mxu0 0
      %1281 = vmatprep.subr.bf16.mxu0 0
      %1282 = vmatpush1.bf16.msra.mxu0 0
      %1283 = vmatprep.subr.bf16.mxu0 0
      %1284 = vmatpush1.bf16.msra.mxu0 0
      %1285 = vmatprep.subr.bf16.mxu0 0
      %1286 = vmatpush1.bf16.msra.mxu0 0
      %1287 = vmatprep.subr.bf16.mxu0 0
      %1288 = vmatpush1.bf16.msra.mxu0 0
      %1289 = vmatprep.subr.bf16.mxu0 0
      %1290 = vmatpush1.bf16.msra.mxu0 0
      %1291 = vmatprep.subr.bf16.mxu0 0
      %1292 = vmatpush1.bf16.msra.mxu0 0
      %1293 = vmatprep.subr.bf16.mxu0 0
      %1294 = vmatpush1.bf16.msra.mxu0 0
      %1295 = vmatprep.subr.bf16.mxu0 0
      %1296 = vmatpush1.bf16.msra.mxu0 0
      %1297 = vmatprep.mubr.bf16.mxu0 0
      %1298 = vmatmul.mubr.bf16.gmra.mrb[0].mxu0 %v1245
      %v1299 = vpop.f32.mrb[0].mxu0
      %v1300 = vadd.f32 0.0, %v1299
      %v1301 = vpop.f32.mrb[0].mxu0
      %v1302 = vpop.f32.mrb[0].mxu0
      %v1303 = vadd.f32 0.0, %v1302
      %v1304 = vpop.f32.mrb[0].mxu0
      %1305 = vmatprep.mubr.bf16.mxu0 0
      %1306 = vmatmul.mubr.bf16.gmra.mrb[0].mxu0 %v1247
      %v1307 = vpop.f32.mrb[0].mxu0
      %v1308 = vadd.f32 0.0, %v1307
      %v1309 = vpop.f32.mrb[0].mxu0
      %v1310 = vpop.f32.mrb[0].mxu0
      %v1311 = vadd.f32 0.0, %v1310
      %v1312 = vpop.f32.mrb[0].mxu0
      %1313 = vmatprep.mubr.bf16.mxu0 0
      %1314 = vmatmul.mubr.bf16.gmra.mrb[0].mxu0 %v1249
      %v1315 = vpop.f32.mrb[0].mxu0
      %v1316 = vadd.f32 0.0, %v1315
      %v1317 = vpop.f32.mrb[0].mxu0
      %v1318 = vpop.f32.mrb[0].mxu0
      %v1319 = vadd.f32 0.0, %v1318
      %v1320 = vpop.f32.mrb[0].mxu0
      %1321 = vmatprep.mubr.bf16.mxu0 0
      %1322 = vmatmul.mubr.bf16.gmra.mrb[0].mxu0 %v1251
      %v1323 = vpop.f32.mrb[0].mxu0
      %v1324 = vadd.f32 0.0, %v1323
      %v1325 = vpop.f32.mrb[0].mxu0
      %v1326 = vpop.f32.mrb[0].mxu0
      %v1327 = vadd.f32 0.0, %v1326
      %v1328 = vpop.f32.mrb[0].mxu0
      %1329 = vmatprep.mubr.bf16.mxu0 0
      %1330 = vmatmul.mubr.bf16.gmra.mrb[0].mxu0 %v1253
      %v1331 = vpop.f32.mrb[0].mxu0
      %v1332 = vadd.f32 0.0, %v1331
      %v1333 = vpop.f32.mrb[0].mxu0
      %v1334 = vpop.f32.mrb[0].mxu0
      %v1335 = vadd.f32 0.0, %v1334
      %v1336 = vpop.f32.mrb[0].mxu0
      %1337 = vmatprep.mubr.bf16.mxu0 0
      %1338 = vmatmul.mubr.bf16.gmra.mrb[0].mxu0 %v1255
      %v1339 = vpop.f32.mrb[0].mxu0
      %v1340 = vadd.f32 0.0, %v1339
      %v1341 = vpop.f32.mrb[0].mxu0
      %v1342 = vpop.f32.mrb[0].mxu0
      %v1343 = vadd.f32 0.0, %v1342
      %v1344 = vpop.f32.mrb[0].mxu0
      %1345 = vmatprep.mubr.bf16.mxu0 0
      %1346 = vmatmul.mubr.bf16.gmra.mrb[0].mxu0 %v1257
      %v1347 = vpop.f32.mrb[0].mxu0
      %v1348 = vadd.f32 0.0, %v1347
      %v1349 = vpop.f32.mrb[0].mxu0
      %v1350 = vpop.f32.mrb[0].mxu0
      %v1351 = vadd.f32 0.0, %v1350
      %v1352 = vpop.f32.mrb[0].mxu0
      %1353 = vmatprep.mubr.bf16.mxu0 0
      %1354 = vmatmul.mubr.bf16.gmra.mrb[0].mxu0 %v1259
      %v1355 = vpop.f32.mrb[0].mxu0
      %v1356 = vadd.f32 0.0, %v1355
      %v1357 = vpop.f32.mrb[0].mxu0
      %v1358 = vpop.f32.mrb[0].mxu0
      %v1359 = vadd.f32 0.0, %v1358
      %v1360 = vpop.f32.mrb[0].mxu0
      %1361 = vdwg.mxu0
      %v1362 = vstv %s469
      %v1363 = vadd.s32 %v1362, 1
      %v1364 = vadd.s32 %v1362, 2
      %v1365 = vadd.s32 %v1362, 3
      %v1366 = vadd.s32 %v1362, 4
      %v1367 = vadd.s32 %v1362, 5
      %v1368 = vadd.s32 %v1362, 6
      %v1369 = vadd.s32 %v1362, 7
      %vm1370 = vcmp.lt.s32.totalorder %v1362, 14
      %vm1371 = vcmp.lt.s32.totalorder %v1363, 14
      %vm1372 = vcmp.lt.s32.totalorder %v1364, 14
      %vm1373 = vcmp.lt.s32.totalorder %v1365, 14
      %vm1374 = vcmp.lt.s32.totalorder %v1366, 14
      %vm1375 = vcmp.lt.s32.totalorder %v1367, 14
      %vm1376 = vcmp.lt.s32.totalorder %v1368, 14
      %vm1377 = vcmp.lt.s32.totalorder %v1369, 14
      %v1378 = vsel %vm1370, 1, 0
      %v1379 = vsel %vm1371, 1, 0
      %v1380 = vsel %vm1372, 1, 0
      %v1381 = vsel %vm1373, 1, 0
      %v1382 = vsel %vm1374, 1, 0
      %v1383 = vsel %vm1375, 1, 0
      %v1384 = vsel %vm1376, 1, 0
      %v1385 = vsel %vm1377, 1, 0
      %vm1386 = vcmp.eq.s32.totalorder %v1378, 1
      %vm1387 = vcmp.eq.s32.totalorder %v1379, 1
      %vm1388 = vcmp.eq.s32.totalorder %v1380, 1
      %vm1389 = vcmp.eq.s32.totalorder %v1381, 1
      %vm1390 = vcmp.eq.s32.totalorder %v1382, 1
      %vm1391 = vcmp.eq.s32.totalorder %v1383, 1
      %vm1392 = vcmp.eq.s32.totalorder %v1384, 1
      %vm1393 = vcmp.eq.s32.totalorder %v1385, 1
      %v1394 = vsel %vm1386, %v1300, 0.0
      %v1395 = vsel %vm1386, %v1303, 0.0
      %v1396 = vsel %vm1387, %v1308, 0.0
      %v1397 = vsel %vm1387, %v1311, 0.0
      %v1398 = vsel %vm1388, %v1316, 0.0
      %v1399 = vsel %vm1388, %v1319, 0.0
      %v1400 = vsel %vm1389, %v1324, 0.0
      %v1401 = vsel %vm1389, %v1327, 0.0
      %v1402 = vsel %vm1390, %v1332, 0.0
      %v1403 = vsel %vm1390, %v1335, 0.0
      %v1404 = vsel %vm1391, %v1340, 0.0
      %v1405 = vsel %vm1391, %v1343, 0.0
      %v1406 = vsel %vm1392, %v1348, 0.0
      %v1407 = vsel %vm1392, %v1351, 0.0
      %v1408 = vsel %vm1393, %v1356, 0.0
      %v1409 = vsel %vm1393, %v1359, 0.0
      %v1410 = vsel %vm1088, %v1394, 0.0
      %v1411 = vsel %vm1088, %v1395, 0.0
      %v1412 = vadd.f32 %v1410, %v1411
      %v1413 = vsel %vm1088, %v1396, 0.0
      %v1414 = vadd.f32 %v1412, %v1413
      %v1415 = vsel %vm1088, %v1397, 0.0
      %v1416 = vadd.f32 %v1414, %v1415
      %v1417 = vsel %vm1088, %v1398, 0.0
      %v1418 = vadd.f32 %v1416, %v1417
      %v1419 = vsel %vm1088, %v1399, 0.0
      %v1420 = vadd.f32 %v1418, %v1419
      %v1421 = vsel %vm1088, %v1400, 0.0
      %v1422 = vadd.f32 %v1420, %v1421
      %v1423 = vsel %vm1088, %v1401, 0.0
      %v1424 = vadd.f32 %v1422, %v1423
      %v1425 = vsel %vm1088, %v1402, 0.0
      %v1426 = vadd.f32 %v1424, %v1425
      %v1427 = vsel %vm1088, %v1403, 0.0
      %v1428 = vadd.f32 %v1426, %v1427
      %v1429 = vsel %vm1088, %v1404, 0.0
      %v1430 = vadd.f32 %v1428, %v1429
      %v1431 = vsel %vm1088, %v1405, 0.0
      %v1432 = vadd.f32 %v1430, %v1431
      %v1433 = vsel %vm1088, %v1406, 0.0
      %v1434 = vadd.f32 %v1432, %v1433
      %v1435 = vsel %vm1088, %v1407, 0.0
      %v1436 = vadd.f32 %v1434, %v1435
      %v1437 = vsel %vm1088, %v1408, 0.0
      %v1438 = vadd.f32 %v1436, %v1437
      %v1439 = vsel %vm1088, %v1409, 0.0
      %v1440 = vadd.f32 %v1438, %v1439
      %v1441 = vrot.slane %v1440, 4
      %v1442 = vadd.f32 %v1440, %v1441
      %v1443 = vrot.slane %v1442, 2
      %v1444 = vadd.f32 %v1442, %v1443
      %v1445 = vrot.slane %v1444, 1
      %v1446 = vadd.f32 %v1444, %v1445
      %v1447 = vmul.f32 %v1394, %v1394
      %v1448 = vmul.f32 %v1395, %v1395
      %v1449 = vmul.f32 %v1396, %v1396
      %v1450 = vmul.f32 %v1397, %v1397
      %v1451 = vmul.f32 %v1398, %v1398
      %v1452 = vmul.f32 %v1399, %v1399
      %v1453 = vmul.f32 %v1400, %v1400
      %v1454 = vmul.f32 %v1401, %v1401
      %v1455 = vmul.f32 %v1402, %v1402
      %v1456 = vmul.f32 %v1403, %v1403
      %v1457 = vmul.f32 %v1404, %v1404
      %v1458 = vmul.f32 %v1405, %v1405
      %v1459 = vmul.f32 %v1406, %v1406
      %v1460 = vmul.f32 %v1407, %v1407
      %v1461 = vmul.f32 %v1408, %v1408
      %v1462 = vmul.f32 %v1409, %v1409
      %v1463 = vsel %vm1088, %v1447, 0.0
      %v1464 = vsel %vm1088, %v1448, 0.0
      %v1465 = vadd.f32 %v1463, %v1464
      %v1466 = vsel %vm1088, %v1449, 0.0
      %v1467 = vadd.f32 %v1465, %v1466
      %v1468 = vsel %vm1088, %v1450, 0.0
      %v1469 = vadd.f32 %v1467, %v1468
      %v1470 = vsel %vm1088, %v1451, 0.0
      %v1471 = vadd.f32 %v1469, %v1470
      %v1472 = vsel %vm1088, %v1452, 0.0
      %v1473 = vadd.f32 %v1471, %v1472
      %v1474 = vsel %vm1088, %v1453, 0.0
      %v1475 = vadd.f32 %v1473, %v1474
      %v1476 = vsel %vm1088, %v1454, 0.0
      %v1477 = vadd.f32 %v1475, %v1476
      %v1478 = vsel %vm1088, %v1455, 0.0
      %v1479 = vadd.f32 %v1477, %v1478
      %v1480 = vsel %vm1088, %v1456, 0.0
      %v1481 = vadd.f32 %v1479, %v1480
      %v1482 = vsel %vm1088, %v1457, 0.0
      %v1483 = vadd.f32 %v1481, %v1482
      %v1484 = vsel %vm1088, %v1458, 0.0
      %v1485 = vadd.f32 %v1483, %v1484
      %v1486 = vsel %vm1088, %v1459, 0.0
      %v1487 = vadd.f32 %v1485, %v1486
      %v1488 = vsel %vm1088, %v1460, 0.0
      %v1489 = vadd.f32 %v1487, %v1488
      %v1490 = vsel %vm1088, %v1461, 0.0
      %v1491 = vadd.f32 %v1489, %v1490
      %v1492 = vsel %vm1088, %v1462, 0.0
      %v1493 = vadd.f32 %v1491, %v1492
      %v1494 = vrot.slane %v1493, 4
      %v1495 = vadd.f32 %v1493, %v1494
      %v1496 = vrot.slane %v1495, 2
      %v1497 = vadd.f32 %v1495, %v1496
      %v1498 = vrot.slane %v1497, 1
      %v1499 = vadd.f32 %v1497, %v1498
      %vm1500 = vcmask 1040384
      %v1501 = vsel %vm1500, %v1446, %v1499
      %vm1502 = vcmask 25600
      %1503 = vst.msk [vmem:[%s467] sm:$0x3] %vm1502, %v1501
      %v1504 = vpack.c.bf16 %v1303, %v1300
      %v1505 = vpack.c.bf16 %v1311, %v1308
      %v1506 = vpack.c.bf16 %v1319, %v1316
      %v1507 = vpack.c.bf16 %v1327, %v1324
      %v1508 = vpack.c.bf16 %v1335, %v1332
      %v1509 = vpack.c.bf16 %v1343, %v1340
      %v1510 = vpack.c.bf16 %v1351, %v1348
      %v1511 = vpack.c.bf16 %v1359, %v1356
      %v1520 = vunpack.c.l.b16 %v1504
      %v1521 = vunpack.c.h.b16 %v1504
      %v1522 = vunpack.c.l.b16 %v1505
      %v1523 = vunpack.c.h.b16 %v1505
      %v1524 = vunpack.c.l.b16 %v1506
      %v1525 = vunpack.c.h.b16 %v1506
      %v1526 = vunpack.c.l.b16 %v1507
      %v1527 = vunpack.c.h.b16 %v1507
      %v1528 = vunpack.c.l.b16 %v1508
      %v1529 = vunpack.c.h.b16 %v1508
      %v1530 = vunpack.c.l.b16 %v1509
      %v1531 = vunpack.c.h.b16 %v1509
      %v1532 = vunpack.c.l.b16 %v1510
      %v1533 = vunpack.c.h.b16 %v1510
      %v1534 = vunpack.c.l.b16 %v1511
      %v1535 = vunpack.c.h.b16 %v1511
      %v1536 = vpack.c.b16 %v1520, %v1520
      %v1537 = vpack.c.b16 %v1521, %v1521
      %v1538 = vpack.c.b16 %v1522, %v1522
      %v1539 = vpack.c.b16 %v1523, %v1523
      %v1540 = vpack.c.b16 %v1524, %v1524
      %v1541 = vpack.c.b16 %v1525, %v1525
      %v1542 = vpack.c.b16 %v1526, %v1526
      %v1543 = vpack.c.b16 %v1527, %v1527
      %v1544 = vpack.c.b16 %v1528, %v1528
      %v1545 = vpack.c.b16 %v1529, %v1529
      %v1546 = vpack.c.b16 %v1530, %v1530
      %v1547 = vpack.c.b16 %v1531, %v1531
      %v1548 = vpack.c.b16 %v1532, %v1532
      %v1549 = vpack.c.b16 %v1533, %v1533
      %v1550 = vpack.c.b16 %v1534, %v1534
      %v1551 = vpack.c.b16 %v1535, %v1535
      %vm1568 = vcmask 27648
      %1569 = vst.msk [vmem:[%s458] sm:$0xf] %vm1568, %v1536
      %1570 = vst.msk [vmem:[%s458 + $0x4] sm:$0xf] %vm1568, %v1537
      %1571 = vst.msk [vmem:[%s458 + $0x8] sm:$0xf] %vm1568, %v1538
      %1572 = vst.msk [vmem:[%s458 + $0xc] sm:$0xf] %vm1568, %v1539
      %1573 = vst.msk [vmem:[%s458 + $0x10] sm:$0xf] %vm1568, %v1540
      %1574 = vst.msk [vmem:[%s458 + $0x14] sm:$0xf] %vm1568, %v1541
      %1575 = vst.msk [vmem:[%s458 + $0x18] sm:$0xf] %vm1568, %v1542
      %1576 = vst.msk [vmem:[%s458 + $0x1c] sm:$0xf] %vm1568, %v1543
      %1577 = vst.msk [vmem:[%s458 + $0x20] sm:$0xf] %vm1568, %v1544
      %1578 = vst.msk [vmem:[%s458 + $0x24] sm:$0xf] %vm1568, %v1545
      %1579 = vst.msk [vmem:[%s458 + $0x28] sm:$0xf] %vm1568, %v1546
      %1580 = vst.msk [vmem:[%s458 + $0x2c] sm:$0xf] %vm1568, %v1547
      %1581 = vst.msk [vmem:[%s458 + $0x30] sm:$0xf] %vm1568, %v1548
      %1582 = vst.msk [vmem:[%s458 + $0x34] sm:$0xf] %vm1568, %v1549
      %1583 = vst.msk [vmem:[%s458 + $0x38] sm:$0xf] %vm1568, %v1550
      %1584 = vst.msk [vmem:[%s458 + $0x3c] sm:$0xf] %vm1568, %v1551
      %s1585 = smul.u32 8, %s24
      %p1586 = scmp.lt.s32.totalorder %s23, 1
      %s1587 = scalar_select %p1586, %s23, 1
      %p1588 = scmp.lt.s32.totalorder %s1585, 15
      %s1589 = scalar_select %p1588, %s1585, 15
      %s1590 = smul.addr %s1589, 2
      %s1591 = smul.addr %s1587, 32
      %s1592 = sadd.s32 %s1590, %s1591
      %s1593 = smul.addr %s1592, 4
      %s1594 = scalar_lea.vmem %s6, %s1593
      %p1595 = scmp.lt.s32.totalorder %s23, 1
      %s1596 = scalar_select %p1595, %s23, 1
      %p1597 = scmp.lt.s32.totalorder %s24, 1
      %s1598 = scalar_select %p1597, %s24, 1
      %s1599 = smul.addr %s1596, 2
      %s1600 = sadd.s32 %s1598, %s1599
      %s1601 = smul.addr %s1600, 2
      %s1602 = scalar_lea.vmem %s7, %s1601
      // Predicated region
      $region45: #{_lambda_.4} parent=43 // pred_check
        %p1603 = pneg %p214
      $region46: #{_lambda_.4} parent=43 // pred_check_branch
        %1605 = sbr.rel (%p1603) target = $region48
      $region47: #{_lambda_.4} parent=43 // pred_region
        %s1606 = smul.u32 8, %s24
      $region48: #{_lambda_.4} parent=43 // pred_fallthru
        _
      // Predicated region
      $region49: #{_lambda_.4} parent=43 // pred_check
        %p1607 = pneg %p242
      $region50: #{_lambda_.4} parent=43 // pred_check_branch
        %1609 = sbr.rel (%p1607) target = $region52
      $region51: #{_lambda_.4} parent=43 // pred_region
        _
      $region52: #{_lambda_.4} parent=43 // pred_fallthru
        _
    $region44: #{_lambda_.4} parent=5 // pred_fallthru
      _
    %p1610 = scmp.le.s32.totalorder 2, %s14
    // Predicated region
    $region53: #{_lambda_.4} parent=5 // pred_check
      %p1611 = pneg %p1610
    $region54: #{_lambda_.4} parent=5 // pred_check_branch
      %1613 = sbr.rel (%p1611) target = $region56
    $region55: #{_lambda_.4} parent=5 // pred_region
      %s1614 = ssub.s32 %s14, 2
      // Predicated region
      $region57: #{_lambda_.4} parent=55 // pred_check
        %p1615 = pneg %p220
      $region58: #{_lambda_.4} parent=55 // pred_check_branch
        %1617 = sbr.rel (%p1615) target = $region60
      $region59: #{_lambda_.4} parent=55 // pred_region
        %s1618 = smul.u32 8, %s26
        %p1619 = scmp.lt.s32.totalorder %s25, 1
        %s1620 = scalar_select %p1619, %s25, 1
        %p1621 = scmp.lt.s32.totalorder %s1618, 15
        %s1622 = scalar_select %p1621, %s1618, 15
        %s1623 = smul.addr %s1622, 2
        %s1624 = smul.addr %s1620, 32
        %s1625 = sadd.s32 %s1623, %s1624
        %s1626 = smul.addr %s1625, 4
        %s1627 = scalar_lea.vmem %s6, %s1626
      $region60: #{_lambda_.4} parent=55 // pred_fallthru
        _
      // Predicated region
      $region61: #{_lambda_.4} parent=55 // pred_check
        %p1628 = pneg %p248
      $region62: #{_lambda_.4} parent=55 // pred_check_branch
        %1630 = sbr.rel (%p1628) target = $region64
      $region63: #{_lambda_.4} parent=55 // pred_region
        %p1631 = scmp.lt.s32.totalorder %s25, 1
        %s1632 = scalar_select %p1631, %s25, 1
        %p1633 = scmp.lt.s32.totalorder %s26, 1
        %s1634 = scalar_select %p1633, %s26, 1
        %s1635 = smul.addr %s1632, 2
        %s1636 = sadd.s32 %s1634, %s1635
        %s1637 = smul.addr %s1636, 2
        %s1638 = scalar_lea.vmem %s7, %s1637
      $region64: #{_lambda_.4} parent=55 // pred_fallthru
        _
    $region56: #{_lambda_.4} parent=5 // pred_fallthru
      _
  $region6: #{_lambda_.4} parent=0 // loop_footer
    %s18 = sadd.s32 1, %s14
  $region7: #{_lambda_.4} parent=0 // loop_footer_branch
    %13 = sbr.rel target = $region3
  $region8: #{_lambda_.4} parent=0 // loop_exit
    _

// kernel: _lambda_.3
$region0: #{_lambda_.3}
  #allocation0 [shape = 'u32[]', space=smem, size = 0x4, offset = 0x4, fixed_abs, tag = 'smem constant byte address 0x4 - core index']
  #allocation1 [shape = 'u32[144,128]{1,0:T(1,128)}', space=vmem, size = 0x12000, scoped, tag = 'internal scratch']
  %s0 = inlined_call_operand.vmem [shape: bf16[2,16,16,4], index: 0, kind: input, shape index: {}, may-alias: {0,1,2}]
  %s1 = inlined_call_operand.vmem [shape: bf16[2,16,16,4], index: 1, kind: input, shape index: {}, may-alias: {0,1,2}]
  %s2 = inlined_call_operand.vmem [shape: bf16[2,16,16,4], index: 2, kind: input, shape index: {}, may-alias: {0,1,2}]
  %s3 = inlined_call_operand.vmem [shape: bf16[2,16,16,4], index: 3, kind: input, shape index: {}, may-alias: {3,4,5}]
  %s4 = inlined_call_operand.vmem [shape: bf16[2,16,16,4], index: 4, kind: input, shape index: {}, may-alias: {3,4,5}]
  %s5 = inlined_call_operand.vmem [shape: bf16[2,16,16,4], index: 5, kind: input, shape index: {}, may-alias: {3,4,5}]
  %s6 = inlined_call_operand.vmem [shape: bf16[72,4], index: 6, kind: input, shape index: {}]
  %s7 = inlined_call_operand.vmem [shape: bf16[2,16,16,4], index: 7, kind: output, shape index: {0}]
  %s8 = inlined_call_operand.vmem [shape: f32[2,2,2,4], index: 8, kind: output, shape index: {1}]
  %9 = xla_tuple %s7, %s8
  %s10 = sld [smem:[#allocation0]]
  $region69: #{_lambda_.3} parent=0
    _
  %s12 = ssub.s32 1, %s10
  %s13 = scalar_select 0, %s12, %s10
  loop: start=0, step=1, limit=6
  $region2: #{_lambda_.3} parent=0 // loop_pre_header
    _
  $region3: #{_lambda_.3} parent=0 // loop_header
    %s15 = sphi 0, %s19
    %p16 = scmp.ge.s32.totalorder %s15, 6
    %s22 = sphi 0, %s34
    %s23 = sphi 0, %s30
    %s24 = sphi 0, %s22
    %s25 = sphi 0, %s23
    %s26 = sphi 0, %s24
    %s27 = sphi 0, %s25
    %s39 = sphi 0, %s41
    %s42 = sphi 0, %s39
    %s43 = sphi 0, %s42
    %s59 = sphi 0, %s43
    %s75 = sphi 0, %s77
    %s78 = sphi 0, %s75
    %s79 = sphi 0, %s78
    %s95 = sphi 0, %s79
    %s111 = sphi 0, %s113
    %s114 = sphi 0, %s111
    %s115 = sphi 0, %s114
    %s131 = sphi 0, %s115
    %s139 = sphi 0, %s141
    %s142 = sphi 0, %s139
    %s143 = sphi 0, %s142
    %s159 = sphi 0, %s143
    %s175 = sphi 0, %s177
    %s178 = sphi 0, %s175
    %s179 = sphi 0, %s178
    %s195 = sphi 0, %s179
    %s211 = sphi 0, %s213
    %s214 = sphi 0, %s211
    %s215 = sphi 0, %s214
    %s231 = sphi 0, %s215
    %s235 = sphi 0, %s235
    %s237 = sphi 0, %s235
    %s238 = sphi 0, %s237
    %s252 = sphi 0, %s238
    %s260 = sphi 0, %s262
    %s263 = sphi 0, %s260
    %s264 = sphi 0, %s263
    %s280 = sphi 0, %s264
    %s288 = sphi 0, %s290
    %s291 = sphi 0, %s288
    %s292 = sphi 0, %s291
    %s308 = sphi 0, %s292
  $region4: #{_lambda_.3} parent=0 // loop_header_branch
    %18 = sbr.rel (%p16) target = $region8
  $region5: #{_lambda_.3} parent=0 // loop_body
    %s20 = ssub.s32 %s15, 1
    %s21 = ssub.s32 %s15, 2
    %s28 = sadd.s32 1, %s23
    %p29 = scmp.ge.s32.totalorder %s28, 2
    %s30 = scalar_select %p29, 0, %s28
    %s31 = sadd.s32 1, %s22
    %s32 = scalar_select %p29, %s31, %s22
    %p33 = scmp.ge.s32.totalorder %s32, 2
    %s34 = scalar_select %p33, 0, %s32
    %s35 = ssub.s32 %s22, %s34
    %s36 = ssub.s32 %s23, %s30
    %s37 = sor.u32 %s35, %s36
    %p38 = scmp.eq.s32.totalorder %s37, 0
    %s40 = sadd.s32 %s39, 1
    %s41 = scalar_select %p38, %s39, %s40
    %p44 = pneg %p38
    %p45 = scmp.eq.s32.totalorder %s15, 3
    %p46 = por %p44, %p45
    %p47 = scmp.ne.s32.totalorder %s39, %s42
    %p48 = scmp.eq.s32.totalorder %s15, 0
    %p49 = por %p47, %p48
    %p50 = scmp.ne.s32.totalorder %s39, %s42
    %p51 = scmp.eq.s32.totalorder %s20, 3
    %p52 = por %p50, %p51
    %p53 = scmp.ne.s32.totalorder %s42, %s43
    %p54 = scmp.eq.s32.totalorder %s20, 0
    %p55 = por %p53, %p54
    %p56 = scmp.ne.s32.totalorder %s42, %s43
    %p57 = scmp.eq.s32.totalorder %s21, 3
    %p58 = por %p56, %p57
    %p60 = scmp.ne.s32.totalorder %s43, %s59
    %p61 = scmp.eq.s32.totalorder %s21, 0
    %p62 = por %p60, %p61
    %s63 = smul.u32 %s23, 8
    %s64 = ssub.s32 %s63, 1
    %p65 = scmp.gt.s32.totalorder %s64, 0
    %s66 = scalar_select %p65, %s64, 0
    %s67 = smul.u32 %s30, 8
    %s68 = ssub.s32 %s67, 1
    %p69 = scmp.gt.s32.totalorder %s68, 0
    %s70 = scalar_select %p69, %s68, 0
    %s71 = ssub.s32 %s22, %s34
    %s72 = ssub.s32 %s66, %s70
    %s73 = sor.u32 %s71, %s72
    %p74 = scmp.eq.s32.totalorder %s73, 0
    %s76 = sadd.s32 %s75, 1
    %s77 = scalar_select %p74, %s75, %s76
    %p80 = pneg %p74
    %p81 = scmp.eq.s32.totalorder %s15, 3
    %p82 = por %p80, %p81
    %p83 = scmp.ne.s32.totalorder %s75, %s78
    %p84 = scmp.eq.s32.totalorder %s15, 0
    %p85 = por %p83, %p84
    %p86 = scmp.ne.s32.totalorder %s75, %s78
    %p87 = scmp.eq.s32.totalorder %s20, 3
    %p88 = por %p86, %p87
    %p89 = scmp.ne.s32.totalorder %s78, %s79
    %p90 = scmp.eq.s32.totalorder %s20, 0
    %p91 = por %p89, %p90
    %p92 = scmp.ne.s32.totalorder %s78, %s79
    %p93 = scmp.eq.s32.totalorder %s21, 3
    %p94 = por %p92, %p93
    %p96 = scmp.ne.s32.totalorder %s79, %s95
    %p97 = scmp.eq.s32.totalorder %s21, 0
    %p98 = por %p96, %p97
    %s99 = smul.u32 %s23, 8
    %s100 = sadd.s32 %s99, 8
    %p101 = scmp.lt.s32.totalorder %s100, 15
    %s102 = scalar_select %p101, %s100, 15
    %s103 = smul.u32 %s30, 8
    %s104 = sadd.s32 %s103, 8
    %p105 = scmp.lt.s32.totalorder %s104, 15
    %s106 = scalar_select %p105, %s104, 15
    %s107 = ssub.s32 %s22, %s34
    %s108 = ssub.s32 %s102, %s106
    %s109 = sor.u32 %s107, %s108
    %p110 = scmp.eq.s32.totalorder %s109, 0
    %s112 = sadd.s32 %s111, 1
    %s113 = scalar_select %p110, %s111, %s112
    %p116 = pneg %p110
    %p117 = scmp.eq.s32.totalorder %s15, 3
    %p118 = por %p116, %p117
    %p119 = scmp.ne.s32.totalorder %s111, %s114
    %p120 = scmp.eq.s32.totalorder %s15, 0
    %p121 = por %p119, %p120
    %p122 = scmp.ne.s32.totalorder %s111, %s114
    %p123 = scmp.eq.s32.totalorder %s20, 3
    %p124 = por %p122, %p123
    %p125 = scmp.ne.s32.totalorder %s114, %s115
    %p126 = scmp.eq.s32.totalorder %s20, 0
    %p127 = por %p125, %p126
    %p128 = scmp.ne.s32.totalorder %s114, %s115
    %p129 = scmp.eq.s32.totalorder %s21, 3
    %p130 = por %p128, %p129
    %p132 = scmp.ne.s32.totalorder %s115, %s131
    %p133 = scmp.eq.s32.totalorder %s21, 0
    %p134 = por %p132, %p133
    %s135 = ssub.s32 %s22, %s34
    %s136 = ssub.s32 %s23, %s30
    %s137 = sor.u32 %s135, %s136
    %p138 = scmp.eq.s32.totalorder %s137, 0
    %s140 = sadd.s32 %s139, 1
    %s141 = scalar_select %p138, %s139, %s140
    %p144 = pneg %p138
    %p145 = scmp.eq.s32.totalorder %s15, 3
    %p146 = por %p144, %p145
    %p147 = scmp.ne.s32.totalorder %s139, %s142
    %p148 = scmp.eq.s32.totalorder %s15, 0
    %p149 = por %p147, %p148
    %p150 = scmp.ne.s32.totalorder %s139, %s142
    %p151 = scmp.eq.s32.totalorder %s20, 3
    %p152 = por %p150, %p151
    %p153 = scmp.ne.s32.totalorder %s142, %s143
    %p154 = scmp.eq.s32.totalorder %s20, 0
    %p155 = por %p153, %p154
    %p156 = scmp.ne.s32.totalorder %s142, %s143
    %p157 = scmp.eq.s32.totalorder %s21, 3
    %p158 = por %p156, %p157
    %p160 = scmp.ne.s32.totalorder %s143, %s159
    %p161 = scmp.eq.s32.totalorder %s21, 0
    %p162 = por %p160, %p161
    %s163 = smul.u32 %s23, 8
    %s164 = ssub.s32 %s163, 1
    %p165 = scmp.gt.s32.totalorder %s164, 0
    %s166 = scalar_select %p165, %s164, 0
    %s167 = smul.u32 %s30, 8
    %s168 = ssub.s32 %s167, 1
    %p169 = scmp.gt.s32.totalorder %s168, 0
    %s170 = scalar_select %p169, %s168, 0
    %s171 = ssub.s32 %s22, %s34
    %s172 = ssub.s32 %s166, %s170
    %s173 = sor.u32 %s171, %s172
    %p174 = scmp.eq.s32.totalorder %s173, 0
    %s176 = sadd.s32 %s175, 1
    %s177 = scalar_select %p174, %s175, %s176
    %p180 = pneg %p174
    %p181 = scmp.eq.s32.totalorder %s15, 3
    %p182 = por %p180, %p181
    %p183 = scmp.ne.s32.totalorder %s175, %s178
    %p184 = scmp.eq.s32.totalorder %s15, 0
    %p185 = por %p183, %p184
    %p186 = scmp.ne.s32.totalorder %s175, %s178
    %p187 = scmp.eq.s32.totalorder %s20, 3
    %p188 = por %p186, %p187
    %p189 = scmp.ne.s32.totalorder %s178, %s179
    %p190 = scmp.eq.s32.totalorder %s20, 0
    %p191 = por %p189, %p190
    %p192 = scmp.ne.s32.totalorder %s178, %s179
    %p193 = scmp.eq.s32.totalorder %s21, 3
    %p194 = por %p192, %p193
    %p196 = scmp.ne.s32.totalorder %s179, %s195
    %p197 = scmp.eq.s32.totalorder %s21, 0
    %p198 = por %p196, %p197
    %s199 = smul.u32 %s23, 8
    %s200 = sadd.s32 %s199, 8
    %p201 = scmp.lt.s32.totalorder %s200, 15
    %s202 = scalar_select %p201, %s200, 15
    %s203 = smul.u32 %s30, 8
    %s204 = sadd.s32 %s203, 8
    %p205 = scmp.lt.s32.totalorder %s204, 15
    %s206 = scalar_select %p205, %s204, 15
    %s207 = ssub.s32 %s22, %s34
    %s208 = ssub.s32 %s202, %s206
    %s209 = sor.u32 %s207, %s208
    %p210 = scmp.eq.s32.totalorder %s209, 0
    %s212 = sadd.s32 %s211, 1
    %s213 = scalar_select %p210, %s211, %s212
    %p216 = pneg %p210
    %p217 = scmp.eq.s32.totalorder %s15, 3
    %p218 = por %p216, %p217
    %p219 = scmp.ne.s32.totalorder %s211, %s214
    %p220 = scmp.eq.s32.totalorder %s15, 0
    %p221 = por %p219, %p220
    %p222 = scmp.ne.s32.totalorder %s211, %s214
    %p223 = scmp.eq.s32.totalorder %s20, 3
    %p224 = por %p222, %p223
    %p225 = scmp.ne.s32.totalorder %s214, %s215
    %p226 = scmp.eq.s32.totalorder %s20, 0
    %p227 = por %p225, %p226
    %p228 = scmp.ne.s32.totalorder %s214, %s215
    %p229 = scmp.eq.s32.totalorder %s21, 3
    %p230 = por %p228, %p229
    %p232 = scmp.ne.s32.totalorder %s215, %s231
    %p233 = scmp.eq.s32.totalorder %s21, 0
    %p234 = por %p232, %p233
    %s236 = sadd.s32 %s235, 1
    %p239 = scmp.eq.s32.totalorder %s15, 3
    %p240 = scmp.ne.s32.totalorder %s235, %s237
    %p241 = scmp.eq.s32.totalorder %s15, 0
    %p242 = por %p240, %p241
    %p243 = scmp.ne.s32.totalorder %s235, %s237
    %p244 = scmp.eq.s32.totalorder %s20, 3
    %p245 = por %p243, %p244
    %p246 = scmp.ne.s32.totalorder %s237, %s238
    %p247 = scmp.eq.s32.totalorder %s20, 0
    %p248 = por %p246, %p247
    %p249 = scmp.ne.s32.totalorder %s237, %s238
    %p250 = scmp.eq.s32.totalorder %s21, 3
    %p251 = por %p249, %p250
    %p253 = scmp.ne.s32.totalorder %s238, %s252
    %p254 = scmp.eq.s32.totalorder %s21, 0
    %p255 = por %p253, %p254
    %s256 = ssub.s32 %s22, %s34
    %s257 = ssub.s32 %s23, %s30
    %s258 = sor.u32 %s256, %s257
    %p259 = scmp.eq.s32.totalorder %s258, 0
    %s261 = sadd.s32 %s260, 1
    %s262 = scalar_select %p259, %s260, %s261
    %p265 = pneg %p259
    %p266 = scmp.eq.s32.totalorder %s15, 3
    %p267 = por %p265, %p266
    %p268 = scmp.ne.s32.totalorder %s260, %s263
    %p269 = scmp.eq.s32.totalorder %s15, 0
    %p270 = por %p268, %p269
    %p271 = scmp.ne.s32.totalorder %s260, %s263
    %p272 = scmp.eq.s32.totalorder %s20, 3
    %p273 = por %p271, %p272
    %p274 = scmp.ne.s32.totalorder %s263, %s264
    %p275 = scmp.eq.s32.totalorder %s20, 0
    %p276 = por %p274, %p275
    %p277 = scmp.ne.s32.totalorder %s263, %s264
    %p278 = scmp.eq.s32.totalorder %s21, 3
    %p279 = por %p277, %p278
    %p281 = scmp.ne.s32.totalorder %s264, %s280
    %p282 = scmp.eq.s32.totalorder %s21, 0
    %p283 = por %p281, %p282
    %s284 = ssub.s32 %s22, %s34
    %s285 = ssub.s32 %s23, %s30
    %s286 = sor.u32 %s284, %s285
    %p287 = scmp.eq.s32.totalorder %s286, 0
    %s289 = sadd.s32 %s288, 1
    %s290 = scalar_select %p287, %s288, %s289
    %p293 = pneg %p287
    %p294 = scmp.eq.s32.totalorder %s15, 3
    %p295 = por %p293, %p294
    %p296 = scmp.ne.s32.totalorder %s288, %s291
    %p297 = scmp.eq.s32.totalorder %s15, 0
    %p298 = por %p296, %p297
    %p299 = scmp.ne.s32.totalorder %s288, %s291
    %p300 = scmp.eq.s32.totalorder %s20, 3
    %p301 = por %p299, %p300
    %p302 = scmp.ne.s32.totalorder %s291, %s292
    %p303 = scmp.eq.s32.totalorder %s20, 0
    %p304 = por %p302, %p303
    %p305 = scmp.ne.s32.totalorder %s291, %s292
    %p306 = scmp.eq.s32.totalorder %s21, 3
    %p307 = por %p305, %p306
    %p309 = scmp.ne.s32.totalorder %s292, %s308
    %p310 = scmp.eq.s32.totalorder %s21, 0
    %p311 = por %p309, %p310
    %p312 = scmp.le.s32.totalorder 1, %s15
    %p313 = scmp.lt.s32.totalorder %s15, 5
    %p314 = pnand %p312, %p313
    %p315 = pneg %p314
    // Predicated region
    $region9: #{_lambda_.3} parent=5 // pred_check
      _
    $region10: #{_lambda_.3} parent=5 // pred_check_branch
      %317 = sbr.rel (%p314) target = $region12
    $region11: #{_lambda_.3} parent=5 // pred_region
      %s318 = ssub.s32 %s15, 1
      // Predicated region
      $region13: #{_lambda_.3} parent=11 // pred_check
        %p319 = pneg %p248
      $region14: #{_lambda_.3} parent=11 // pred_check_branch
        %321 = sbr.rel (%p319) target = $region16
      $region15: #{_lambda_.3} parent=11 // pred_region
        _
      $region16: #{_lambda_.3} parent=11 // pred_fallthru
        _
    $region12: #{_lambda_.3} parent=5 // pred_fallthru
      _
    %p322 = scmp.lt.s32.totalorder %s15, 4
    // Predicated region
    $region17: #{_lambda_.3} parent=5 // pred_check
      %p323 = pneg %p322
    $region18: #{_lambda_.3} parent=5 // pred_check_branch
      %325 = sbr.rel (%p323) target = $region20
    $region19: #{_lambda_.3} parent=5 // pred_region
      // Predicated region
      $region21: #{_lambda_.3} parent=19 // pred_check
        %p326 = pneg %p49
      $region22: #{_lambda_.3} parent=19 // pred_check_branch
        %328 = sbr.rel (%p326) target = $region24
      $region23: #{_lambda_.3} parent=19 // pred_region
        %s329 = smul.u32 8, %s23
        %p330 = scmp.lt.s32.totalorder %s22, 1
        %s331 = scalar_select %p330, %s22, 1
        %p332 = scmp.lt.s32.totalorder %s329, 15
        %s333 = scalar_select %p332, %s329, 15
        %s334 = smul.addr %s333, 2
        %s335 = smul.addr %s331, 32
        %s336 = sadd.s32 %s334, %s335
        %s337 = smul.addr %s336, 4
        %s338 = scalar_lea.vmem %s0, %s337
        %s339 = smul.u32 8, %s23
      $region24: #{_lambda_.3} parent=19 // pred_fallthru
        _
      // Predicated region
      $region25: #{_lambda_.3} parent=19 // pred_check
        %p340 = pneg %p85
      $region26: #{_lambda_.3} parent=19 // pred_check_branch
        %342 = sbr.rel (%p340) target = $region28
      $region27: #{_lambda_.3} parent=19 // pred_region
        %s343 = smul.u32 %s23, 8
        %s344 = ssub.s32 %s343, 1
        %p345 = scmp.gt.s32.totalorder %s344, 0
        %s346 = scalar_select %p345, %s344, 0
        %p347 = scmp.lt.s32.totalorder %s22, 1
        %s348 = scalar_select %p347, %s22, 1
        %p349 = scmp.lt.s32.totalorder %s346, 15
        %s350 = scalar_select %p349, %s346, 15
        %s351 = smul.addr %s350, 2
        %s352 = smul.addr %s348, 32
        %s353 = sadd.s32 %s351, %s352
        %s354 = smul.addr %s353, 4
        %s355 = scalar_lea.vmem %s1, %s354
        %s356 = smul.u32 %s23, 8
        %s357 = ssub.s32 %s356, 1
        %p358 = scmp.gt.s32.totalorder %s357, 0
        %s359 = scalar_select %p358, %s357, 0
      $region28: #{_lambda_.3} parent=19 // pred_fallthru
        _
      // Predicated region
      $region29: #{_lambda_.3} parent=19 // pred_check
        %p360 = pneg %p121
      $region30: #{_lambda_.3} parent=19 // pred_check_branch
        %362 = sbr.rel (%p360) target = $region32
      $region31: #{_lambda_.3} parent=19 // pred_region
        %s363 = smul.u32 %s23, 8
        %s364 = sadd.s32 %s363, 8
        %p365 = scmp.lt.s32.totalorder %s364, 15
        %s366 = scalar_select %p365, %s364, 15
        %p367 = scmp.lt.s32.totalorder %s22, 1
        %s368 = scalar_select %p367, %s22, 1
        %p369 = scmp.lt.s32.totalorder %s366, 15
        %s370 = scalar_select %p369, %s366, 15
        %s371 = smul.addr %s370, 2
        %s372 = smul.addr %s368, 32
        %s373 = sadd.s32 %s371, %s372
        %s374 = smul.addr %s373, 4
        %s375 = scalar_lea.vmem %s2, %s374
        %s376 = smul.u32 %s23, 8
        %s377 = sadd.s32 %s376, 8
        %p378 = scmp.lt.s32.totalorder %s377, 15
        %s379 = scalar_select %p378, %s377, 15
      $region32: #{_lambda_.3} parent=19 // pred_fallthru
        _
      // Predicated region
      $region33: #{_lambda_.3} parent=19 // pred_check
        %p380 = pneg %p149
      $region34: #{_lambda_.3} parent=19 // pred_check_branch
        %382 = sbr.rel (%p380) target = $region36
      $region35: #{_lambda_.3} parent=19 // pred_region
        %s383 = smul.u32 8, %s23
        %p384 = scmp.lt.s32.totalorder %s22, 1
        %s385 = scalar_select %p384, %s22, 1
        %p386 = scmp.lt.s32.totalorder %s383, 15
        %s387 = scalar_select %p386, %s383, 15
        %s388 = smul.addr %s387, 2
        %s389 = smul.addr %s385, 32
        %s390 = sadd.s32 %s388, %s389
        %s391 = smul.addr %s390, 4
        %s392 = scalar_lea.vmem %s3, %s391
        %s393 = smul.u32 8, %s23
      $region36: #{_lambda_.3} parent=19 // pred_fallthru
        _
      // Predicated region
      $region37: #{_lambda_.3} parent=19 // pred_check
        %p394 = pneg %p185
      $region38: #{_lambda_.3} parent=19 // pred_check_branch
        %396 = sbr.rel (%p394) target = $region40
      $region39: #{_lambda_.3} parent=19 // pred_region
        %s397 = smul.u32 %s23, 8
        %s398 = ssub.s32 %s397, 1
        %p399 = scmp.gt.s32.totalorder %s398, 0
        %s400 = scalar_select %p399, %s398, 0
        %p401 = scmp.lt.s32.totalorder %s22, 1
        %s402 = scalar_select %p401, %s22, 1
        %p403 = scmp.lt.s32.totalorder %s400, 15
        %s404 = scalar_select %p403, %s400, 15
        %s405 = smul.addr %s404, 2
        %s406 = smul.addr %s402, 32
        %s407 = sadd.s32 %s405, %s406
        %s408 = smul.addr %s407, 4
        %s409 = scalar_lea.vmem %s4, %s408
        %s410 = smul.u32 %s23, 8
        %s411 = ssub.s32 %s410, 1
        %p412 = scmp.gt.s32.totalorder %s411, 0
        %s413 = scalar_select %p412, %s411, 0
      $region40: #{_lambda_.3} parent=19 // pred_fallthru
        _
      // Predicated region
      $region41: #{_lambda_.3} parent=19 // pred_check
        %p414 = pneg %p221
      $region42: #{_lambda_.3} parent=19 // pred_check_branch
        %416 = sbr.rel (%p414) target = $region44
      $region43: #{_lambda_.3} parent=19 // pred_region
        %s417 = smul.u32 %s23, 8
        %s418 = sadd.s32 %s417, 8
        %p419 = scmp.lt.s32.totalorder %s418, 15
        %s420 = scalar_select %p419, %s418, 15
        %p421 = scmp.lt.s32.totalorder %s22, 1
        %s422 = scalar_select %p421, %s22, 1
        %p423 = scmp.lt.s32.totalorder %s420, 15
        %s424 = scalar_select %p423, %s420, 15
        %s425 = smul.addr %s424, 2
        %s426 = smul.addr %s422, 32
        %s427 = sadd.s32 %s425, %s426
        %s428 = smul.addr %s427, 4
        %s429 = scalar_lea.vmem %s5, %s428
        %s430 = smul.u32 %s23, 8
        %s431 = sadd.s32 %s430, 8
        %p432 = scmp.lt.s32.totalorder %s431, 15
        %s433 = scalar_select %p432, %s431, 15
      $region44: #{_lambda_.3} parent=19 // pred_fallthru
        _
    $region20: #{_lambda_.3} parent=5 // pred_fallthru
      _
    %p434 = scmp.le.s32.totalorder 1, %s15
    %p435 = scmp.lt.s32.totalorder %s15, 5
    %p436 = pnand %p434, %p435
    %p437 = pneg %p436
    // Predicated region
    $region45: #{_lambda_.3} parent=5 // pred_check
      _
    $region46: #{_lambda_.3} parent=5 // pred_check_branch
      %439 = sbr.rel (%p436) target = $region48
    $region47: #{_lambda_.3} parent=5 // pred_region
      %s440 = ssub.s32 %s15, 1
      %s441 = smul.u32 8, %s25
      %p442 = scmp.lt.s32.totalorder %s24, 1
      %s443 = scalar_select %p442, %s24, 1
      %p444 = scmp.lt.s32.totalorder %s441, 15
      %s445 = scalar_select %p444, %s441, 15
      %s446 = smul.addr %s445, 2
      %s447 = smul.addr %s443, 32
      %s448 = sadd.s32 %s446, %s447
      %s449 = smul.addr %s448, 4
      %s450 = scalar_lea.vmem %s0, %s449
      %p451 = pneg %p55
      %p452 = pneg %p52
      %s453 = smul.u32 %s25, 8
      %s454 = ssub.s32 %s453, 1
      %p455 = scmp.gt.s32.totalorder %s454, 0
      %s456 = scalar_select %p455, %s454, 0
      %p457 = scmp.lt.s32.totalorder %s24, 1
      %s458 = scalar_select %p457, %s24, 1
      %p459 = scmp.lt.s32.totalorder %s456, 15
      %s460 = scalar_select %p459, %s456, 15
      %s461 = smul.addr %s460, 2
      %s462 = smul.addr %s458, 32
      %s463 = sadd.s32 %s461, %s462
      %s464 = smul.addr %s463, 4
      %s465 = scalar_lea.vmem %s1, %s464
      %p466 = pneg %p91
      %p467 = pneg %p88
      %s468 = smul.u32 %s25, 8
      %s469 = sadd.s32 %s468, 8
      %p470 = scmp.lt.s32.totalorder %s469, 15
      %s471 = scalar_select %p470, %s469, 15
      %p472 = scmp.lt.s32.totalorder %s24, 1
      %s473 = scalar_select %p472, %s24, 1
      %p474 = scmp.lt.s32.totalorder %s471, 15
      %s475 = scalar_select %p474, %s471, 15
      %s476 = smul.addr %s475, 2
      %s477 = smul.addr %s473, 32
      %s478 = sadd.s32 %s476, %s477
      %s479 = smul.addr %s478, 4
      %s480 = scalar_lea.vmem %s2, %s479
      %p481 = pneg %p127
      %p482 = pneg %p124
      %s483 = smul.u32 8, %s25
      %p484 = scmp.lt.s32.totalorder %s24, 1
      %s485 = scalar_select %p484, %s24, 1
      %p486 = scmp.lt.s32.totalorder %s483, 15
      %s487 = scalar_select %p486, %s483, 15
      %s488 = smul.addr %s487, 2
      %s489 = smul.addr %s485, 32
      %s490 = sadd.s32 %s488, %s489
      %s491 = smul.addr %s490, 4
      %s492 = scalar_lea.vmem %s3, %s491
      %p493 = pneg %p155
      %p494 = pneg %p152
      %s495 = smul.u32 %s25, 8
      %s496 = ssub.s32 %s495, 1
      %p497 = scmp.gt.s32.totalorder %s496, 0
      %s498 = scalar_select %p497, %s496, 0
      %p499 = scmp.lt.s32.totalorder %s24, 1
      %s500 = scalar_select %p499, %s24, 1
      %p501 = scmp.lt.s32.totalorder %s498, 15
      %s502 = scalar_select %p501, %s498, 15
      %s503 = smul.addr %s502, 2
      %s504 = smul.addr %s500, 32
      %s505 = sadd.s32 %s503, %s504
      %s506 = smul.addr %s505, 4
      %s507 = scalar_lea.vmem %s4, %s506
      %p508 = pneg %p191
      %p509 = pneg %p188
      %s510 = smul.u32 %s25, 8
      %s511 = sadd.s32 %s510, 8
      %p512 = scmp.lt.s32.totalorder %s511, 15
      %s513 = scalar_select %p512, %s511, 15
      %p514 = scmp.lt.s32.totalorder %s24, 1
      %s515 = scalar_select %p514, %s24, 1
      %p516 = scmp.lt.s32.totalorder %s513, 15
      %s517 = scalar_select %p516, %s513, 15
      %s518 = smul.addr %s517, 2
      %s519 = smul.addr %s515, 32
      %s520 = sadd.s32 %s518, %s519
      %s521 = smul.addr %s520, 4
      %s522 = scalar_lea.vmem %s5, %s521
      %p523 = pneg %p227
      %p524 = pneg %p224
      %p525 = pneg %p248
      %p526 = pneg %p245
      %p527 = pneg %p276
      %p528 = pneg %p273
      %s529 = smul.u32 8, %s25
      %p530 = scmp.lt.s32.totalorder %s24, 1
      %s531 = scalar_select %p530, %s24, 1
      %p532 = scmp.lt.s32.totalorder %s529, 15
      %s533 = scalar_select %p532, %s529, 15
      %s534 = smul.addr %s533, 2
      %s535 = smul.addr %s531, 32
      %s536 = sadd.s32 %s534, %s535
      %s537 = smul.addr %s536, 4
      %s538 = scalar_lea.vmem %s7, %s537
      %p539 = pneg %p304
      %p540 = pneg %p301
      %p541 = scmp.lt.s32.totalorder %s24, 1
      %s542 = scalar_select %p541, %s24, 1
      %p543 = scmp.lt.s32.totalorder %s25, 1
      %s544 = scalar_select %p543, %s25, 1
      %s545 = smul.addr %s542, 2
      %s546 = sadd.s32 %s544, %s545
      %s547 = smul.addr %s546, 2
      %s548 = scalar_lea.vmem %s8, %s547
      %s549 = smul.u32 8, %s25
      %p550 = scmp.lt.s32.totalorder %s24, 1
      %s551 = scalar_select %p550, %s24, 1
      %p552 = scmp.lt.s32.totalorder %s549, 15
      %s553 = scalar_select %p552, %s549, 15
      %s554 = smul.addr %s553, 2
      %s555 = smul.addr %s551, 32
      %s556 = sadd.s32 %s554, %s555
      %s557 = smul.addr %s556, 4
      %s558 = scalar_lea.vmem %s0, %s557
      %s559 = smul.u32 8, %s25
      %s560 = smul.u32 %s25, 8
      %s561 = ssub.s32 %s560, 1
      %p562 = scmp.gt.s32.totalorder %s561, 0
      %s563 = scalar_select %p562, %s561, 0
      %p564 = scmp.lt.s32.totalorder %s24, 1
      %s565 = scalar_select %p564, %s24, 1
      %p566 = scmp.lt.s32.totalorder %s563, 15
      %s567 = scalar_select %p566, %s563, 15
      %s568 = smul.addr %s567, 2
      %s569 = smul.addr %s565, 32
      %s570 = sadd.s32 %s568, %s569
      %s571 = smul.addr %s570, 4
      %s572 = scalar_lea.vmem %s1, %s571
      %s573 = smul.u32 %s25, 8
      %s574 = ssub.s32 %s573, 1
      %p575 = scmp.gt.s32.totalorder %s574, 0
      %s576 = scalar_select %p575, %s574, 0
      %s577 = smul.u32 %s25, 8
      %s578 = sadd.s32 %s577, 8
      %p579 = scmp.lt.s32.totalorder %s578, 15
      %s580 = scalar_select %p579, %s578, 15
      %p581 = scmp.lt.s32.totalorder %s24, 1
      %s582 = scalar_select %p581, %s24, 1
      %p583 = scmp.lt.s32.totalorder %s580, 15
      %s584 = scalar_select %p583, %s580, 15
      %s585 = smul.addr %s584, 2
      %s586 = smul.addr %s582, 32
      %s587 = sadd.s32 %s585, %s586
      %s588 = smul.addr %s587, 4
      %s589 = scalar_lea.vmem %s2, %s588
      %s590 = smul.u32 %s25, 8
      %s591 = sadd.s32 %s590, 8
      %p592 = scmp.lt.s32.totalorder %s591, 15
      %s593 = scalar_select %p592, %s591, 15
      %s594 = smul.u32 8, %s25
      %p595 = scmp.lt.s32.totalorder %s24, 1
      %s596 = scalar_select %p595, %s24, 1
      %p597 = scmp.lt.s32.totalorder %s594, 15
      %s598 = scalar_select %p597, %s594, 15
      %s599 = smul.addr %s598, 2
      %s600 = smul.addr %s596, 32
      %s601 = sadd.s32 %s599, %s600
      %s602 = smul.addr %s601, 4
      %s603 = scalar_lea.vmem %s3, %s602
      %s604 = smul.u32 8, %s25
      %s605 = smul.u32 %s25, 8
      %s606 = ssub.s32 %s605, 1
      %p607 = scmp.gt.s32.totalorder %s606, 0
      %s608 = scalar_select %p607, %s606, 0
      %p609 = scmp.lt.s32.totalorder %s24, 1
      %s610 = scalar_select %p609, %s24, 1
      %p611 = scmp.lt.s32.totalorder %s608, 15
      %s612 = scalar_select %p611, %s608, 15
      %s613 = smul.addr %s612, 2
      %s614 = smul.addr %s610, 32
      %s615 = sadd.s32 %s613, %s614
      %s616 = smul.addr %s615, 4
      %s617 = scalar_lea.vmem %s4, %s616
      %s618 = smul.u32 %s25, 8
      %s619 = ssub.s32 %s618, 1
      %p620 = scmp.gt.s32.totalorder %s619, 0
      %s621 = scalar_select %p620, %s619, 0
      %s622 = smul.u32 %s25, 8
      %s623 = sadd.s32 %s622, 8
      %p624 = scmp.lt.s32.totalorder %s623, 15
      %s625 = scalar_select %p624, %s623, 15
      %p626 = scmp.lt.s32.totalorder %s24, 1
      %s627 = scalar_select %p626, %s24, 1
      %p628 = scmp.lt.s32.totalorder %s625, 15
      %s629 = scalar_select %p628, %s625, 15
      %s630 = smul.addr %s629, 2
      %s631 = smul.addr %s627, 32
      %s632 = sadd.s32 %s630, %s631
      %s633 = smul.addr %s632, 4
      %s634 = scalar_lea.vmem %s5, %s633
      %s635 = smul.u32 %s25, 8
      %s636 = sadd.s32 %s635, 8
      %p637 = scmp.lt.s32.totalorder %s636, 15
      %s638 = scalar_select %p637, %s636, 15
      %s639 = smul.u32 8, %s25
      %p640 = scmp.lt.s32.totalorder %s24, 1
      %s641 = scalar_select %p640, %s24, 1
      %p642 = scmp.lt.s32.totalorder %s639, 15
      %s643 = scalar_select %p642, %s639, 15
      %s644 = smul.addr %s643, 2
      %s645 = smul.addr %s641, 32
      %s646 = sadd.s32 %s644, %s645
      %s647 = smul.addr %s646, 4
      %s648 = scalar_lea.vmem %s7, %s647
      %s649 = smul.u32 8, %s25
      %p650 = scmp.lt.s32.totalorder %s24, 1
      %s651 = scalar_select %p650, %s24, 1
      %p652 = scmp.lt.s32.totalorder %s25, 1
      %s653 = scalar_select %p652, %s25, 1
      %s654 = smul.addr %s651, 2
      %s655 = sadd.s32 %s653, %s654
      %s656 = smul.addr %s655, 2
      %s657 = scalar_lea.vmem %s8, %s656
      %s659 = smul.u32 %s25, 8
      %s660 = ssub.s32 %s659, 1
      %v661 = vstv %s660
      %v662 = vadd.s32 %v661, 1
      %v663 = vadd.s32 %v661, 2
      %v664 = vadd.s32 %v661, 3
      %v665 = vadd.s32 %v661, 4
      %v666 = vadd.s32 %v661, 5
      %v667 = vadd.s32 %v661, 6
      %v668 = vadd.s32 %v661, 7
      %v669 = vadd.s32 %v661, 8
      %v670 = vadd.s32 %v661, 9
      %vm671 = vcmp.ge.s32.totalorder %v661, 0
      %vm672 = vcmp.ge.s32.totalorder %v662, 0
      %vm673 = vcmp.ge.s32.totalorder %v663, 0
      %vm674 = vcmp.ge.s32.totalorder %v664, 0
      %vm675 = vcmp.ge.s32.totalorder %v665, 0
      %vm676 = vcmp.ge.s32.totalorder %v666, 0
      %vm677 = vcmp.ge.s32.totalorder %v667, 0
      %vm678 = vcmp.ge.s32.totalorder %v668, 0
      %vm679 = vcmp.ge.s32.totalorder %v669, 0
      %vm680 = vcmp.ge.s32.totalorder %v670, 0
      %vm681 = vcmp.lt.s32.totalorder %v661, 14
      %vm682 = vcmp.lt.s32.totalorder %v662, 14
      %vm683 = vcmp.lt.s32.totalorder %v663, 14
      %vm684 = vcmp.lt.s32.totalorder %v664, 14
      %vm685 = vcmp.lt.s32.totalorder %v665, 14
      %vm686 = vcmp.lt.s32.totalorder %v666, 14
      %vm687 = vcmp.lt.s32.totalorder %v667, 14
      %vm688 = vcmp.lt.s32.totalorder %v668, 14
      %vm689 = vcmp.lt.s32.totalorder %v669, 14
      %vm690 = vcmp.lt.s32.totalorder %v670, 14
      %vm691 = vmand %vm671, %vm681
      %vm692 = vmand %vm672, %vm682
      %vm693 = vmand %vm673, %vm683
      %vm694 = vmand %vm674, %vm684
      %vm695 = vmand %vm675, %vm685
      %vm696 = vmand %vm676, %vm686
      %vm697 = vmand %vm677, %vm687
      %vm698 = vmand %vm678, %vm688
      %vm699 = vmand %vm679, %vm689
      %vm700 = vmand %vm680, %vm690
      %v701 = vld [vmem:[%s558] sm:$0xf]
      %v702 = vld [vmem:[%s558 + $0x4] sm:$0xf]
      %v703 = vld [vmem:[%s558 + $0x8] sm:$0xf]
      %v704 = vld [vmem:[%s558 + $0xc] sm:$0xf]
      %v705 = vld [vmem:[%s558 + $0x10] sm:$0xf]
      %v706 = vld [vmem:[%s558 + $0x14] sm:$0xf]
      %v707 = vld [vmem:[%s558 + $0x18] sm:$0xf]
      %v708 = vld [vmem:[%s558 + $0x1c] sm:$0xf]
      %v709 = vld [vmem:[%s558 + $0x20] sm:$0xf]
      %v710 = vld [vmem:[%s558 + $0x24] sm:$0xf]
      %v711 = vld [vmem:[%s558 + $0x28] sm:$0xf]
      %v712 = vld [vmem:[%s558 + $0x2c] sm:$0xf]
      %v713 = vld [vmem:[%s558 + $0x30] sm:$0xf]
      %v714 = vld [vmem:[%s558 + $0x34] sm:$0xf]
      %v715 = vld [vmem:[%s558 + $0x38] sm:$0xf]
      %v716 = vld [vmem:[%s558 + $0x3c] sm:$0xf]
      %v717 = vld [vmem:[%s572] sm:$0xf]
      %v718 = vld [vmem:[%s572 + $0x4] sm:$0xf]
      %v719 = vld [vmem:[%s589] sm:$0xf]
      %v720 = vld [vmem:[%s589 + $0x4] sm:$0xf]
      %v721 = vsel %vm691, 1, 0
      %v722 = vsel %vm692, 1, 0
      %v723 = vsel %vm693, 1, 0
      %v724 = vsel %vm694, 1, 0
      %v725 = vsel %vm695, 1, 0
      %v726 = vsel %vm696, 1, 0
      %v727 = vsel %vm697, 1, 0
      %v728 = vsel %vm698, 1, 0
      %v729 = vsel %vm699, 1, 0
      %v730 = vsel %vm700, 1, 0
      %vm731 = vcmp.eq.s32.totalorder %v721, 1
      %vm732 = vcmp.eq.s32.totalorder %v722, 1
      %vm733 = vcmp.eq.s32.totalorder %v723, 1
      %vm734 = vcmp.eq.s32.totalorder %v724, 1
      %vm735 = vcmp.eq.s32.totalorder %v725, 1
      %vm736 = vcmp.eq.s32.totalorder %v726, 1
      %vm737 = vcmp.eq.s32.totalorder %v727, 1
      %vm738 = vcmp.eq.s32.totalorder %v728, 1
      %vm739 = vcmp.eq.s32.totalorder %v729, 1
      %vm740 = vcmp.eq.s32.totalorder %v730, 1
      %v741 = vsel %vm731, %v717, 0
      %v742 = vsel %vm731, %v718, 0
      %v743 = vsel %vm732, %v701, 0
      %v744 = vsel %vm732, %v702, 0
      %v745 = vsel %vm733, %v703, 0
      %v746 = vsel %vm733, %v704, 0
      %v747 = vsel %vm734, %v705, 0
      %v748 = vsel %vm734, %v706, 0
      %v749 = vsel %vm735, %v707, 0
      %v750 = vsel %vm735, %v708, 0
      %v751 = vsel %vm736, %v709, 0
      %v752 = vsel %vm736, %v710, 0
      %v753 = vsel %vm737, %v711, 0
      %v754 = vsel %vm737, %v712, 0
      %v755 = vsel %vm738, %v713, 0
      %v756 = vsel %vm738, %v714, 0
      %v757 = vsel %vm739, %v715, 0
      %v758 = vsel %vm739, %v716, 0
      %v759 = vsel %vm740, %v719, 0
      %v760 = vsel %vm740, %v720, 0
      %v781 = vunpack.c.l.b16 %v741
      %v782 = vunpack.c.l.b16 %v742
      %v783 = vunpack.c.l.b16 %v743
      %v784 = vunpack.c.l.b16 %v744
      %v785 = vunpack.c.l.b16 %v745
      %v786 = vunpack.c.l.b16 %v746
      %v787 = vunpack.c.l.b16 %v747
      %v788 = vunpack.c.l.b16 %v748
      %v789 = vunpack.c.l.b16 %v749
      %v790 = vunpack.c.l.b16 %v750
      %v791 = vunpack.c.l.b16 %v751
      %v792 = vunpack.c.l.b16 %v752
      %v793 = vunpack.c.l.b16 %v753
      %v794 = vunpack.c.l.b16 %v754
      %v795 = vunpack.c.l.b16 %v755
      %v796 = vunpack.c.l.b16 %v756
      %v797 = vunpack.c.l.b16 %v757
      %v798 = vunpack.c.l.b16 %v758
      %v799 = vunpack.c.l.b16 %v759
      %v800 = vunpack.c.l.b16 %v760
      %v801 = vpack.c.b16 %v782, %v781
      %v802 = vpack.c.b16 %v784, %v783
      %v803 = vpack.c.b16 %v786, %v785
      %v804 = vpack.c.b16 %v788, %v787
      %v805 = vpack.c.b16 %v790, %v789
      %v806 = vpack.c.b16 %v792, %v791
      %v807 = vpack.c.b16 %v794, %v793
      %v808 = vpack.c.b16 %v796, %v795
      %v809 = vpack.c.b16 %v798, %v797
      %v810 = vpack.c.b16 %v800, %v799
      %v812 = vshrl.u32 %v801, 16
      %v814 = vrot.slane %v812, 7
      %v815 = vshll.u32 %v801, 16
      %v817 = vor.u32 %v814, %v815
      %v819 = vshrl.u32 %v802, 16
      %v821 = vrot.slane %v819, 7
      %v822 = vshll.u32 %v802, 16
      %v824 = vor.u32 %v821, %v822
      %v826 = vshrl.u32 %v803, 16
      %v828 = vrot.slane %v826, 7
      %v829 = vshll.u32 %v803, 16
      %v831 = vor.u32 %v828, %v829
      %v833 = vshrl.u32 %v804, 16
      %v835 = vrot.slane %v833, 7
      %v836 = vshll.u32 %v804, 16
      %v838 = vor.u32 %v835, %v836
      %v840 = vshrl.u32 %v805, 16
      %v842 = vrot.slane %v840, 7
      %v843 = vshll.u32 %v805, 16
      %v845 = vor.u32 %v842, %v843
      %v847 = vshrl.u32 %v806, 16
      %v849 = vrot.slane %v847, 7
      %v850 = vshll.u32 %v806, 16
      %v852 = vor.u32 %v849, %v850
      %v854 = vshrl.u32 %v807, 16
      %v856 = vrot.slane %v854, 7
      %v857 = vshll.u32 %v807, 16
      %v859 = vor.u32 %v856, %v857
      %v861 = vshrl.u32 %v808, 16
      %v863 = vrot.slane %v861, 7
      %v864 = vshll.u32 %v808, 16
      %v866 = vor.u32 %v863, %v864
      %v868 = vshrl.u32 %v809, 16
      %v870 = vrot.slane %v868, 7
      %v871 = vshll.u32 %v809, 16
      %v873 = vor.u32 %v870, %v871
      %v875 = vshrl.u32 %v810, 16
      %v877 = vrot.slane %v875, 7
      %v878 = vshll.u32 %v810, 16
      %v880 = vor.u32 %v877, %v878
      %vm901 = vcmask 1040384
      %vm902 = vsmask.f32 256
      %vm903 = vmand %vm901, %vm902
      %v904 = vsel %vm903, 0, %v817
      %v905 = vsel %vm903, 0, %v824
      %v906 = vsel %vm903, 0, %v831
      %v907 = vsel %vm903, 0, %v838
      %v908 = vsel %vm903, 0, %v845
      %v909 = vsel %vm903, 0, %v852
      %v910 = vsel %vm903, 0, %v859
      %v911 = vsel %vm903, 0, %v866
      %v912 = vsel %vm903, 0, %v873
      %v913 = vsel %vm903, 0, %v880
      %v914 = vsel %vm903, %v814, 0
      %v915 = vsel %vm903, %v821, 0
      %v916 = vsel %vm903, %v828, 0
      %v917 = vsel %vm903, %v835, 0
      %v918 = vsel %vm903, %v842, 0
      %v919 = vsel %vm903, %v849, 0
      %v920 = vsel %vm903, %v856, 0
      %v921 = vsel %vm903, %v863, 0
      %v922 = vsel %vm903, %v870, 0
      %v923 = vsel %vm903, %v877, 0
      %v924 = vld [vmem:[%s603] sm:$0xf]
      %v925 = vld [vmem:[%s603 + $0x4] sm:$0xf]
      %v926 = vld [vmem:[%s603 + $0x8] sm:$0xf]
      %v927 = vld [vmem:[%s603 + $0xc] sm:$0xf]
      %v928 = vld [vmem:[%s603 + $0x10] sm:$0xf]
      %v929 = vld [vmem:[%s603 + $0x14] sm:$0xf]
      %v930 = vld [vmem:[%s603 + $0x18] sm:$0xf]
      %v931 = vld [vmem:[%s603 + $0x1c] sm:$0xf]
      %v932 = vld [vmem:[%s603 + $0x20] sm:$0xf]
      %v933 = vld [vmem:[%s603 + $0x24] sm:$0xf]
      %v934 = vld [vmem:[%s603 + $0x28] sm:$0xf]
      %v935 = vld [vmem:[%s603 + $0x2c] sm:$0xf]
      %v936 = vld [vmem:[%s603 + $0x30] sm:$0xf]
      %v937 = vld [vmem:[%s603 + $0x34] sm:$0xf]
      %v938 = vld [vmem:[%s603 + $0x38] sm:$0xf]
      %v939 = vld [vmem:[%s603 + $0x3c] sm:$0xf]
      %v940 = vld [vmem:[%s617] sm:$0xf]
      %v941 = vld [vmem:[%s617 + $0x4] sm:$0xf]
      %v942 = vld [vmem:[%s634] sm:$0xf]
      %v943 = vld [vmem:[%s634 + $0x4] sm:$0xf]
      %v944 = vsel %vm731, %v940, 0
      %v945 = vsel %vm731, %v941, 0
      %v946 = vsel %vm732, %v924, 0
      %v947 = vsel %vm732, %v925, 0
      %v948 = vsel %vm733, %v926, 0
      %v949 = vsel %vm733, %v927, 0
      %v950 = vsel %vm734, %v928, 0
      %v951 = vsel %vm734, %v929, 0
      %v952 = vsel %vm735, %v930, 0
      %v953 = vsel %vm735, %v931, 0
      %v954 = vsel %vm736, %v932, 0
      %v955 = vsel %vm736, %v933, 0
      %v956 = vsel %vm737, %v934, 0
      %v957 = vsel %vm737, %v935, 0
      %v958 = vsel %vm738, %v936, 0
      %v959 = vsel %vm738, %v937, 0
      %v960 = vsel %vm739, %v938, 0
      %v961 = vsel %vm739, %v939, 0
      %v962 = vsel %vm740, %v942, 0
      %v963 = vsel %vm740, %v943, 0
      %v984 = vunpack.c.l.b16 %v944
      %v985 = vunpack.c.l.b16 %v945
      %v986 = vunpack.c.l.b16 %v946
      %v987 = vunpack.c.l.b16 %v947
      %v988 = vunpack.c.l.b16 %v948
      %v989 = vunpack.c.l.b16 %v949
      %v990 = vunpack.c.l.b16 %v950
      %v991 = vunpack.c.l.b16 %v951
      %v992 = vunpack.c.l.b16 %v952
      %v993 = vunpack.c.l.b16 %v953
      %v994 = vunpack.c.l.b16 %v954
      %v995 = vunpack.c.l.b16 %v955
      %v996 = vunpack.c.l.b16 %v956
      %v997 = vunpack.c.l.b16 %v957
      %v998 = vunpack.c.l.b16 %v958
      %v999 = vunpack.c.l.b16 %v959
      %v1000 = vunpack.c.l.b16 %v960
      %v1001 = vunpack.c.l.b16 %v961
      %v1002 = vunpack.c.l.b16 %v962
      %v1003 = vunpack.c.l.b16 %v963
      %v1004 = vpack.c.b16 %v985, %v984
      %v1005 = vpack.c.b16 %v987, %v986
      %v1006 = vpack.c.b16 %v989, %v988
      %v1007 = vpack.c.b16 %v991, %v990
      %v1008 = vpack.c.b16 %v993, %v992
      %v1009 = vpack.c.b16 %v995, %v994
      %v1010 = vpack.c.b16 %v997, %v996
      %v1011 = vpack.c.b16 %v999, %v998
      %v1012 = vpack.c.b16 %v1001, %v1000
      %v1013 = vpack.c.b16 %v1003, %v1002
      %v1015 = vshrl.u32 %v1004, 16
      %v1017 = vrot.slane %v1015, 7
      %v1018 = vshll.u32 %v1004, 16
      %v1020 = vor.u32 %v1017, %v1018
      %v1022 = vshrl.u32 %v1005, 16
      %v1024 = vrot.slane %v1022, 7
      %v1025 = vshll.u32 %v1005, 16
      %v1027 = vor.u32 %v1024, %v1025
      %v1029 = vshrl.u32 %v1006, 16
      %v1031 = vrot.slane %v1029, 7
      %v1032 = vshll.u32 %v1006, 16
      %v1034 = vor.u32 %v1031, %v1032
      %v1036 = vshrl.u32 %v1007, 16
      %v1038 = vrot.slane %v1036, 7
      %v1039 = vshll.u32 %v1007, 16
      %v1041 = vor.u32 %v1038, %v1039
      %v1043 = vshrl.u32 %v1008, 16
      %v1045 = vrot.slane %v1043, 7
      %v1046 = vshll.u32 %v1008, 16
      %v1048 = vor.u32 %v1045, %v1046
      %v1050 = vshrl.u32 %v1009, 16
      %v1052 = vrot.slane %v1050, 7
      %v1053 = vshll.u32 %v1009, 16
      %v1055 = vor.u32 %v1052, %v1053
      %v1057 = vshrl.u32 %v1010, 16
      %v1059 = vrot.slane %v1057, 7
      %v1060 = vshll.u32 %v1010, 16
      %v1062 = vor.u32 %v1059, %v1060
      %v1064 = vshrl.u32 %v1011, 16
      %v1066 = vrot.slane %v1064, 7
      %v1067 = vshll.u32 %v1011, 16
      %v1069 = vor.u32 %v1066, %v1067
      %v1071 = vshrl.u32 %v1012, 16
      %v1073 = vrot.slane %v1071, 7
      %v1074 = vshll.u32 %v1012, 16
      %v1076 = vor.u32 %v1073, %v1074
      %v1078 = vshrl.u32 %v1013, 16
      %v1080 = vrot.slane %v1078, 7
      %v1081 = vshll.u32 %v1013, 16
      %v1083 = vor.u32 %v1080, %v1081
      %v1104 = vsel %vm903, 0, %v1020
      %v1105 = vsel %vm903, 0, %v1027
      %v1106 = vsel %vm903, 0, %v1034
      %v1107 = vsel %vm903, 0, %v1041
      %v1108 = vsel %vm903, 0, %v1048
      %v1109 = vsel %vm903, 0, %v1055
      %v1110 = vsel %vm903, 0, %v1062
      %v1111 = vsel %vm903, 0, %v1069
      %v1112 = vsel %vm903, 0, %v1076
      %v1113 = vsel %vm903, 0, %v1083
      %v1114 = vsel %vm903, %v1017, 0
      %v1115 = vsel %vm903, %v1024, 0
      %v1116 = vsel %vm903, %v1031, 0
      %v1117 = vsel %vm903, %v1038, 0
      %v1118 = vsel %vm903, %v1045, 0
      %v1119 = vsel %vm903, %v1052, 0
      %v1120 = vsel %vm903, %v1059, 0
      %v1121 = vsel %vm903, %v1066, 0
      %v1122 = vsel %vm903, %v1073, 0
      %v1123 = vsel %vm903, %v1080, 0
      %vm1124 = vsmask.f32 7424
      %v1126 = vshrl.u32 %v904, 16
      %v1128 = vshll.u32 %v904, 16
      %v1130 = vrot.slane %v1128, 1
      %v1131 = vor.u32 %v1126, %v1130
      %v1133 = vshll.u32 %v914, 16
      %v1135 = vrot.slane %v1133, 1
      %v1136 = vsel %vm1124, %v1131, %v1135
      %v1138 = vshrl.u32 %v905, 16
      %v1140 = vshll.u32 %v905, 16
      %v1142 = vrot.slane %v1140, 1
      %v1143 = vor.u32 %v1138, %v1142
      %v1145 = vshll.u32 %v915, 16
      %v1147 = vrot.slane %v1145, 1
      %v1148 = vsel %vm1124, %v1143, %v1147
      %v1150 = vshrl.u32 %v906, 16
      %v1152 = vshll.u32 %v906, 16
      %v1154 = vrot.slane %v1152, 1
      %v1155 = vor.u32 %v1150, %v1154
      %v1157 = vshll.u32 %v916, 16
      %v1159 = vrot.slane %v1157, 1
      %v1160 = vsel %vm1124, %v1155, %v1159
      %v1162 = vshrl.u32 %v907, 16
      %v1164 = vshll.u32 %v907, 16
      %v1166 = vrot.slane %v1164, 1
      %v1167 = vor.u32 %v1162, %v1166
      %v1169 = vshll.u32 %v917, 16
      %v1171 = vrot.slane %v1169, 1
      %v1172 = vsel %vm1124, %v1167, %v1171
      %v1174 = vshrl.u32 %v908, 16
      %v1176 = vshll.u32 %v908, 16
      %v1178 = vrot.slane %v1176, 1
      %v1179 = vor.u32 %v1174, %v1178
      %v1181 = vshll.u32 %v918, 16
      %v1183 = vrot.slane %v1181, 1
      %v1184 = vsel %vm1124, %v1179, %v1183
      %v1186 = vshrl.u32 %v909, 16
      %v1188 = vshll.u32 %v909, 16
      %v1190 = vrot.slane %v1188, 1
      %v1191 = vor.u32 %v1186, %v1190
      %v1193 = vshll.u32 %v919, 16
      %v1195 = vrot.slane %v1193, 1
      %v1196 = vsel %vm1124, %v1191, %v1195
      %v1198 = vshrl.u32 %v910, 16
      %v1200 = vshll.u32 %v910, 16
      %v1202 = vrot.slane %v1200, 1
      %v1203 = vor.u32 %v1198, %v1202
      %v1205 = vshll.u32 %v920, 16
      %v1207 = vrot.slane %v1205, 1
      %v1208 = vsel %vm1124, %v1203, %v1207
      %v1210 = vshrl.u32 %v911, 16
      %v1212 = vshll.u32 %v911, 16
      %v1214 = vrot.slane %v1212, 1
      %v1215 = vor.u32 %v1210, %v1214
      %v1217 = vshll.u32 %v921, 16
      %v1219 = vrot.slane %v1217, 1
      %v1220 = vsel %vm1124, %v1215, %v1219
      %v1222 = vshrl.u32 %v1104, 16
      %v1224 = vshll.u32 %v1104, 16
      %v1226 = vrot.slane %v1224, 1
      %v1227 = vor.u32 %v1222, %v1226
      %v1229 = vshll.u32 %v1114, 16
      %v1231 = vrot.slane %v1229, 1
      %v1232 = vsel %vm1124, %v1227, %v1231
      %v1234 = vshrl.u32 %v1105, 16
      %v1236 = vshll.u32 %v1105, 16
      %v1238 = vrot.slane %v1236, 1
      %v1239 = vor.u32 %v1234, %v1238
      %v1241 = vshll.u32 %v1115, 16
      %v1243 = vrot.slane %v1241, 1
      %v1244 = vsel %vm1124, %v1239, %v1243
      %v1246 = vshrl.u32 %v1106, 16
      %v1248 = vshll.u32 %v1106, 16
      %v1250 = vrot.slane %v1248, 1
      %v1251 = vor.u32 %v1246, %v1250
      %v1253 = vshll.u32 %v1116, 16
      %v1255 = vrot.slane %v1253, 1
      %v1256 = vsel %vm1124, %v1251, %v1255
      %v1258 = vshrl.u32 %v1107, 16
      %v1260 = vshll.u32 %v1107, 16
      %v1262 = vrot.slane %v1260, 1
      %v1263 = vor.u32 %v1258, %v1262
      %v1265 = vshll.u32 %v1117, 16
      %v1267 = vrot.slane %v1265, 1
      %v1268 = vsel %vm1124, %v1263, %v1267
      %v1270 = vshrl.u32 %v1108, 16
      %v1272 = vshll.u32 %v1108, 16
      %v1274 = vrot.slane %v1272, 1
      %v1275 = vor.u32 %v1270, %v1274
      %v1277 = vshll.u32 %v1118, 16
      %v1279 = vrot.slane %v1277, 1
      %v1280 = vsel %vm1124, %v1275, %v1279
      %v1282 = vshrl.u32 %v1109, 16
      %v1284 = vshll.u32 %v1109, 16
      %v1286 = vrot.slane %v1284, 1
      %v1287 = vor.u32 %v1282, %v1286
      %v1289 = vshll.u32 %v1119, 16
      %v1291 = vrot.slane %v1289, 1
      %v1292 = vsel %vm1124, %v1287, %v1291
      %v1294 = vshrl.u32 %v1110, 16
      %v1296 = vshll.u32 %v1110, 16
      %v1298 = vrot.slane %v1296, 1
      %v1299 = vor.u32 %v1294, %v1298
      %v1301 = vshll.u32 %v1120, 16
      %v1303 = vrot.slane %v1301, 1
      %v1304 = vsel %vm1124, %v1299, %v1303
      %v1306 = vshrl.u32 %v1111, 16
      %v1308 = vshll.u32 %v1111, 16
      %v1310 = vrot.slane %v1308, 1
      %v1311 = vor.u32 %v1306, %v1310
      %v1313 = vshll.u32 %v1121, 16
      %v1315 = vrot.slane %v1313, 1
      %v1316 = vsel %vm1124, %v1311, %v1315
      %vm1333 = vcmask 1046528
      %v1334 = vrot.slane %v904, 1
      %v1335 = vrot.slane %v914, 1
      %v1336 = vsel %vm1333, %v1334, %v1335
      %v1337 = vrot.slane %v905, 1
      %v1338 = vrot.slane %v915, 1
      %v1339 = vsel %vm1333, %v1337, %v1338
      %v1340 = vrot.slane %v906, 1
      %v1341 = vrot.slane %v916, 1
      %v1342 = vsel %vm1333, %v1340, %v1341
      %v1343 = vrot.slane %v907, 1
      %v1344 = vrot.slane %v917, 1
      %v1345 = vsel %vm1333, %v1343, %v1344
      %v1346 = vrot.slane %v908, 1
      %v1347 = vrot.slane %v918, 1
      %v1348 = vsel %vm1333, %v1346, %v1347
      %v1349 = vrot.slane %v909, 1
      %v1350 = vrot.slane %v919, 1
      %v1351 = vsel %vm1333, %v1349, %v1350
      %v1352 = vrot.slane %v910, 1
      %v1353 = vrot.slane %v920, 1
      %v1354 = vsel %vm1333, %v1352, %v1353
      %v1355 = vrot.slane %v911, 1
      %v1356 = vrot.slane %v921, 1
      %v1357 = vsel %vm1333, %v1355, %v1356
      %v1374 = vrot.slane %v1104, 1
      %v1375 = vrot.slane %v1114, 1
      %v1376 = vsel %vm1333, %v1374, %v1375
      %v1377 = vrot.slane %v1105, 1
      %v1378 = vrot.slane %v1115, 1
      %v1379 = vsel %vm1333, %v1377, %v1378
      %v1380 = vrot.slane %v1106, 1
      %v1381 = vrot.slane %v1116, 1
      %v1382 = vsel %vm1333, %v1380, %v1381
      %v1383 = vrot.slane %v1107, 1
      %v1384 = vrot.slane %v1117, 1
      %v1385 = vsel %vm1333, %v1383, %v1384
      %v1386 = vrot.slane %v1108, 1
      %v1387 = vrot.slane %v1118, 1
      %v1388 = vsel %vm1333, %v1386, %v1387
      %v1389 = vrot.slane %v1109, 1
      %v1390 = vrot.slane %v1119, 1
      %v1391 = vsel %vm1333, %v1389, %v1390
      %v1392 = vrot.slane %v1110, 1
      %v1393 = vrot.slane %v1120, 1
      %v1394 = vsel %vm1333, %v1392, %v1393
      %v1395 = vrot.slane %v1111, 1
      %v1396 = vrot.slane %v1121, 1
      %v1397 = vsel %vm1333, %v1395, %v1396
      %v1399 = vshrl.u32 %v912, 16
      %v1401 = vshll.u32 %v912, 16
      %v1403 = vrot.slane %v1401, 1
      %v1404 = vor.u32 %v1399, %v1403
      %v1406 = vshll.u32 %v922, 16
      %v1408 = vrot.slane %v1406, 1
      %v1409 = vsel %vm1124, %v1404, %v1408
      %v1411 = vshrl.u32 %v1112, 16
      %v1413 = vshll.u32 %v1112, 16
      %v1415 = vrot.slane %v1413, 1
      %v1416 = vor.u32 %v1411, %v1415
      %v1418 = vshll.u32 %v1122, 16
      %v1420 = vrot.slane %v1418, 1
      %v1421 = vsel %vm1124, %v1416, %v1420
      %v1424 = vrot.slane %v912, 1
      %v1425 = vrot.slane %v922, 1
      %v1426 = vsel %vm1333, %v1424, %v1425
      %v1429 = vrot.slane %v1112, 1
      %v1430 = vrot.slane %v1122, 1
      %v1431 = vsel %vm1333, %v1429, %v1430
      %v1433 = vshrl.u32 %v913, 16
      %v1435 = vshll.u32 %v913, 16
      %v1437 = vrot.slane %v1435, 1
      %v1438 = vor.u32 %v1433, %v1437
      %v1440 = vshll.u32 %v923, 16
      %v1442 = vrot.slane %v1440, 1
      %v1443 = vsel %vm1124, %v1438, %v1442
      %v1445 = vshrl.u32 %v1113, 16
      %v1447 = vshll.u32 %v1113, 16
      %v1449 = vrot.slane %v1447, 1
      %v1450 = vor.u32 %v1445, %v1449
      %v1452 = vshll.u32 %v1123, 16
      %v1454 = vrot.slane %v1452, 1
      %v1455 = vsel %vm1124, %v1450, %v1454
      %v1458 = vrot.slane %v913, 1
      %v1459 = vrot.slane %v923, 1
      %v1460 = vsel %vm1333, %v1458, %v1459
      %v1463 = vrot.slane %v1113, 1
      %v1464 = vrot.slane %v1123, 1
      %v1465 = vsel %vm1333, %v1463, %v1464
      %1466 = vrot.lane.b32.xlu0 %v1104, 4
      %v1467 = vpop.permute.xlu0 %1466
      %1468 = vrot.lane.b32.xlu0 %v1105, 4
      %v1469 = vpop.permute.xlu0 %1468
      %1470 = vrot.lane.b32.xlu0 %v1106, 4
      %v1471 = vpop.permute.xlu0 %1470
      %1472 = vrot.lane.b32.xlu0 %v1107, 4
      %v1473 = vpop.permute.xlu0 %1472
      %1474 = vrot.lane.b32.xlu0 %v1108, 4
      %v1475 = vpop.permute.xlu0 %1474
      %1476 = vrot.lane.b32.xlu0 %v1109, 4
      %v1477 = vpop.permute.xlu0 %1476
      %1478 = vrot.lane.b32.xlu0 %v1110, 4
      %v1479 = vpop.permute.xlu0 %1478
      %1480 = vrot.lane.b32.xlu0 %v1111, 4
      %v1481 = vpop.permute.xlu0 %1480
      %1482 = vrot.lane.b32.xlu0 %v1136, 8
      %v1483 = vpop.permute.xlu0 %1482
      %1484 = vrot.lane.b32.xlu0 %v1148, 8
      %v1485 = vpop.permute.xlu0 %1484
      %1486 = vrot.lane.b32.xlu0 %v1160, 8
      %v1487 = vpop.permute.xlu0 %1486
      %1488 = vrot.lane.b32.xlu0 %v1172, 8
      %v1489 = vpop.permute.xlu0 %1488
      %1490 = vrot.lane.b32.xlu0 %v1184, 8
      %v1491 = vpop.permute.xlu0 %1490
      %1492 = vrot.lane.b32.xlu0 %v1196, 8
      %v1493 = vpop.permute.xlu0 %1492
      %1494 = vrot.lane.b32.xlu0 %v1208, 8
      %v1495 = vpop.permute.xlu0 %1494
      %1496 = vrot.lane.b32.xlu0 %v1220, 8
      %v1497 = vpop.permute.xlu0 %1496
      %1498 = vrot.lane.b32.xlu0 %v1232, 12
      %v1499 = vpop.permute.xlu0 %1498
      %1500 = vrot.lane.b32.xlu0 %v1244, 12
      %v1501 = vpop.permute.xlu0 %1500
      %1502 = vrot.lane.b32.xlu0 %v1256, 12
      %v1503 = vpop.permute.xlu0 %1502
      %1504 = vrot.lane.b32.xlu0 %v1268, 12
      %v1505 = vpop.permute.xlu0 %1504
      %1506 = vrot.lane.b32.xlu0 %v1280, 12
      %v1507 = vpop.permute.xlu0 %1506
      %1508 = vrot.lane.b32.xlu0 %v1292, 12
      %v1509 = vpop.permute.xlu0 %1508
      %1510 = vrot.lane.b32.xlu0 %v1304, 12
      %v1511 = vpop.permute.xlu0 %1510
      %1512 = vrot.lane.b32.xlu0 %v1316, 12
      %v1513 = vpop.permute.xlu0 %1512
      %1514 = vrot.lane.b32.xlu0 %v1336, 16
      %v1515 = vpop.permute.xlu0 %1514
      %1516 = vrot.lane.b32.xlu0 %v1339, 16
      %v1517 = vpop.permute.xlu0 %1516
      %1518 = vrot.lane.b32.xlu0 %v1342, 16
      %v1519 = vpop.permute.xlu0 %1518
      %1520 = vrot.lane.b32.xlu0 %v1345, 16
      %v1521 = vpop.permute.xlu0 %1520
      %1522 = vrot.lane.b32.xlu0 %v1348, 16
      %v1523 = vpop.permute.xlu0 %1522
      %1524 = vrot.lane.b32.xlu0 %v1351, 16
      %v1525 = vpop.permute.xlu0 %1524
      %1526 = vrot.lane.b32.xlu0 %v1354, 16
      %v1527 = vpop.permute.xlu0 %1526
      %1528 = vrot.lane.b32.xlu0 %v1357, 16
      %v1529 = vpop.permute.xlu0 %1528
      %1530 = vrot.lane.b32.xlu0 %v1376, 20
      %v1531 = vpop.permute.xlu0 %1530
      %1532 = vrot.lane.b32.xlu0 %v1379, 20
      %v1533 = vpop.permute.xlu0 %1532
      %1534 = vrot.lane.b32.xlu0 %v1382, 20
      %v1535 = vpop.permute.xlu0 %1534
      %1536 = vrot.lane.b32.xlu0 %v1385, 20
      %v1537 = vpop.permute.xlu0 %1536
      %1538 = vrot.lane.b32.xlu0 %v1388, 20
      %v1539 = vpop.permute.xlu0 %1538
      %1540 = vrot.lane.b32.xlu0 %v1391, 20
      %v1541 = vpop.permute.xlu0 %1540
      %1542 = vrot.lane.b32.xlu0 %v1394, 20
      %v1543 = vpop.permute.xlu0 %1542
      %1544 = vrot.lane.b32.xlu0 %v1397, 20
      %v1545 = vpop.permute.xlu0 %1544
      %1546 = vrot.lane.b32.xlu0 %v905, 24
      %v1547 = vpop.permute.xlu0 %1546
      %1548 = vrot.lane.b32.xlu0 %v906, 24
      %v1549 = vpop.permute.xlu0 %1548
      %1550 = vrot.lane.b32.xlu0 %v907, 24
      %v1551 = vpop.permute.xlu0 %1550
      %1552 = vrot.lane.b32.xlu0 %v908, 24
      %v1553 = vpop.permute.xlu0 %1552
      %1554 = vrot.lane.b32.xlu0 %v909, 24
      %v1555 = vpop.permute.xlu0 %1554
      %1556 = vrot.lane.b32.xlu0 %v910, 24
      %v1557 = vpop.permute.xlu0 %1556
      %1558 = vrot.lane.b32.xlu0 %v911, 24
      %v1559 = vpop.permute.xlu0 %1558
      %1560 = vrot.lane.b32.xlu0 %v912, 24
      %v1561 = vpop.permute.xlu0 %1560
      %1562 = vrot.lane.b32.xlu0 %v1105, 28
      %v1563 = vpop.permute.xlu0 %1562
      %1564 = vrot.lane.b32.xlu0 %v1106, 28
      %v1565 = vpop.permute.xlu0 %1564
      %1566 = vrot.lane.b32.xlu0 %v1107, 28
      %v1567 = vpop.permute.xlu0 %1566
      %1568 = vrot.lane.b32.xlu0 %v1108, 28
      %v1569 = vpop.permute.xlu0 %1568
      %1570 = vrot.lane.b32.xlu0 %v1109, 28
      %v1571 = vpop.permute.xlu0 %1570
      %1572 = vrot.lane.b32.xlu0 %v1110, 28
      %v1573 = vpop.permute.xlu0 %1572
      %1574 = vrot.lane.b32.xlu0 %v1111, 28
      %v1575 = vpop.permute.xlu0 %1574
      %1576 = vrot.lane.b32.xlu0 %v1112, 28
      %v1577 = vpop.permute.xlu0 %1576
      %1578 = vrot.lane.b32.xlu0 %v1148, 32
      %v1579 = vpop.permute.xlu0 %1578
      %1580 = vrot.lane.b32.xlu0 %v1160, 32
      %v1581 = vpop.permute.xlu0 %1580
      %1582 = vrot.lane.b32.xlu0 %v1172, 32
      %v1583 = vpop.permute.xlu0 %1582
      %1584 = vrot.lane.b32.xlu0 %v1184, 32
      %v1585 = vpop.permute.xlu0 %1584
      %1586 = vrot.lane.b32.xlu0 %v1196, 32
      %v1587 = vpop.permute.xlu0 %1586
      %1588 = vrot.lane.b32.xlu0 %v1208, 32
      %v1589 = vpop.permute.xlu0 %1588
      %1590 = vrot.lane.b32.xlu0 %v1220, 32
      %v1591 = vpop.permute.xlu0 %1590
      %1592 = vrot.lane.b32.xlu0 %v1409, 32
      %v1593 = vpop.permute.xlu0 %1592
      %1594 = vrot.lane.b32.xlu0 %v1244, 36
      %v1595 = vpop.permute.xlu0 %1594
      %1596 = vrot.lane.b32.xlu0 %v1256, 36
      %v1597 = vpop.permute.xlu0 %1596
      %1598 = vrot.lane.b32.xlu0 %v1268, 36
      %v1599 = vpop.permute.xlu0 %1598
      %1600 = vrot.lane.b32.xlu0 %v1280, 36
      %v1601 = vpop.permute.xlu0 %1600
      %1602 = vrot.lane.b32.xlu0 %v1292, 36
      %v1603 = vpop.permute.xlu0 %1602
      %1604 = vrot.lane.b32.xlu0 %v1304, 36
      %v1605 = vpop.permute.xlu0 %1604
      %1606 = vrot.lane.b32.xlu0 %v1316, 36
      %v1607 = vpop.permute.xlu0 %1606
      %1608 = vrot.lane.b32.xlu0 %v1421, 36
      %v1609 = vpop.permute.xlu0 %1608
      %1610 = vrot.lane.b32.xlu0 %v1339, 40
      %v1611 = vpop.permute.xlu0 %1610
      %1612 = vrot.lane.b32.xlu0 %v1342, 40
      %v1613 = vpop.permute.xlu0 %1612
      %1614 = vrot.lane.b32.xlu0 %v1345, 40
      %v1615 = vpop.permute.xlu0 %1614
      %1616 = vrot.lane.b32.xlu0 %v1348, 40
      %v1617 = vpop.permute.xlu0 %1616
      %1618 = vrot.lane.b32.xlu0 %v1351, 40
      %v1619 = vpop.permute.xlu0 %1618
      %1620 = vrot.lane.b32.xlu0 %v1354, 40
      %v1621 = vpop.permute.xlu0 %1620
      %1622 = vrot.lane.b32.xlu0 %v1357, 40
      %v1623 = vpop.permute.xlu0 %1622
      %1624 = vrot.lane.b32.xlu0 %v1426, 40
      %v1625 = vpop.permute.xlu0 %1624
      %1626 = vrot.lane.b32.xlu0 %v1379, 44
      %v1627 = vpop.permute.xlu0 %1626
      %1628 = vrot.lane.b32.xlu0 %v1382, 44
      %v1629 = vpop.permute.xlu0 %1628
      %1630 = vrot.lane.b32.xlu0 %v1385, 44
      %v1631 = vpop.permute.xlu0 %1630
      %1632 = vrot.lane.b32.xlu0 %v1388, 44
      %v1633 = vpop.permute.xlu0 %1632
      %1634 = vrot.lane.b32.xlu0 %v1391, 44
      %v1635 = vpop.permute.xlu0 %1634
      %1636 = vrot.lane.b32.xlu0 %v1394, 44
      %v1637 = vpop.permute.xlu0 %1636
      %1638 = vrot.lane.b32.xlu0 %v1397, 44
      %v1639 = vpop.permute.xlu0 %1638
      %1640 = vrot.lane.b32.xlu0 %v1431, 44
      %v1641 = vpop.permute.xlu0 %1640
      %1642 = vrot.lane.b32.xlu0 %v906, 48
      %v1643 = vpop.permute.xlu0 %1642
      %1644 = vrot.lane.b32.xlu0 %v907, 48
      %v1645 = vpop.permute.xlu0 %1644
      %1646 = vrot.lane.b32.xlu0 %v908, 48
      %v1647 = vpop.permute.xlu0 %1646
      %1648 = vrot.lane.b32.xlu0 %v909, 48
      %v1649 = vpop.permute.xlu0 %1648
      %1650 = vrot.lane.b32.xlu0 %v910, 48
      %v1651 = vpop.permute.xlu0 %1650
      %1652 = vrot.lane.b32.xlu0 %v911, 48
      %v1653 = vpop.permute.xlu0 %1652
      %1654 = vrot.lane.b32.xlu0 %v912, 48
      %v1655 = vpop.permute.xlu0 %1654
      %1656 = vrot.lane.b32.xlu0 %v913, 48
      %v1657 = vpop.permute.xlu0 %1656
      %1658 = vrot.lane.b32.xlu0 %v1106, 52
      %v1659 = vpop.permute.xlu0 %1658
      %1660 = vrot.lane.b32.xlu0 %v1107, 52
      %v1661 = vpop.permute.xlu0 %1660
      %1662 = vrot.lane.b32.xlu0 %v1108, 52
      %v1663 = vpop.permute.xlu0 %1662
      %1664 = vrot.lane.b32.xlu0 %v1109, 52
      %v1665 = vpop.permute.xlu0 %1664
      %1666 = vrot.lane.b32.xlu0 %v1110, 52
      %v1667 = vpop.permute.xlu0 %1666
      %1668 = vrot.lane.b32.xlu0 %v1111, 52
      %v1669 = vpop.permute.xlu0 %1668
      %1670 = vrot.lane.b32.xlu0 %v1112, 52
      %v1671 = vpop.permute.xlu0 %1670
      %1672 = vrot.lane.b32.xlu0 %v1113, 52
      %v1673 = vpop.permute.xlu0 %1672
      %1674 = vrot.lane.b32.xlu0 %v1160, 56
      %v1675 = vpop.permute.xlu0 %1674
      %1676 = vrot.lane.b32.xlu0 %v1172, 56
      %v1677 = vpop.permute.xlu0 %1676
      %1678 = vrot.lane.b32.xlu0 %v1184, 56
      %v1679 = vpop.permute.xlu0 %1678
      %1680 = vrot.lane.b32.xlu0 %v1196, 56
      %v1681 = vpop.permute.xlu0 %1680
      %1682 = vrot.lane.b32.xlu0 %v1208, 56
      %v1683 = vpop.permute.xlu0 %1682
      %1684 = vrot.lane.b32.xlu0 %v1220, 56
      %v1685 = vpop.permute.xlu0 %1684
      %1686 = vrot.lane.b32.xlu0 %v1409, 56
      %v1687 = vpop.permute.xlu0 %1686
      %1688 = vrot.lane.b32.xlu0 %v1443, 56
      %v1689 = vpop.permute.xlu0 %1688
      %1690 = vrot.lane.b32.xlu0 %v1256, 60
      %v1691 = vpop.permute.xlu0 %1690
      %1692 = vrot.lane.b32.xlu0 %v1268, 60
      %v1693 = vpop.permute.xlu0 %1692
      %1694 = vrot.lane.b32.xlu0 %v1280, 60
      %v1695 = vpop.permute.xlu0 %1694
      %1696 = vrot.lane.b32.xlu0 %v1292, 60
      %v1697 = vpop.permute.xlu0 %1696
      %1698 = vrot.lane.b32.xlu0 %v1304, 60
      %v1699 = vpop.permute.xlu0 %1698
      %1700 = vrot.lane.b32.xlu0 %v1316, 60
      %v1701 = vpop.permute.xlu0 %1700
      %1702 = vrot.lane.b32.xlu0 %v1421, 60
      %v1703 = vpop.permute.xlu0 %1702
      %1704 = vrot.lane.b32.xlu0 %v1455, 60
      %v1705 = vpop.permute.xlu0 %1704
      %vm1706 = vcmask 31744
      %v1708 = vsel %vm1706, %v904, %v1467
      %v1710 = vsel %vm1706, %v905, %v1469
      %v1712 = vsel %vm1706, %v906, %v1471
      %v1714 = vsel %vm1706, %v907, %v1473
      %v1716 = vsel %vm1706, %v908, %v1475
      %v1718 = vsel %vm1706, %v909, %v1477
      %v1720 = vsel %vm1706, %v910, %v1479
      %v1722 = vsel %vm1706, %v911, %v1481
      %vm1723 = vcmask 64512
      %v1725 = vsel %vm1723, %v1708, %v1483
      %v1727 = vsel %vm1723, %v1710, %v1485
      %v1729 = vsel %vm1723, %v1712, %v1487
      %v1731 = vsel %vm1723, %v1714, %v1489
      %v1733 = vsel %vm1723, %v1716, %v1491
      %v1735 = vsel %vm1723, %v1718, %v1493
      %v1737 = vsel %vm1723, %v1720, %v1495
      %v1739 = vsel %vm1723, %v1722, %v1497
      %vm1740 = vcmask 97280
      %v1742 = vsel %vm1740, %v1725, %v1499
      %v1744 = vsel %vm1740, %v1727, %v1501
      %v1746 = vsel %vm1740, %v1729, %v1503
      %v1748 = vsel %vm1740, %v1731, %v1505
      %v1750 = vsel %vm1740, %v1733, %v1507
      %v1752 = vsel %vm1740, %v1735, %v1509
      %v1754 = vsel %vm1740, %v1737, %v1511
      %v1756 = vsel %vm1740, %v1739, %v1513
      %vm1757 = vcmask 130048
      %v1759 = vsel %vm1757, %v1742, %v1515
      %v1761 = vsel %vm1757, %v1744, %v1517
      %v1763 = vsel %vm1757, %v1746, %v1519
      %v1765 = vsel %vm1757, %v1748, %v1521
      %v1767 = vsel %vm1757, %v1750, %v1523
      %v1769 = vsel %vm1757, %v1752, %v1525
      %v1771 = vsel %vm1757, %v1754, %v1527
      %v1773 = vsel %vm1757, %v1756, %v1529
      %vm1774 = vcmask 162816
      %v1776 = vsel %vm1774, %v1759, %v1531
      %v1778 = vsel %vm1774, %v1761, %v1533
      %v1780 = vsel %vm1774, %v1763, %v1535
      %v1782 = vsel %vm1774, %v1765, %v1537
      %v1784 = vsel %vm1774, %v1767, %v1539
      %v1786 = vsel %vm1774, %v1769, %v1541
      %v1788 = vsel %vm1774, %v1771, %v1543
      %v1790 = vsel %vm1774, %v1773, %v1545
      %vm1791 = vcmask 195584
      %v1793 = vsel %vm1791, %v1776, %v1547
      %v1795 = vsel %vm1791, %v1778, %v1549
      %v1797 = vsel %vm1791, %v1780, %v1551
      %v1799 = vsel %vm1791, %v1782, %v1553
      %v1801 = vsel %vm1791, %v1784, %v1555
      %v1803 = vsel %vm1791, %v1786, %v1557
      %v1805 = vsel %vm1791, %v1788, %v1559
      %v1807 = vsel %vm1791, %v1790, %v1561
      %vm1808 = vcmask 228352
      %v1810 = vsel %vm1808, %v1793, %v1563
      %v1812 = vsel %vm1808, %v1795, %v1565
      %v1814 = vsel %vm1808, %v1797, %v1567
      %v1816 = vsel %vm1808, %v1799, %v1569
      %v1818 = vsel %vm1808, %v1801, %v1571
      %v1820 = vsel %vm1808, %v1803, %v1573
      %v1822 = vsel %vm1808, %v1805, %v1575
      %v1824 = vsel %vm1808, %v1807, %v1577
      %vm1825 = vcmask 261120
      %v1827 = vsel %vm1825, %v1810, %v1579
      %v1829 = vsel %vm1825, %v1812, %v1581
      %v1831 = vsel %vm1825, %v1814, %v1583
      %v1833 = vsel %vm1825, %v1816, %v1585
      %v1835 = vsel %vm1825, %v1818, %v1587
      %v1837 = vsel %vm1825, %v1820, %v1589
      %v1839 = vsel %vm1825, %v1822, %v1591
      %v1841 = vsel %vm1825, %v1824, %v1593
      %vm1842 = vcmask 293888
      %v1844 = vsel %vm1842, %v1827, %v1595
      %v1846 = vsel %vm1842, %v1829, %v1597
      %v1848 = vsel %vm1842, %v1831, %v1599
      %v1850 = vsel %vm1842, %v1833, %v1601
      %v1852 = vsel %vm1842, %v1835, %v1603
      %v1854 = vsel %vm1842, %v1837, %v1605
      %v1856 = vsel %vm1842, %v1839, %v1607
      %v1858 = vsel %vm1842, %v1841, %v1609
      %vm1859 = vcmask 326656
      %v1861 = vsel %vm1859, %v1844, %v1611
      %v1863 = vsel %vm1859, %v1846, %v1613
      %v1865 = vsel %vm1859, %v1848, %v1615
      %v1867 = vsel %vm1859, %v1850, %v1617
      %v1869 = vsel %vm1859, %v1852, %v1619
      %v1871 = vsel %vm1859, %v1854, %v1621
      %v1873 = vsel %vm1859, %v1856, %v1623
      %v1875 = vsel %vm1859, %v1858, %v1625
      %vm1876 = vcmask 359424
      %v1878 = vsel %vm1876, %v1861, %v1627
      %v1880 = vsel %vm1876, %v1863, %v1629
      %v1882 = vsel %vm1876, %v1865, %v1631
      %v1884 = vsel %vm1876, %v1867, %v1633
      %v1886 = vsel %vm1876, %v1869, %v1635
      %v1888 = vsel %vm1876, %v1871, %v1637
      %v1890 = vsel %vm1876, %v1873, %v1639
      %v1892 = vsel %vm1876, %v1875, %v1641
      %vm1893 = vcmask 392192
      %v1895 = vsel %vm1893, %v1878, %v1643
      %v1897 = vsel %vm1893, %v1880, %v1645
      %v1899 = vsel %vm1893, %v1882, %v1647
      %v1901 = vsel %vm1893, %v1884, %v1649
      %v1903 = vsel %vm1893, %v1886, %v1651
      %v1905 = vsel %vm1893, %v1888, %v1653
      %v1907 = vsel %vm1893, %v1890, %v1655
      %v1909 = vsel %vm1893, %v1892, %v1657
      %vm1910 = vcmask 424960
      %v1912 = vsel %vm1910, %v1895, %v1659
      %v1914 = vsel %vm1910, %v1897, %v1661
      %v1916 = vsel %vm1910, %v1899, %v1663
      %v1918 = vsel %vm1910, %v1901, %v1665
      %v1920 = vsel %vm1910, %v1903, %v1667
      %v1922 = vsel %vm1910, %v1905, %v1669
      %v1924 = vsel %vm1910, %v1907, %v1671
      %v1926 = vsel %vm1910, %v1909, %v1673
      %vm1927 = vcmask 457728
      %v1929 = vsel %vm1927, %v1912, %v1675
      %v1931 = vsel %vm1927, %v1914, %v1677
      %v1933 = vsel %vm1927, %v1916, %v1679
      %v1935 = vsel %vm1927, %v1918, %v1681
      %v1937 = vsel %vm1927, %v1920, %v1683
      %v1939 = vsel %vm1927, %v1922, %v1685
      %v1941 = vsel %vm1927, %v1924, %v1687
      %v1943 = vsel %vm1927, %v1926, %v1689
      %vm1944 = vcmask 490496
      %v1946 = vsel %vm1944, %v1929, %v1691
      %v1948 = vsel %vm1944, %v1931, %v1693
      %v1950 = vsel %vm1944, %v1933, %v1695
      %v1952 = vsel %vm1944, %v1935, %v1697
      %v1954 = vsel %vm1944, %v1937, %v1699
      %v1956 = vsel %vm1944, %v1939, %v1701
      %v1958 = vsel %vm1944, %v1941, %v1703
      %v1960 = vsel %vm1944, %v1943, %v1705
      %1961 = vrot.lane.b32.xlu0 %v1382, 4
      %v1962 = vpop.permute.xlu0 %1961
      %1963 = vrot.lane.b32.xlu0 %v1385, 4
      %v1964 = vpop.permute.xlu0 %1963
      %1965 = vrot.lane.b32.xlu0 %v1388, 4
      %v1966 = vpop.permute.xlu0 %1965
      %1967 = vrot.lane.b32.xlu0 %v1391, 4
      %v1968 = vpop.permute.xlu0 %1967
      %1969 = vrot.lane.b32.xlu0 %v1394, 4
      %v1970 = vpop.permute.xlu0 %1969
      %1971 = vrot.lane.b32.xlu0 %v1397, 4
      %v1972 = vpop.permute.xlu0 %1971
      %1973 = vrot.lane.b32.xlu0 %v1431, 4
      %v1974 = vpop.permute.xlu0 %1973
      %1975 = vrot.lane.b32.xlu0 %v1465, 4
      %v1976 = vpop.permute.xlu0 %1975
      %v1979 = vsel %vm1706, %v1342, %v1962
      %v1982 = vsel %vm1706, %v1345, %v1964
      %v1985 = vsel %vm1706, %v1348, %v1966
      %v1988 = vsel %vm1706, %v1351, %v1968
      %v1991 = vsel %vm1706, %v1354, %v1970
      %v1994 = vsel %vm1706, %v1357, %v1972
      %v1997 = vsel %vm1706, %v1426, %v1974
      %v2000 = vsel %vm1706, %v1460, %v1976
      %2009 = vrot.lane.b32.xlu0 %v1979, 64
      %v2010 = vpop.permute.xlu0 %2009
      %2011 = vrot.lane.b32.xlu0 %v1982, 64
      %v2012 = vpop.permute.xlu0 %2011
      %2013 = vrot.lane.b32.xlu0 %v1985, 64
      %v2014 = vpop.permute.xlu0 %2013
      %2015 = vrot.lane.b32.xlu0 %v1988, 64
      %v2016 = vpop.permute.xlu0 %2015
      %2017 = vrot.lane.b32.xlu0 %v1991, 64
      %v2018 = vpop.permute.xlu0 %2017
      %2019 = vrot.lane.b32.xlu0 %v1994, 64
      %v2020 = vpop.permute.xlu0 %2019
      %2021 = vrot.lane.b32.xlu0 %v1997, 64
      %v2022 = vpop.permute.xlu0 %2021
      %2023 = vrot.lane.b32.xlu0 %v2000, 64
      %v2024 = vpop.permute.xlu0 %2023
      %vm2025 = vcmask 523264
      %v2027 = vsel %vm2025, %v1946, %v2010
      %v2029 = vsel %vm2025, %v1948, %v2012
      %v2031 = vsel %vm2025, %v1950, %v2014
      %v2033 = vsel %vm2025, %v1952, %v2016
      %v2035 = vsel %vm2025, %v1954, %v2018
      %v2037 = vsel %vm2025, %v1956, %v2020
      %v2039 = vsel %vm2025, %v1958, %v2022
      %v2041 = vsel %vm2025, %v1960, %v2024
      %v2042 = vld [vmem:[%s6] sm:$0xf]
      %v2043 = vld [vmem:[%s6 + $0x4] sm:$0xf]
      %v2044 = vld [vmem:[%s6 + $0x8] sm:$0xf]
      %v2045 = vld [vmem:[%s6 + $0xc] sm:$0xf]
      %v2046 = vld [vmem:[%s6 + $0x10] sm:$0xf]
      %v2047 = vld [vmem:[%s6 + $0x14] sm:$0xf]
      %v2048 = vld [vmem:[%s6 + $0x18] sm:$0xf]
      %v2049 = vld [vmem:[%s6 + $0x1c] sm:$0xf]
      %v2050 = vld [vmem:[%s6 + $0x20] sm:$0xf]
      %v2060 = vunpack.c.l.b16 %v2042
      %v2061 = vunpack.c.l.b16 %v2043
      %v2062 = vunpack.c.l.b16 %v2044
      %v2063 = vunpack.c.l.b16 %v2045
      %v2064 = vunpack.c.l.b16 %v2046
      %v2065 = vunpack.c.l.b16 %v2047
      %v2066 = vunpack.c.l.b16 %v2048
      %v2067 = vunpack.c.l.b16 %v2049
      %v2068 = vunpack.c.l.b16 %v2050
      %v2069 = vpack.c.b16 %v2061, %v2060
      %v2070 = vpack.c.b16 %v2063, %v2062
      %v2071 = vpack.c.b16 %v2065, %v2064
      %v2072 = vpack.c.b16 %v2067, %v2066
      %v2073 = vpack.c.b16 %v2068, %v2068
      %vm2078 = vcmask 588800
      %v2079 = vsel %vm2078, %v2027, 0
      %v2081 = vsel %vm2078, %v2029, 0
      %v2083 = vsel %vm2078, %v2031, 0
      %v2085 = vsel %vm2078, %v2033, 0
      %v2087 = vsel %vm2078, %v2035, 0
      %v2089 = vsel %vm2078, %v2037, 0
      %v2091 = vsel %vm2078, %v2039, 0
      %v2093 = vsel %vm2078, %v2041, 0
      %vm2095 = vcmask 1043456
      %v2097 = vsel %vm2095, %v2073, 0
      %2099 = vmatprep.subr.bf16.mxu0 0
      %2100 = vmatpush1.bf16.msra.mxu0 %v2069
      %2101 = vmatprep.subr.bf16.mxu0 0
      %2102 = vmatpush1.bf16.msra.mxu0 %v2070
      %2103 = vmatprep.subr.bf16.mxu0 0
      %2104 = vmatpush1.bf16.msra.mxu0 %v2071
      %2105 = vmatprep.subr.bf16.mxu0 0
      %2106 = vmatpush1.bf16.msra.mxu0 %v2072
      %2107 = vmatprep.subr.bf16.mxu0 0
      %2108 = vmatpush1.bf16.msra.mxu0 %v2097
      %2109 = vmatprep.subr.bf16.mxu0 0
      %2110 = vmatpush1.bf16.msra.mxu0 0
      %2111 = vmatprep.subr.bf16.mxu0 0
      %2112 = vmatpush1.bf16.msra.mxu0 0
      %2113 = vmatprep.subr.bf16.mxu0 0
      %2114 = vmatpush1.bf16.msra.mxu0 0
      %2115 = vmatprep.subr.bf16.mxu0 0
      %2116 = vmatpush1.bf16.msra.mxu0 0
      %2117 = vmatprep.subr.bf16.mxu0 0
      %2118 = vmatpush1.bf16.msra.mxu0 0
      %2119 = vmatprep.subr.bf16.mxu0 0
      %2120 = vmatpush1.bf16.msra.mxu0 0
      %2121 = vmatprep.subr.bf16.mxu0 0
      %2122 = vmatpush1.bf16.msra.mxu0 0
      %2123 = vmatprep.subr.bf16.mxu0 0
      %2124 = vmatpush1.bf16.msra.mxu0 0
      %2125 = vmatprep.subr.bf16.mxu0 0
      %2126 = vmatpush1.bf16.msra.mxu0 0
      %2127 = vmatprep.subr.bf16.mxu0 0
      %2128 = vmatpush1.bf16.msra.mxu0 0
      %2129 = vmatprep.subr.bf16.mxu0 0
      %2130 = vmatpush1.bf16.msra.mxu0 0
      %2131 = vmatprep.mubr.bf16.mxu0 0
      %2132 = vmatmul.mubr.bf16.gmra.mrb[0].mxu0 %v2079
      %v2133 = vpop.f32.mrb[0].mxu0
      %v2134 = vadd.f32 0.0, %v2133
      %v2135 = vpop.f32.mrb[0].mxu0
      %v2136 = vpop.f32.mrb[0].mxu0
      %v2137 = vadd.f32 0.0, %v2136
      %v2138 = vpop.f32.mrb[0].mxu0
      %2139 = vmatprep.mubr.bf16.mxu0 0
      %2140 = vmatmul.mubr.bf16.gmra.mrb[0].mxu0 %v2081
      %v2141 = vpop.f32.mrb[0].mxu0
      %v2142 = vadd.f32 0.0, %v2141
      %v2143 = vpop.f32.mrb[0].mxu0
      %v2144 = vpop.f32.mrb[0].mxu0
      %v2145 = vadd.f32 0.0, %v2144
      %v2146 = vpop.f32.mrb[0].mxu0
      %2147 = vmatprep.mubr.bf16.mxu0 0
      %2148 = vmatmul.mubr.bf16.gmra.mrb[0].mxu0 %v2083
      %v2149 = vpop.f32.mrb[0].mxu0
      %v2150 = vadd.f32 0.0, %v2149
      %v2151 = vpop.f32.mrb[0].mxu0
      %v2152 = vpop.f32.mrb[0].mxu0
      %v2153 = vadd.f32 0.0, %v2152
      %v2154 = vpop.f32.mrb[0].mxu0
      %2155 = vmatprep.mubr.bf16.mxu0 0
      %2156 = vmatmul.mubr.bf16.gmra.mrb[0].mxu0 %v2085
      %v2157 = vpop.f32.mrb[0].mxu0
      %v2158 = vadd.f32 0.0, %v2157
      %v2159 = vpop.f32.mrb[0].mxu0
      %v2160 = vpop.f32.mrb[0].mxu0
      %v2161 = vadd.f32 0.0, %v2160
      %v2162 = vpop.f32.mrb[0].mxu0
      %2163 = vmatprep.mubr.bf16.mxu0 0
      %2164 = vmatmul.mubr.bf16.gmra.mrb[0].mxu0 %v2087
      %v2165 = vpop.f32.mrb[0].mxu0
      %v2166 = vadd.f32 0.0, %v2165
      %v2167 = vpop.f32.mrb[0].mxu0
      %v2168 = vpop.f32.mrb[0].mxu0
      %v2169 = vadd.f32 0.0, %v2168
      %v2170 = vpop.f32.mrb[0].mxu0
      %2171 = vmatprep.mubr.bf16.mxu0 0
      %2172 = vmatmul.mubr.bf16.gmra.mrb[0].mxu0 %v2089
      %v2173 = vpop.f32.mrb[0].mxu0
      %v2174 = vadd.f32 0.0, %v2173
      %v2175 = vpop.f32.mrb[0].mxu0
      %v2176 = vpop.f32.mrb[0].mxu0
      %v2177 = vadd.f32 0.0, %v2176
      %v2178 = vpop.f32.mrb[0].mxu0
      %2179 = vmatprep.mubr.bf16.mxu0 0
      %2180 = vmatmul.mubr.bf16.gmra.mrb[0].mxu0 %v2091
      %v2181 = vpop.f32.mrb[0].mxu0
      %v2182 = vadd.f32 0.0, %v2181
      %v2183 = vpop.f32.mrb[0].mxu0
      %v2184 = vpop.f32.mrb[0].mxu0
      %v2185 = vadd.f32 0.0, %v2184
      %v2186 = vpop.f32.mrb[0].mxu0
      %2187 = vmatprep.mubr.bf16.mxu0 0
      %2188 = vmatmul.mubr.bf16.gmra.mrb[0].mxu0 %v2093
      %v2189 = vpop.f32.mrb[0].mxu0
      %v2190 = vadd.f32 0.0, %v2189
      %v2191 = vpop.f32.mrb[0].mxu0
      %v2192 = vpop.f32.mrb[0].mxu0
      %v2193 = vadd.f32 0.0, %v2192
      %v2194 = vpop.f32.mrb[0].mxu0
      %2195 = vdwg.mxu0
      %v2196 = vstv %s659
      %v2197 = vadd.s32 %v2196, 1
      %v2198 = vadd.s32 %v2196, 2
      %v2199 = vadd.s32 %v2196, 3
      %v2200 = vadd.s32 %v2196, 4
      %v2201 = vadd.s32 %v2196, 5
      %v2202 = vadd.s32 %v2196, 6
      %v2203 = vadd.s32 %v2196, 7
      %vm2204 = vcmp.lt.s32.totalorder %v2196, 14
      %vm2205 = vcmp.lt.s32.totalorder %v2197, 14
      %vm2206 = vcmp.lt.s32.totalorder %v2198, 14
      %vm2207 = vcmp.lt.s32.totalorder %v2199, 14
      %vm2208 = vcmp.lt.s32.totalorder %v2200, 14
      %vm2209 = vcmp.lt.s32.totalorder %v2201, 14
      %vm2210 = vcmp.lt.s32.totalorder %v2202, 14
      %vm2211 = vcmp.lt.s32.totalorder %v2203, 14
      %v2212 = vsel %vm2204, 1, 0
      %v2213 = vsel %vm2205, 1, 0
      %v2214 = vsel %vm2206, 1, 0
      %v2215 = vsel %vm2207, 1, 0
      %v2216 = vsel %vm2208, 1, 0
      %v2217 = vsel %vm2209, 1, 0
      %v2218 = vsel %vm2210, 1, 0
      %v2219 = vsel %vm2211, 1, 0
      %vm2220 = vcmp.eq.s32.totalorder %v2212, 1
      %vm2221 = vcmp.eq.s32.totalorder %v2213, 1
      %vm2222 = vcmp.eq.s32.totalorder %v2214, 1
      %vm2223 = vcmp.eq.s32.totalorder %v2215, 1
      %vm2224 = vcmp.eq.s32.totalorder %v2216, 1
      %vm2225 = vcmp.eq.s32.totalorder %v2217, 1
      %vm2226 = vcmp.eq.s32.totalorder %v2218, 1
      %vm2227 = vcmp.eq.s32.totalorder %v2219, 1
      %v2228 = vsel %vm2220, %v2134, 0.0
      %v2229 = vsel %vm2220, %v2137, 0.0
      %v2230 = vsel %vm2221, %v2142, 0.0
      %v2231 = vsel %vm2221, %v2145, 0.0
      %v2232 = vsel %vm2222, %v2150, 0.0
      %v2233 = vsel %vm2222, %v2153, 0.0
      %v2234 = vsel %vm2223, %v2158, 0.0
      %v2235 = vsel %vm2223, %v2161, 0.0
      %v2236 = vsel %vm2224, %v2166, 0.0
      %v2237 = vsel %vm2224, %v2169, 0.0
      %v2238 = vsel %vm2225, %v2174, 0.0
      %v2239 = vsel %vm2225, %v2177, 0.0
      %v2240 = vsel %vm2226, %v2182, 0.0
      %v2241 = vsel %vm2226, %v2185, 0.0
      %v2242 = vsel %vm2227, %v2190, 0.0
      %v2243 = vsel %vm2227, %v2193, 0.0
      %v2244 = vsel %vm1706, %v2228, 0.0
      %v2245 = vsel %vm1706, %v2229, 0.0
      %v2246 = vadd.f32 %v2244, %v2245
      %v2247 = vsel %vm1706, %v2230, 0.0
      %v2248 = vadd.f32 %v2246, %v2247
      %v2249 = vsel %vm1706, %v2231, 0.0
      %v2250 = vadd.f32 %v2248, %v2249
      %v2251 = vsel %vm1706, %v2232, 0.0
      %v2252 = vadd.f32 %v2250, %v2251
      %v2253 = vsel %vm1706, %v2233, 0.0
      %v2254 = vadd.f32 %v2252, %v2253
      %v2255 = vsel %vm1706, %v2234, 0.0
      %v2256 = vadd.f32 %v2254, %v2255
      %v2257 = vsel %vm1706, %v2235, 0.0
      %v2258 = vadd.f32 %v2256, %v2257
      %v2259 = vsel %vm1706, %v2236, 0.0
      %v2260 = vadd.f32 %v2258, %v2259
      %v2261 = vsel %vm1706, %v2237, 0.0
      %v2262 = vadd.f32 %v2260, %v2261
      %v2263 = vsel %vm1706, %v2238, 0.0
      %v2264 = vadd.f32 %v2262, %v2263
      %v2265 = vsel %vm1706, %v2239, 0.0
      %v2266 = vadd.f32 %v2264, %v2265
      %v2267 = vsel %vm1706, %v2240, 0.0
      %v2268 = vadd.f32 %v2266, %v2267
      %v2269 = vsel %vm1706, %v2241, 0.0
      %v2270 = vadd.f32 %v2268, %v2269
      %v2271 = vsel %vm1706, %v2242, 0.0
      %v2272 = vadd.f32 %v2270, %v2271
      %v2273 = vsel %vm1706, %v2243, 0.0
      %v2274 = vadd.f32 %v2272, %v2273
      %v2275 = vrot.slane %v2274, 4
      %v2276 = vadd.f32 %v2274, %v2275
      %v2277 = vrot.slane %v2276, 2
      %v2278 = vadd.f32 %v2276, %v2277
      %v2279 = vrot.slane %v2278, 1
      %v2280 = vadd.f32 %v2278, %v2279
      %v2281 = vmul.f32 %v2228, %v2228
      %v2282 = vmul.f32 %v2229, %v2229
      %v2283 = vmul.f32 %v2230, %v2230
      %v2284 = vmul.f32 %v2231, %v2231
      %v2285 = vmul.f32 %v2232, %v2232
      %v2286 = vmul.f32 %v2233, %v2233
      %v2287 = vmul.f32 %v2234, %v2234
      %v2288 = vmul.f32 %v2235, %v2235
      %v2289 = vmul.f32 %v2236, %v2236
      %v2290 = vmul.f32 %v2237, %v2237
      %v2291 = vmul.f32 %v2238, %v2238
      %v2292 = vmul.f32 %v2239, %v2239
      %v2293 = vmul.f32 %v2240, %v2240
      %v2294 = vmul.f32 %v2241, %v2241
      %v2295 = vmul.f32 %v2242, %v2242
      %v2296 = vmul.f32 %v2243, %v2243
      %v2297 = vsel %vm1706, %v2281, 0.0
      %v2298 = vsel %vm1706, %v2282, 0.0
      %v2299 = vadd.f32 %v2297, %v2298
      %v2300 = vsel %vm1706, %v2283, 0.0
      %v2301 = vadd.f32 %v2299, %v2300
      %v2302 = vsel %vm1706, %v2284, 0.0
      %v2303 = vadd.f32 %v2301, %v2302
      %v2304 = vsel %vm1706, %v2285, 0.0
      %v2305 = vadd.f32 %v2303, %v2304
      %v2306 = vsel %vm1706, %v2286, 0.0
      %v2307 = vadd.f32 %v2305, %v2306
      %v2308 = vsel %vm1706, %v2287, 0.0
      %v2309 = vadd.f32 %v2307, %v2308
      %v2310 = vsel %vm1706, %v2288, 0.0
      %v2311 = vadd.f32 %v2309, %v2310
      %v2312 = vsel %vm1706, %v2289, 0.0
      %v2313 = vadd.f32 %v2311, %v2312
      %v2314 = vsel %vm1706, %v2290, 0.0
      %v2315 = vadd.f32 %v2313, %v2314
      %v2316 = vsel %vm1706, %v2291, 0.0
      %v2317 = vadd.f32 %v2315, %v2316
      %v2318 = vsel %vm1706, %v2292, 0.0
      %v2319 = vadd.f32 %v2317, %v2318
      %v2320 = vsel %vm1706, %v2293, 0.0
      %v2321 = vadd.f32 %v2319, %v2320
      %v2322 = vsel %vm1706, %v2294, 0.0
      %v2323 = vadd.f32 %v2321, %v2322
      %v2324 = vsel %vm1706, %v2295, 0.0
      %v2325 = vadd.f32 %v2323, %v2324
      %v2326 = vsel %vm1706, %v2296, 0.0
      %v2327 = vadd.f32 %v2325, %v2326
      %v2328 = vrot.slane %v2327, 4
      %v2329 = vadd.f32 %v2327, %v2328
      %v2330 = vrot.slane %v2329, 2
      %v2331 = vadd.f32 %v2329, %v2330
      %v2332 = vrot.slane %v2331, 1
      %v2333 = vadd.f32 %v2331, %v2332
      %vm2334 = vcmask 1040384
      %v2335 = vsel %vm2334, %v2280, %v2333
      %vm2336 = vcmask 25600
      %2337 = vst.msk [vmem:[%s657] sm:$0x3] %vm2336, %v2335
      %v2338 = vpack.c.bf16 %v2137, %v2134
      %v2339 = vpack.c.bf16 %v2145, %v2142
      %v2340 = vpack.c.bf16 %v2153, %v2150
      %v2341 = vpack.c.bf16 %v2161, %v2158
      %v2342 = vpack.c.bf16 %v2169, %v2166
      %v2343 = vpack.c.bf16 %v2177, %v2174
      %v2344 = vpack.c.bf16 %v2185, %v2182
      %v2345 = vpack.c.bf16 %v2193, %v2190
      %v2354 = vunpack.c.l.b16 %v2338
      %v2355 = vunpack.c.h.b16 %v2338
      %v2356 = vunpack.c.l.b16 %v2339
      %v2357 = vunpack.c.h.b16 %v2339
      %v2358 = vunpack.c.l.b16 %v2340
      %v2359 = vunpack.c.h.b16 %v2340
      %v2360 = vunpack.c.l.b16 %v2341
      %v2361 = vunpack.c.h.b16 %v2341
      %v2362 = vunpack.c.l.b16 %v2342
      %v2363 = vunpack.c.h.b16 %v2342
      %v2364 = vunpack.c.l.b16 %v2343
      %v2365 = vunpack.c.h.b16 %v2343
      %v2366 = vunpack.c.l.b16 %v2344
      %v2367 = vunpack.c.h.b16 %v2344
      %v2368 = vunpack.c.l.b16 %v2345
      %v2369 = vunpack.c.h.b16 %v2345
      %v2370 = vpack.c.b16 %v2354, %v2354
      %v2371 = vpack.c.b16 %v2355, %v2355
      %v2372 = vpack.c.b16 %v2356, %v2356
      %v2373 = vpack.c.b16 %v2357, %v2357
      %v2374 = vpack.c.b16 %v2358, %v2358
      %v2375 = vpack.c.b16 %v2359, %v2359
      %v2376 = vpack.c.b16 %v2360, %v2360
      %v2377 = vpack.c.b16 %v2361, %v2361
      %v2378 = vpack.c.b16 %v2362, %v2362
      %v2379 = vpack.c.b16 %v2363, %v2363
      %v2380 = vpack.c.b16 %v2364, %v2364
      %v2381 = vpack.c.b16 %v2365, %v2365
      %v2382 = vpack.c.b16 %v2366, %v2366
      %v2383 = vpack.c.b16 %v2367, %v2367
      %v2384 = vpack.c.b16 %v2368, %v2368
      %v2385 = vpack.c.b16 %v2369, %v2369
      %vm2402 = vcmask 27648
      %2403 = vst.msk [vmem:[%s648] sm:$0xf] %vm2402, %v2370
      %2404 = vst.msk [vmem:[%s648 + $0x4] sm:$0xf] %vm2402, %v2371
      %2405 = vst.msk [vmem:[%s648 + $0x8] sm:$0xf] %vm2402, %v2372
      %2406 = vst.msk [vmem:[%s648 + $0xc] sm:$0xf] %vm2402, %v2373
      %2407 = vst.msk [vmem:[%s648 + $0x10] sm:$0xf] %vm2402, %v2374
      %2408 = vst.msk [vmem:[%s648 + $0x14] sm:$0xf] %vm2402, %v2375
      %2409 = vst.msk [vmem:[%s648 + $0x18] sm:$0xf] %vm2402, %v2376
      %2410 = vst.msk [vmem:[%s648 + $0x1c] sm:$0xf] %vm2402, %v2377
      %2411 = vst.msk [vmem:[%s648 + $0x20] sm:$0xf] %vm2402, %v2378
      %2412 = vst.msk [vmem:[%s648 + $0x24] sm:$0xf] %vm2402, %v2379
      %2413 = vst.msk [vmem:[%s648 + $0x28] sm:$0xf] %vm2402, %v2380
      %2414 = vst.msk [vmem:[%s648 + $0x2c] sm:$0xf] %vm2402, %v2381
      %2415 = vst.msk [vmem:[%s648 + $0x30] sm:$0xf] %vm2402, %v2382
      %2416 = vst.msk [vmem:[%s648 + $0x34] sm:$0xf] %vm2402, %v2383
      %2417 = vst.msk [vmem:[%s648 + $0x38] sm:$0xf] %vm2402, %v2384
      %2418 = vst.msk [vmem:[%s648 + $0x3c] sm:$0xf] %vm2402, %v2385
      %s2419 = smul.u32 8, %s25
      %p2420 = scmp.lt.s32.totalorder %s24, 1
      %s2421 = scalar_select %p2420, %s24, 1
      %p2422 = scmp.lt.s32.totalorder %s2419, 15
      %s2423 = scalar_select %p2422, %s2419, 15
      %s2424 = smul.addr %s2423, 2
      %s2425 = smul.addr %s2421, 32
      %s2426 = sadd.s32 %s2424, %s2425
      %s2427 = smul.addr %s2426, 4
      %s2428 = scalar_lea.vmem %s7, %s2427
      %p2429 = scmp.lt.s32.totalorder %s24, 1
      %s2430 = scalar_select %p2429, %s24, 1
      %p2431 = scmp.lt.s32.totalorder %s25, 1
      %s2432 = scalar_select %p2431, %s25, 1
      %s2433 = smul.addr %s2430, 2
      %s2434 = sadd.s32 %s2432, %s2433
      %s2435 = smul.addr %s2434, 2
      %s2436 = scalar_lea.vmem %s8, %s2435
      // Predicated region
      $region49: #{_lambda_.3} parent=47 // pred_check
        %p2437 = pneg %p273
      $region50: #{_lambda_.3} parent=47 // pred_check_branch
        %2439 = sbr.rel (%p2437) target = $region52
      $region51: #{_lambda_.3} parent=47 // pred_region
        %s2440 = smul.u32 8, %s25
      $region52: #{_lambda_.3} parent=47 // pred_fallthru
        _
      // Predicated region
      $region53: #{_lambda_.3} parent=47 // pred_check
        %p2441 = pneg %p301
      $region54: #{_lambda_.3} parent=47 // pred_check_branch
        %2443 = sbr.rel (%p2441) target = $region56
      $region55: #{_lambda_.3} parent=47 // pred_region
        _
      $region56: #{_lambda_.3} parent=47 // pred_fallthru
        _
    $region48: #{_lambda_.3} parent=5 // pred_fallthru
      _
    %p2444 = scmp.le.s32.totalorder 2, %s15
    // Predicated region
    $region57: #{_lambda_.3} parent=5 // pred_check
      %p2445 = pneg %p2444
    $region58: #{_lambda_.3} parent=5 // pred_check_branch
      %2447 = sbr.rel (%p2445) target = $region60
    $region59: #{_lambda_.3} parent=5 // pred_region
      %s2448 = ssub.s32 %s15, 2
      // Predicated region
      $region61: #{_lambda_.3} parent=59 // pred_check
        %p2449 = pneg %p279
      $region62: #{_lambda_.3} parent=59 // pred_check_branch
        %2451 = sbr.rel (%p2449) target = $region64
      $region63: #{_lambda_.3} parent=59 // pred_region
        %s2452 = smul.u32 8, %s27
        %p2453 = scmp.lt.s32.totalorder %s26, 1
        %s2454 = scalar_select %p2453, %s26, 1
        %p2455 = scmp.lt.s32.totalorder %s2452, 15
        %s2456 = scalar_select %p2455, %s2452, 15
        %s2457 = smul.addr %s2456, 2
        %s2458 = smul.addr %s2454, 32
        %s2459 = sadd.s32 %s2457, %s2458
        %s2460 = smul.addr %s2459, 4
        %s2461 = scalar_lea.vmem %s7, %s2460
      $region64: #{_lambda_.3} parent=59 // pred_fallthru
        _
      // Predicated region
      $region65: #{_lambda_.3} parent=59 // pred_check
        %p2462 = pneg %p307
      $region66: #{_lambda_.3} parent=59 // pred_check_branch
        %2464 = sbr.rel (%p2462) target = $region68
      $region67: #{_lambda_.3} parent=59 // pred_region
        %p2465 = scmp.lt.s32.totalorder %s26, 1
        %s2466 = scalar_select %p2465, %s26, 1
        %p2467 = scmp.lt.s32.totalorder %s27, 1
        %s2468 = scalar_select %p2467, %s27, 1
        %s2469 = smul.addr %s2466, 2
        %s2470 = sadd.s32 %s2468, %s2469
        %s2471 = smul.addr %s2470, 2
        %s2472 = scalar_lea.vmem %s8, %s2471
      $region68: #{_lambda_.3} parent=59 // pred_fallthru
        _
    $region60: #{_lambda_.3} parent=5 // pred_fallthru
      _
  $region6: #{_lambda_.3} parent=0 // loop_footer
    %s19 = sadd.s32 1, %s15
  $region7: #{_lambda_.3} parent=0 // loop_footer_branch
    %14 = sbr.rel target = $region3
  $region8: #{_lambda_.3} parent=0 // loop_exit
    _

</llo_original>
